<compile_context>
chip_gen: v6e
topology: v6e:2x2x1
jax: 0.10.0
libtpu: 0.0.40
codegen_flags: <defaults>
</compile_context>

<pallas_src>
import functools

import jax
import jax.numpy as jnp
import numpy as np
from jax import lax
from jax.experimental import pallas as pl
from jax.experimental.pallas import tpu as pltpu

LANE = 128     # lane tile (last dim)
SUBLANE = 8    # fp32 sublane tile (second-to-last dim)


def _round_up(x, m):
    return (x + m - 1) // m * m


# ------------------------------ fused kernel ---------------------------------
def _make_fused_kernel(n_layers, T, Bp, Hp):
    """Ref order: x, (wih, whh, bias_rz_n, bias_hn) * n_layers, w1, b1, w2, b2 | out |
    h_sc (Bp,Hp), seq_sc (T*Bp,Hp), gi_sc (T*Bp,3*Hp)."""
    n_in = 1 + 4 * n_layers + 4

    def kernel(*refs):
        x_ref = refs[0]
        w1_ref, b1_ref, w2_ref, b2_ref = refs[1 + 4 * n_layers:n_in]
        out_ref = refs[n_in]
        h_sc, seq_sc, gi_sc = refs[n_in + 1:]

        src_ref = x_ref
        for l in range(n_layers):
            wih_ref, whh_ref, bih_ref, bhn_ref = refs[1 + 4 * l:1 + 4 * (l + 1)]

            # Hoisted input projection: ONE big MXU matmul over all T*Bp rows
            # (bias for r/z already folded with b_hh; n-gate bias is b_ih only).
            gi_sc[...] = (
                jnp.dot(src_ref[...], wih_ref[...], preferred_element_type=jnp.float32)
                + bih_ref[...])

            whh = whh_ref[...]          # load resident weights once, outside the loop
            bhn = bhn_ref[...]          # (1, 3*Hp): zeros except b_hh_n in the n block
            h_sc[...] = jnp.zeros((Bp, Hp), jnp.float32)

            def step(t, carry, whh=whh, bhn=bhn):
                row = pl.multiple_of(t * Bp, Bp)                 # sublane-aligned offset
                gi = gi_sc[pl.ds(row, Bp), :]                    # (Bp, 3*Hp)
                h_prev = h_sc[...]                               # (Bp, Hp)
                gh = jnp.dot(h_prev, whh, preferred_element_type=jnp.float32) + bhn
                # Gates live in 128-lane-aligned blocks [r | z | n] -> free slices.
                r = jax.nn.sigmoid(gi[:, 0:Hp] + gh[:, 0:Hp])
                z = jax.nn.sigmoid(gi[:, Hp:2 * Hp] + gh[:, Hp:2 * Hp])
                n = jnp.tanh(gi[:, 2 * Hp:3 * Hp] + r * gh[:, 2 * Hp:3 * Hp])
                h_new = (1.0 - z) * n + z * h_prev
                h_sc[...] = h_new
                seq_sc[pl.ds(row, Bp), :] = h_new                # accumulate full sequence
                return carry

            # Recurrence is inherently sequential; fully unrolled for LLO overlap.
            lax.fori_loop(0, T, step, 0, unroll=True)
            src_ref = seq_sc   # next layer consumes this layer's full output sequence

        # FC head fused in: Linear -> Dropout(eval identity) -> ReLU -> Linear.
        # TODO(synk): nn.Dropout(0.5) implemented as eval-mode identity (deterministic).
        hid = jnp.maximum(
            jnp.dot(seq_sc[...], w1_ref[...], preferred_element_type=jnp.float32)
            + b1_ref[...], 0.0)
        out_ref[...] = (
            jnp.dot(hid, w2_ref[...], preferred_element_type=jnp.float32)
            + b2_ref[...]).astype(out_ref.dtype)      # single lane-dense (T*Bp, Op) store

    return kernel


def _whole_block(shape):
    assert len(shape) == 2
    return pl.BlockSpec(shape, lambda i: (0, 0))


# ------------------------------- full forward --------------------------------
def grunet_forward(kp, x_tokens):
    """x_tokens: (B, T) int32 -> (B, T, O) float32 (batch-first, like the PyTorch module)."""
    B, T = x_tokens.shape
    Ep, Hp, Op, O = kp["Ep"], kp["Hp"], kp["Op"], kp["O"]
    n_layers = len(kp["gru"])
    Bp = _round_up(max(B, 1), SUBLANE)

    # Embedding gather emitted directly time-major (no activation transpose); pad batch to
    # the 8-sublane tile and flatten to (T*Bp, Ep) with row = t*Bp + b.
    emb_tm = jnp.take(kp["embedding"], jnp.transpose(x_tokens), axis=0)     # (T, B, Ep)
    x_flat = jnp.pad(emb_tm, ((0, 0), (0, Bp - B), (0, 0))).reshape(T * Bp, Ep)

    args = [x_flat]
    for lyr in kp["gru"]:
        args += [lyr["wih"], lyr["whh"], lyr["bih"], lyr["bhn"]]
    args += [kp["w1"], kp["b1"], kp["w2"], kp["b2"]]

    kernel = _make_fused_kernel(n_layers, T, Bp, Hp)
    y_flat = pl.pallas_call(
        kernel,
        out_shape=jax.ShapeDtypeStruct((T * Bp, Op), jnp.float32),
        grid=(1,),
        in_specs=[_whole_block(a.shape) for a in args],
        out_specs=_whole_block((T * Bp, Op)),
        scratch_shapes=[
            pltpu.VMEM((Bp, Hp), jnp.float32),           # recurrent hidden state
            pltpu.VMEM((T * Bp, Hp), jnp.float32),       # full per-layer output sequence
            pltpu.VMEM((T * Bp, 3 * Hp), jnp.float32),   # hoisted input-projection gates
        ],
        compiler_params=pltpu.CompilerParams(dimension_semantics=("arbitrary",)),
    )(*args)

    # Un-pad and return batch-first (tiny (T,B,O) glue).
    y = y_flat.reshape(T, Bp, Op)[:, :B, :O]
    return jnp.transpose(y, (1, 0, 2))


# --------------------------- pure-JAX reference -------------------------------
def grunet_reference(params, x_tokens):
    emb = jnp.take(params["embedding"], x_tokens, axis=0).astype(jnp.float32)  # (B,T,E)
    h = emb
    for layer in params["gru"]:
        wih_t, whh_t = layer["w_ih_t"], layer["w_hh_t"]
        bih, bhh = layer["b_ih"][0], layer["b_hh"][0]
        Hd = whh_t.shape[0]

        def step(h_prev, x_t, wih_t=wih_t, whh_t=whh_t, bih=bih, bhh=bhh, Hd=Hd):
            gi = x_t @ wih_t + bih
            gh = h_prev @ whh_t + bhh
            r = jax.nn.sigmoid(gi[:, :Hd] + gh[:, :Hd])
            z = jax.nn.sigmoid(gi[:, Hd:2 * Hd] + gh[:, Hd:2 * Hd])
            n = jnp.tanh(gi[:, 2 * Hd:] + r * gh[:, 2 * Hd:])
            h_new = (1.0 - z) * n + z * h_prev
            return h_new, h_new

        h0 = jnp.zeros((h.shape[0], Hd), jnp.float32)
        _, ys = jax.lax.scan(step, h0, jnp.transpose(h, (1, 0, 2)))
        h = jnp.transpose(ys, (1, 0, 2))
    hid = jnp.maximum(h @ params["w1_t"] + params["b1"][0], 0.0)
    return hid @ params["w2_t"] + params["b2"][0]


# ------------------------------- param init ----------------------------------
def init_params(key, vocab_size, embedding_dim, hidden_dim, layer_dim, output_dim):
    keys = jax.random.split(key, 3 + 4 * layer_dim + 4)
    ki = iter(keys)
    params = {}
    params["embedding"] = jax.random.normal(next(ki), (vocab_size, embedding_dim),
                                            jnp.float32)
    bound = 1.0 / np.sqrt(hidden_dim)
    gru_layers = []
    for l in range(layer_dim):
        in_dim = embedding_dim if l == 0 else hidden_dim
        w_ih = jax.random.uniform(next(ki), (3 * hidden_dim, in_dim), jnp.float32,
                                  -bound, bound)
        w_hh = jax.random.uniform(next(ki), (3 * hidden_dim, hidden_dim), jnp.float32,
                                  -bound, bound)
        b_ih = jax.random.uniform(next(ki), (3 * hidden_dim,), jnp.float32, -bound, bound)
        b_hh = jax.random.uniform(next(ki), (3 * hidden_dim,), jnp.float32, -bound, bound)
        gru_layers.append(dict(w_ih_t=w_ih.T, w_hh_t=w_hh.T,
                               b_ih=b_ih.reshape(1, -1), b_hh=b_hh.reshape(1, -1)))
    params["gru"] = gru_layers
    b1 = 1.0 / np.sqrt(hidden_dim)
    params["w1_t"] = jax.random.uniform(next(ki), (hidden_dim, hidden_dim), jnp.float32,
                                        -b1, b1)
    params["b1"] = jax.random.uniform(next(ki), (1, hidden_dim), jnp.float32, -b1, b1)
    params["w2_t"] = jax.random.uniform(next(ki), (hidden_dim, output_dim), jnp.float32,
                                        -b1, b1)
    params["b2"] = jax.random.uniform(next(ki), (1, output_dim), jnp.float32, -b1, b1)
    return params


def prepare_kernel_params(params, embedding_dim, hidden_dim, output_dim):
    """Kernel layout: pad E/H/O to 128 lanes; each GRU gate gets its own 128-lane-aligned
    column block [r | z | n]; fold b_ih + b_hh for r/z (n keeps b_hh in its own vector)."""
    H, E, O = hidden_dim, embedding_dim, output_dim
    Ep, Hp, Op = _round_up(E, LANE), _round_up(H, LANE), _round_up(O, LANE)

    emb = params["embedding"]
    emb_p = jnp.zeros((emb.shape[0], Ep), jnp.float32).at[:, :E].set(emb)

    def pad_gru(layer, in_dim, in_pad):
        wih_t, whh_t = layer["w_ih_t"], layer["w_hh_t"]          # (in,3H), (H,3H)
        bih, bhh = layer["b_ih"][0], layer["b_hh"][0]            # (3H,)
        wih_p = jnp.zeros((in_pad, 3 * Hp), jnp.float32)
        whh_p = jnp.zeros((Hp, 3 * Hp), jnp.float32)
        bih_p = jnp.zeros((1, 3 * Hp), jnp.float32)
        bhn_p = jnp.zeros((1, 3 * Hp), jnp.float32)
        for g in range(3):
            wih_p = wih_p.at[:in_dim, g * Hp:g * Hp + H].set(wih_t[:, g * H:(g + 1) * H])
            whh_p = whh_p.at[:H, g * Hp:g * Hp + H].set(whh_t[:, g * H:(g + 1) * H])
        bih_p = bih_p.at[0, 0:H].set(bih[0:H] + bhh[0:H])                   # r: folded
        bih_p = bih_p.at[0, Hp:Hp + H].set(bih[H:2 * H] + bhh[H:2 * H])     # z: folded
        bih_p = bih_p.at[0, 2 * Hp:2 * Hp + H].set(bih[2 * H:3 * H])        # n: b_ih only
        bhn_p = bhn_p.at[0, 2 * Hp:2 * Hp + H].set(bhh[2 * H:3 * H])        # n: b_hh
        return dict(wih=wih_p, whh=whh_p, bih=bih_p, bhn=bhn_p)

    gru = []
    for l, layer in enumerate(params["gru"]):
        in_dim, in_pad = (E, Ep) if l == 0 else (H, Hp)
        gru.append(pad_gru(layer, in_dim, in_pad))

    w1 = jnp.zeros((Hp, Hp), jnp.float32).at[:H, :H].set(params["w1_t"])
    b1 = jnp.zeros((1, Hp), jnp.float32).at[0, :H].set(params["b1"][0])
    w2 = jnp.zeros((Hp, Op), jnp.float32).at[:H, :O].set(params["w2_t"])
    b2 = jnp.zeros((1, Op), jnp.float32).at[0, :O].set(params["b2"][0])

    return dict(embedding=emb_p, gru=gru, w1=w1, b1=b1, w2=w2, b2=b2,
                Ep=Ep, Hp=Hp, Op=Op, H=H, O=O)


if __name__ == "__main__":
    vocab_size, embedding_dim, hidden_dim, layer_dim, output_dim = 32, 16, 32, 2, 8
    batch, seq = 2, 8

    key = jax.random.PRNGKey(0)
    kparam, kx = jax.random.split(key)
    params = init_params(kparam, vocab_size, embedding_dim, hidden_dim, layer_dim,
                         output_dim)
    kernel_params = prepare_kernel_params(params, embedding_dim, hidden_dim, output_dim)
    x_tokens = jax.random.randint(kx, (batch, seq), 0, vocab_size, dtype=jnp.int32)

    out = jax.block_until_ready(grunet_forward(kernel_params, x_tokens))
    ref = jax.block_until_ready(grunet_reference(params, x_tokens))

    assert out.shape == (batch, seq, output_dim), out.shape
    np.testing.assert_allclose(np.asarray(out), np.asarray(ref), rtol=1e-4, atol=1e-4)
    print("KERNEL_OK")
</pallas_src>

<mosaic_0001>
module attributes {stable_mosaic.version = 11 : i64} {
  func.func @kernel(%arg0: i32, %arg1: memref<64x128xf32, #tpu.memory_space<vmem>>, %arg2: memref<128x384xf32, #tpu.memory_space<vmem>>, %arg3: memref<128x384xf32, #tpu.memory_space<vmem>>, %arg4: memref<1x384xf32, #tpu.memory_space<vmem>>, %arg5: memref<1x384xf32, #tpu.memory_space<vmem>>, %arg6: memref<128x384xf32, #tpu.memory_space<vmem>>, %arg7: memref<128x384xf32, #tpu.memory_space<vmem>>, %arg8: memref<1x384xf32, #tpu.memory_space<vmem>>, %arg9: memref<1x384xf32, #tpu.memory_space<vmem>>, %arg10: memref<128x128xf32, #tpu.memory_space<vmem>>, %arg11: memref<1x128xf32, #tpu.memory_space<vmem>>, %arg12: memref<128x128xf32, #tpu.memory_space<vmem>>, %arg13: memref<1x128xf32, #tpu.memory_space<vmem>>, %arg14: memref<64x128xf32, #tpu.memory_space<vmem>>, %arg15: memref<8x128xf32, #tpu.memory_space<vmem>>, %arg16: memref<64x128xf32, #tpu.memory_space<vmem>>, %arg17: memref<64x384xf32, #tpu.memory_space<vmem>>) attributes {dimension_semantics = [#tpu.dimension_semantics<arbitrary>], iteration_bounds = array<i64: 1>, scalar_prefetch = 0 : i64, scratch_operands = 3 : i64, tpu.core_type = #tpu.core_type<tc>, window_params = [{pipeline_mode = #tpu.pipeline_mode<synchronous>, transform_indices = @transform_0, window_bounds = array<i64: 64, 128>}, {pipeline_mode = #tpu.pipeline_mode<synchronous>, transform_indices = @transform_1, window_bounds = array<i64: 128, 384>}, {pipeline_mode = #tpu.pipeline_mode<synchronous>, transform_indices = @transform_2, window_bounds = array<i64: 128, 384>}, {pipeline_mode = #tpu.pipeline_mode<synchronous>, transform_indices = @transform_3, window_bounds = array<i64: 1, 384>}, {pipeline_mode = #tpu.pipeline_mode<synchronous>, transform_indices = @transform_4, window_bounds = array<i64: 1, 384>}, {pipeline_mode = #tpu.pipeline_mode<synchronous>, transform_indices = @transform_5, window_bounds = array<i64: 128, 384>}, {pipeline_mode = #tpu.pipeline_mode<synchronous>, transform_indices = @transform_6, window_bounds = array<i64: 128, 384>}, {pipeline_mode = #tpu.pipeline_mode<synchronous>, transform_indices = @transform_7, window_bounds = array<i64: 1, 384>}, {pipeline_mode = #tpu.pipeline_mode<synchronous>, transform_indices = @transform_8, window_bounds = array<i64: 1, 384>}, {pipeline_mode = #tpu.pipeline_mode<synchronous>, transform_indices = @transform_9, window_bounds = array<i64: 128, 128>}, {pipeline_mode = #tpu.pipeline_mode<synchronous>, transform_indices = @transform_10, window_bounds = array<i64: 1, 128>}, {pipeline_mode = #tpu.pipeline_mode<synchronous>, transform_indices = @transform_11, window_bounds = array<i64: 128, 128>}, {pipeline_mode = #tpu.pipeline_mode<synchronous>, transform_indices = @transform_12, window_bounds = array<i64: 1, 128>}, {pipeline_mode = #tpu.pipeline_mode<synchronous>, transform_indices = @transform_13, window_bounds = array<i64: 64, 128>}]} {
    %c0 = arith.constant 0 : index
    %c0_0 = arith.constant 0 : index
    %0 = vector.load %arg1[%c0, %c0_0] : memref<64x128xf32, #tpu.memory_space<vmem>>, vector<64x128xf32>
    %c0_1 = arith.constant 0 : index
    %c0_2 = arith.constant 0 : index
    %1 = vector.load %arg2[%c0_1, %c0_2] : memref<128x384xf32, #tpu.memory_space<vmem>>, vector<128x384xf32>
    %cst = arith.constant dense<0.000000e+00> : vector<64x384xf32>
    %2 = tpu.matmul %0, %1, %cst {dimension_numbers = #tpu.dot_dimension_numbers<[1], [0], [0], [1], [0, 0, 1, 1], [], []>} : vector<64x128xf32>, vector<128x384xf32>, vector<64x384xf32> -> vector<64x384xf32>
    %c0_3 = arith.constant 0 : index
    %c0_4 = arith.constant 0 : index
    %3 = vector.load %arg4[%c0_3, %c0_4] : memref<1x384xf32, #tpu.memory_space<vmem>>, vector<1x384xf32>
    %4 = vector.broadcast %3 : vector<1x384xf32> to vector<64x384xf32>
    %5 = arith.addf %2, %4 : vector<64x384xf32>
    %c0_5 = arith.constant 0 : index
    %c0_6 = arith.constant 0 : index
    %6 = vector.load %arg17[%c0_5, %c0_6] : memref<64x384xf32, #tpu.memory_space<vmem>>, vector<64x384xf32>
    tpu.vector_store %arg17[%c0_5, %c0_6], %5 {strides = array<i32>} : memref<64x384xf32, #tpu.memory_space<vmem>>, vector<64x384xf32>,
    %c0_7 = arith.constant 0 : index
    %c0_8 = arith.constant 0 : index
    %7 = vector.load %arg3[%c0_7, %c0_8] : memref<128x384xf32, #tpu.memory_space<vmem>>, vector<128x384xf32>
    %c0_9 = arith.constant 0 : index
    %c0_10 = arith.constant 0 : index
    %8 = vector.load %arg5[%c0_9, %c0_10] : memref<1x384xf32, #tpu.memory_space<vmem>>, vector<1x384xf32>
    %cst_11 = arith.constant 0.000000e+00 : f32
    %9 = vector.broadcast %cst_11 : f32 to vector<8x128xf32>
    %c0_12 = arith.constant 0 : index
    %c0_13 = arith.constant 0 : index
    %10 = vector.load %arg15[%c0_12, %c0_13] : memref<8x128xf32, #tpu.memory_space<vmem>>, vector<8x128xf32>
    tpu.vector_store %arg15[%c0_12, %c0_13], %9 {strides = array<i32>} : memref<8x128xf32, #tpu.memory_space<vmem>>, vector<8x128xf32>,
    %c0_i32 = arith.constant 0 : i32
    %c8_i32 = arith.constant 8 : i32
    %11 = arith.muli %c0_i32, %c8_i32 : i32
    %12 = tpu.assume_multiple %11, 8 : i32
    %13 = arith.index_cast %12 : i32 to index
    %c0_14 = arith.constant 0 : index
    %14 = vector.load %arg17[%13, %c0_14] : memref<64x384xf32, #tpu.memory_space<vmem>>, vector<8x384xf32>
    %c0_15 = arith.constant 0 : index
    %c0_16 = arith.constant 0 : index
    %15 = vector.load %arg15[%c0_15, %c0_16] : memref<8x128xf32, #tpu.memory_space<vmem>>, vector<8x128xf32>
    %cst_17 = arith.constant dense<0.000000e+00> : vector<8x384xf32>
    %16 = tpu.matmul %15, %7, %cst_17 {dimension_numbers = #tpu.dot_dimension_numbers<[1], [0], [0], [1], [0, 0, 1, 1], [], []>} : vector<8x128xf32>, vector<128x384xf32>, vector<8x384xf32> -> vector<8x384xf32>
    %17 = vector.broadcast %8 : vector<1x384xf32> to vector<8x384xf32>
    %18 = arith.addf %16, %17 : vector<8x384xf32>
    %19 = vector.extract_strided_slice %14 {offsets = [0, 0], sizes = [8, 128], strides = [1, 1]} : vector<8x384xf32> to vector<8x128xf32>
    %20 = vector.extract_strided_slice %18 {offsets = [0, 0], sizes = [8, 128], strides = [1, 1]} : vector<8x384xf32> to vector<8x128xf32>
    %21 = arith.addf %19, %20 : vector<8x128xf32>
    %22 = arith.negf %21 : vector<8x128xf32>
    %23 = math.exp %22 : vector<8x128xf32>
    %cst_18 = arith.constant 1.000000e+00 : f32
    %24 = vector.broadcast %cst_18 : f32 to vector<8x128xf32>
    %25 = arith.addf %24, %23 : vector<8x128xf32>
    %26 = arith.divf %24, %25 : vector<8x128xf32>
    %27 = vector.extract_strided_slice %14 {offsets = [0, 128], sizes = [8, 128], strides = [1, 1]} : vector<8x384xf32> to vector<8x128xf32>
    %28 = vector.extract_strided_slice %18 {offsets = [0, 128], sizes = [8, 128], strides = [1, 1]} : vector<8x384xf32> to vector<8x128xf32>
    %29 = arith.addf %27, %28 : vector<8x128xf32>
    %30 = arith.negf %29 : vector<8x128xf32>
    %31 = math.exp %30 : vector<8x128xf32>
    %cst_19 = arith.constant 1.000000e+00 : f32
    %32 = vector.broadcast %cst_19 : f32 to vector<8x128xf32>
    %33 = arith.addf %32, %31 : vector<8x128xf32>
    %34 = arith.divf %32, %33 : vector<8x128xf32>
    %35 = vector.extract_strided_slice %14 {offsets = [0, 256], sizes = [8, 128], strides = [1, 1]} : vector<8x384xf32> to vector<8x128xf32>
    %36 = vector.extract_strided_slice %18 {offsets = [0, 256], sizes = [8, 128], strides = [1, 1]} : vector<8x384xf32> to vector<8x128xf32>
    %37 = arith.mulf %26, %36 : vector<8x128xf32>
    %38 = arith.addf %35, %37 : vector<8x128xf32>
    %39 = math.tanh %38 : vector<8x128xf32>
    %cst_20 = arith.constant 1.000000e+00 : f32
    %40 = vector.broadcast %cst_20 : f32 to vector<8x128xf32>
    %41 = arith.subf %40, %34 : vector<8x128xf32>
    %42 = arith.mulf %41, %39 : vector<8x128xf32>
    %43 = arith.mulf %34, %15 : vector<8x128xf32>
    %44 = arith.addf %42, %43 : vector<8x128xf32>
    %c0_21 = arith.constant 0 : index
    %c0_22 = arith.constant 0 : index
    %45 = vector.load %arg15[%c0_21, %c0_22] : memref<8x128xf32, #tpu.memory_space<vmem>>, vector<8x128xf32>
    tpu.vector_store %arg15[%c0_21, %c0_22], %44 {strides = array<i32>} : memref<8x128xf32, #tpu.memory_space<vmem>>, vector<8x128xf32>,
    %46 = arith.index_cast %12 : i32 to index
    %c0_23 = arith.constant 0 : index
    %47 = vector.load %arg16[%46, %c0_23] : memref<64x128xf32, #tpu.memory_space<vmem>>, vector<8x128xf32>
    tpu.vector_store %arg16[%46, %c0_23], %44 {strides = array<i32>} : memref<64x128xf32, #tpu.memory_space<vmem>>, vector<8x128xf32>,
    %c1_i32 = arith.constant 1 : i32
    %c8_i32_24 = arith.constant 8 : i32
    %48 = arith.muli %c1_i32, %c8_i32_24 : i32
    %49 = tpu.assume_multiple %48, 8 : i32
    %50 = arith.index_cast %49 : i32 to index
    %c0_25 = arith.constant 0 : index
    %51 = vector.load %arg17[%50, %c0_25] : memref<64x384xf32, #tpu.memory_space<vmem>>, vector<8x384xf32>
    %c0_26 = arith.constant 0 : index
    %c0_27 = arith.constant 0 : index
    %52 = vector.load %arg15[%c0_26, %c0_27] : memref<8x128xf32, #tpu.memory_space<vmem>>, vector<8x128xf32>
    %cst_28 = arith.constant dense<0.000000e+00> : vector<8x384xf32>
    %53 = tpu.matmul %52, %7, %cst_28 {dimension_numbers = #tpu.dot_dimension_numbers<[1], [0], [0], [1], [0, 0, 1, 1], [], []>} : vector<8x128xf32>, vector<128x384xf32>, vector<8x384xf32> -> vector<8x384xf32>
    %54 = vector.broadcast %8 : vector<1x384xf32> to vector<8x384xf32>
    %55 = arith.addf %53, %54 : vector<8x384xf32>
    %56 = vector.extract_strided_slice %51 {offsets = [0, 0], sizes = [8, 128], strides = [1, 1]} : vector<8x384xf32> to vector<8x128xf32>
    %57 = vector.extract_strided_slice %55 {offsets = [0, 0], sizes = [8, 128], strides = [1, 1]} : vector<8x384xf32> to vector<8x128xf32>
    %58 = arith.addf %56, %57 : vector<8x128xf32>
    %59 = arith.negf %58 : vector<8x128xf32>
    %60 = math.exp %59 : vector<8x128xf32>
    %cst_29 = arith.constant 1.000000e+00 : f32
    %61 = vector.broadcast %cst_29 : f32 to vector<8x128xf32>
    %62 = arith.addf %61, %60 : vector<8x128xf32>
    %63 = arith.divf %61, %62 : vector<8x128xf32>
    %64 = vector.extract_strided_slice %51 {offsets = [0, 128], sizes = [8, 128], strides = [1, 1]} : vector<8x384xf32> to vector<8x128xf32>
    %65 = vector.extract_strided_slice %55 {offsets = [0, 128], sizes = [8, 128], strides = [1, 1]} : vector<8x384xf32> to vector<8x128xf32>
    %66 = arith.addf %64, %65 : vector<8x128xf32>
    %67 = arith.negf %66 : vector<8x128xf32>
    %68 = math.exp %67 : vector<8x128xf32>
    %cst_30 = arith.constant 1.000000e+00 : f32
    %69 = vector.broadcast %cst_30 : f32 to vector<8x128xf32>
    %70 = arith.addf %69, %68 : vector<8x128xf32>
    %71 = arith.divf %69, %70 : vector<8x128xf32>
    %72 = vector.extract_strided_slice %51 {offsets = [0, 256], sizes = [8, 128], strides = [1, 1]} : vector<8x384xf32> to vector<8x128xf32>
    %73 = vector.extract_strided_slice %55 {offsets = [0, 256], sizes = [8, 128], strides = [1, 1]} : vector<8x384xf32> to vector<8x128xf32>
    %74 = arith.mulf %63, %73 : vector<8x128xf32>
    %75 = arith.addf %72, %74 : vector<8x128xf32>
    %76 = math.tanh %75 : vector<8x128xf32>
    %cst_31 = arith.constant 1.000000e+00 : f32
    %77 = vector.broadcast %cst_31 : f32 to vector<8x128xf32>
    %78 = arith.subf %77, %71 : vector<8x128xf32>
    %79 = arith.mulf %78, %76 : vector<8x128xf32>
    %80 = arith.mulf %71, %52 : vector<8x128xf32>
    %81 = arith.addf %79, %80 : vector<8x128xf32>
    %c0_32 = arith.constant 0 : index
    %c0_33 = arith.constant 0 : index
    %82 = vector.load %arg15[%c0_32, %c0_33] : memref<8x128xf32, #tpu.memory_space<vmem>>, vector<8x128xf32>
    tpu.vector_store %arg15[%c0_32, %c0_33], %81 {strides = array<i32>} : memref<8x128xf32, #tpu.memory_space<vmem>>, vector<8x128xf32>,
    %83 = arith.index_cast %49 : i32 to index
    %c0_34 = arith.constant 0 : index
    %84 = vector.load %arg16[%83, %c0_34] : memref<64x128xf32, #tpu.memory_space<vmem>>, vector<8x128xf32>
    tpu.vector_store %arg16[%83, %c0_34], %81 {strides = array<i32>} : memref<64x128xf32, #tpu.memory_space<vmem>>, vector<8x128xf32>,
    %c2_i32 = arith.constant 2 : i32
    %c8_i32_35 = arith.constant 8 : i32
    %85 = arith.muli %c2_i32, %c8_i32_35 : i32
    %86 = tpu.assume_multiple %85, 8 : i32
    %87 = arith.index_cast %86 : i32 to index
    %c0_36 = arith.constant 0 : index
    %88 = vector.load %arg17[%87, %c0_36] : memref<64x384xf32, #tpu.memory_space<vmem>>, vector<8x384xf32>
    %c0_37 = arith.constant 0 : index
    %c0_38 = arith.constant 0 : index
    %89 = vector.load %arg15[%c0_37, %c0_38] : memref<8x128xf32, #tpu.memory_space<vmem>>, vector<8x128xf32>
    %cst_39 = arith.constant dense<0.000000e+00> : vector<8x384xf32>
    %90 = tpu.matmul %89, %7, %cst_39 {dimension_numbers = #tpu.dot_dimension_numbers<[1], [0], [0], [1], [0, 0, 1, 1], [], []>} : vector<8x128xf32>, vector<128x384xf32>, vector<8x384xf32> -> vector<8x384xf32>
    %91 = vector.broadcast %8 : vector<1x384xf32> to vector<8x384xf32>
    %92 = arith.addf %90, %91 : vector<8x384xf32>
    %93 = vector.extract_strided_slice %88 {offsets = [0, 0], sizes = [8, 128], strides = [1, 1]} : vector<8x384xf32> to vector<8x128xf32>
    %94 = vector.extract_strided_slice %92 {offsets = [0, 0], sizes = [8, 128], strides = [1, 1]} : vector<8x384xf32> to vector<8x128xf32>
    %95 = arith.addf %93, %94 : vector<8x128xf32>
    %96 = arith.negf %95 : vector<8x128xf32>
    %97 = math.exp %96 : vector<8x128xf32>
    %cst_40 = arith.constant 1.000000e+00 : f32
    %98 = vector.broadcast %cst_40 : f32 to vector<8x128xf32>
    %99 = arith.addf %98, %97 : vector<8x128xf32>
    %100 = arith.divf %98, %99 : vector<8x128xf32>
    %101 = vector.extract_strided_slice %88 {offsets = [0, 128], sizes = [8, 128], strides = [1, 1]} : vector<8x384xf32> to vector<8x128xf32>
    %102 = vector.extract_strided_slice %92 {offsets = [0, 128], sizes = [8, 128], strides = [1, 1]} : vector<8x384xf32> to vector<8x128xf32>
    %103 = arith.addf %101, %102 : vector<8x128xf32>
    %104 = arith.negf %103 : vector<8x128xf32>
    %105 = math.exp %104 : vector<8x128xf32>
    %cst_41 = arith.constant 1.000000e+00 : f32
    %106 = vector.broadcast %cst_41 : f32 to vector<8x128xf32>
    %107 = arith.addf %106, %105 : vector<8x128xf32>
    %108 = arith.divf %106, %107 : vector<8x128xf32>
    %109 = vector.extract_strided_slice %88 {offsets = [0, 256], sizes = [8, 128], strides = [1, 1]} : vector<8x384xf32> to vector<8x128xf32>
    %110 = vector.extract_strided_slice %92 {offsets = [0, 256], sizes = [8, 128], strides = [1, 1]} : vector<8x384xf32> to vector<8x128xf32>
    %111 = arith.mulf %100, %110 : vector<8x128xf32>
    %112 = arith.addf %109, %111 : vector<8x128xf32>
    %113 = math.tanh %112 : vector<8x128xf32>
    %cst_42 = arith.constant 1.000000e+00 : f32
    %114 = vector.broadcast %cst_42 : f32 to vector<8x128xf32>
    %115 = arith.subf %114, %108 : vector<8x128xf32>
    %116 = arith.mulf %115, %113 : vector<8x128xf32>
    %117 = arith.mulf %108, %89 : vector<8x128xf32>
    %118 = arith.addf %116, %117 : vector<8x128xf32>
    %c0_43 = arith.constant 0 : index
    %c0_44 = arith.constant 0 : index
    %119 = vector.load %arg15[%c0_43, %c0_44] : memref<8x128xf32, #tpu.memory_space<vmem>>, vector<8x128xf32>
    tpu.vector_store %arg15[%c0_43, %c0_44], %118 {strides = array<i32>} : memref<8x128xf32, #tpu.memory_space<vmem>>, vector<8x128xf32>,
    %120 = arith.index_cast %86 : i32 to index
    %c0_45 = arith.constant 0 : index
    %121 = vector.load %arg16[%120, %c0_45] : memref<64x128xf32, #tpu.memory_space<vmem>>, vector<8x128xf32>
    tpu.vector_store %arg16[%120, %c0_45], %118 {strides = array<i32>} : memref<64x128xf32, #tpu.memory_space<vmem>>, vector<8x128xf32>,
    %c3_i32 = arith.constant 3 : i32
    %c8_i32_46 = arith.constant 8 : i32
    %122 = arith.muli %c3_i32, %c8_i32_46 : i32
    %123 = tpu.assume_multiple %122, 8 : i32
    %124 = arith.index_cast %123 : i32 to index
    %c0_47 = arith.constant 0 : index
    %125 = vector.load %arg17[%124, %c0_47] : memref<64x384xf32, #tpu.memory_space<vmem>>, vector<8x384xf32>
    %c0_48 = arith.constant 0 : index
    %c0_49 = arith.constant 0 : index
    %126 = vector.load %arg15[%c0_48, %c0_49] : memref<8x128xf32, #tpu.memory_space<vmem>>, vector<8x128xf32>
    %cst_50 = arith.constant dense<0.000000e+00> : vector<8x384xf32>
    %127 = tpu.matmul %126, %7, %cst_50 {dimension_numbers = #tpu.dot_dimension_numbers<[1], [0], [0], [1], [0, 0, 1, 1], [], []>} : vector<8x128xf32>, vector<128x384xf32>, vector<8x384xf32> -> vector<8x384xf32>
    %128 = vector.broadcast %8 : vector<1x384xf32> to vector<8x384xf32>
    %129 = arith.addf %127, %128 : vector<8x384xf32>
    %130 = vector.extract_strided_slice %125 {offsets = [0, 0], sizes = [8, 128], strides = [1, 1]} : vector<8x384xf32> to vector<8x128xf32>
    %131 = vector.extract_strided_slice %129 {offsets = [0, 0], sizes = [8, 128], strides = [1, 1]} : vector<8x384xf32> to vector<8x128xf32>
    %132 = arith.addf %130, %131 : vector<8x128xf32>
    %133 = arith.negf %132 : vector<8x128xf32>
    %134 = math.exp %133 : vector<8x128xf32>
    %cst_51 = arith.constant 1.000000e+00 : f32
    %135 = vector.broadcast %cst_51 : f32 to vector<8x128xf32>
    %136 = arith.addf %135, %134 : vector<8x128xf32>
    %137 = arith.divf %135, %136 : vector<8x128xf32>
    %138 = vector.extract_strided_slice %125 {offsets = [0, 128], sizes = [8, 128], strides = [1, 1]} : vector<8x384xf32> to vector<8x128xf32>
    %139 = vector.extract_strided_slice %129 {offsets = [0, 128], sizes = [8, 128], strides = [1, 1]} : vector<8x384xf32> to vector<8x128xf32>
    %140 = arith.addf %138, %139 : vector<8x128xf32>
    %141 = arith.negf %140 : vector<8x128xf32>
    %142 = math.exp %141 : vector<8x128xf32>
    %cst_52 = arith.constant 1.000000e+00 : f32
    %143 = vector.broadcast %cst_52 : f32 to vector<8x128xf32>
    %144 = arith.addf %143, %142 : vector<8x128xf32>
    %145 = arith.divf %143, %144 : vector<8x128xf32>
    %146 = vector.extract_strided_slice %125 {offsets = [0, 256], sizes = [8, 128], strides = [1, 1]} : vector<8x384xf32> to vector<8x128xf32>
    %147 = vector.extract_strided_slice %129 {offsets = [0, 256], sizes = [8, 128], strides = [1, 1]} : vector<8x384xf32> to vector<8x128xf32>
    %148 = arith.mulf %137, %147 : vector<8x128xf32>
    %149 = arith.addf %146, %148 : vector<8x128xf32>
    %150 = math.tanh %149 : vector<8x128xf32>
    %cst_53 = arith.constant 1.000000e+00 : f32
    %151 = vector.broadcast %cst_53 : f32 to vector<8x128xf32>
    %152 = arith.subf %151, %145 : vector<8x128xf32>
    %153 = arith.mulf %152, %150 : vector<8x128xf32>
    %154 = arith.mulf %145, %126 : vector<8x128xf32>
    %155 = arith.addf %153, %154 : vector<8x128xf32>
    %c0_54 = arith.constant 0 : index
    %c0_55 = arith.constant 0 : index
    %156 = vector.load %arg15[%c0_54, %c0_55] : memref<8x128xf32, #tpu.memory_space<vmem>>, vector<8x128xf32>
    tpu.vector_store %arg15[%c0_54, %c0_55], %155 {strides = array<i32>} : memref<8x128xf32, #tpu.memory_space<vmem>>, vector<8x128xf32>,
    %157 = arith.index_cast %123 : i32 to index
    %c0_56 = arith.constant 0 : index
    %158 = vector.load %arg16[%157, %c0_56] : memref<64x128xf32, #tpu.memory_space<vmem>>, vector<8x128xf32>
    tpu.vector_store %arg16[%157, %c0_56], %155 {strides = array<i32>} : memref<64x128xf32, #tpu.memory_space<vmem>>, vector<8x128xf32>,
    %c4_i32 = arith.constant 4 : i32
    %c8_i32_57 = arith.constant 8 : i32
    %159 = arith.muli %c4_i32, %c8_i32_57 : i32
    %160 = tpu.assume_multiple %159, 8 : i32
    %161 = arith.index_cast %160 : i32 to index
    %c0_58 = arith.constant 0 : index
    %162 = vector.load %arg17[%161, %c0_58] : memref<64x384xf32, #tpu.memory_space<vmem>>, vector<8x384xf32>
    %c0_59 = arith.constant 0 : index
    %c0_60 = arith.constant 0 : index
    %163 = vector.load %arg15[%c0_59, %c0_60] : memref<8x128xf32, #tpu.memory_space<vmem>>, vector<8x128xf32>
    %cst_61 = arith.constant dense<0.000000e+00> : vector<8x384xf32>
    %164 = tpu.matmul %163, %7, %cst_61 {dimension_numbers = #tpu.dot_dimension_numbers<[1], [0], [0], [1], [0, 0, 1, 1], [], []>} : vector<8x128xf32>, vector<128x384xf32>, vector<8x384xf32> -> vector<8x384xf32>
    %165 = vector.broadcast %8 : vector<1x384xf32> to vector<8x384xf32>
    %166 = arith.addf %164, %165 : vector<8x384xf32>
    %167 = vector.extract_strided_slice %162 {offsets = [0, 0], sizes = [8, 128], strides = [1, 1]} : vector<8x384xf32> to vector<8x128xf32>
    %168 = vector.extract_strided_slice %166 {offsets = [0, 0], sizes = [8, 128], strides = [1, 1]} : vector<8x384xf32> to vector<8x128xf32>
    %169 = arith.addf %167, %168 : vector<8x128xf32>
    %170 = arith.negf %169 : vector<8x128xf32>
    %171 = math.exp %170 : vector<8x128xf32>
    %cst_62 = arith.constant 1.000000e+00 : f32
    %172 = vector.broadcast %cst_62 : f32 to vector<8x128xf32>
    %173 = arith.addf %172, %171 : vector<8x128xf32>
    %174 = arith.divf %172, %173 : vector<8x128xf32>
    %175 = vector.extract_strided_slice %162 {offsets = [0, 128], sizes = [8, 128], strides = [1, 1]} : vector<8x384xf32> to vector<8x128xf32>
    %176 = vector.extract_strided_slice %166 {offsets = [0, 128], sizes = [8, 128], strides = [1, 1]} : vector<8x384xf32> to vector<8x128xf32>
    %177 = arith.addf %175, %176 : vector<8x128xf32>
    %178 = arith.negf %177 : vector<8x128xf32>
    %179 = math.exp %178 : vector<8x128xf32>
    %cst_63 = arith.constant 1.000000e+00 : f32
    %180 = vector.broadcast %cst_63 : f32 to vector<8x128xf32>
    %181 = arith.addf %180, %179 : vector<8x128xf32>
    %182 = arith.divf %180, %181 : vector<8x128xf32>
    %183 = vector.extract_strided_slice %162 {offsets = [0, 256], sizes = [8, 128], strides = [1, 1]} : vector<8x384xf32> to vector<8x128xf32>
    %184 = vector.extract_strided_slice %166 {offsets = [0, 256], sizes = [8, 128], strides = [1, 1]} : vector<8x384xf32> to vector<8x128xf32>
    %185 = arith.mulf %174, %184 : vector<8x128xf32>
    %186 = arith.addf %183, %185 : vector<8x128xf32>
    %187 = math.tanh %186 : vector<8x128xf32>
    %cst_64 = arith.constant 1.000000e+00 : f32
    %188 = vector.broadcast %cst_64 : f32 to vector<8x128xf32>
    %189 = arith.subf %188, %182 : vector<8x128xf32>
    %190 = arith.mulf %189, %187 : vector<8x128xf32>
    %191 = arith.mulf %182, %163 : vector<8x128xf32>
    %192 = arith.addf %190, %191 : vector<8x128xf32>
    %c0_65 = arith.constant 0 : index
    %c0_66 = arith.constant 0 : index
    %193 = vector.load %arg15[%c0_65, %c0_66] : memref<8x128xf32, #tpu.memory_space<vmem>>, vector<8x128xf32>
    tpu.vector_store %arg15[%c0_65, %c0_66], %192 {strides = array<i32>} : memref<8x128xf32, #tpu.memory_space<vmem>>, vector<8x128xf32>,
    %194 = arith.index_cast %160 : i32 to index
    %c0_67 = arith.constant 0 : index
    %195 = vector.load %arg16[%194, %c0_67] : memref<64x128xf32, #tpu.memory_space<vmem>>, vector<8x128xf32>
    tpu.vector_store %arg16[%194, %c0_67], %192 {strides = array<i32>} : memref<64x128xf32, #tpu.memory_space<vmem>>, vector<8x128xf32>,
    %c5_i32 = arith.constant 5 : i32
    %c8_i32_68 = arith.constant 8 : i32
    %196 = arith.muli %c5_i32, %c8_i32_68 : i32
    %197 = tpu.assume_multiple %196, 8 : i32
    %198 = arith.index_cast %197 : i32 to index
    %c0_69 = arith.constant 0 : index
    %199 = vector.load %arg17[%198, %c0_69] : memref<64x384xf32, #tpu.memory_space<vmem>>, vector<8x384xf32>
    %c0_70 = arith.constant 0 : index
    %c0_71 = arith.constant 0 : index
    %200 = vector.load %arg15[%c0_70, %c0_71] : memref<8x128xf32, #tpu.memory_space<vmem>>, vector<8x128xf32>
    %cst_72 = arith.constant dense<0.000000e+00> : vector<8x384xf32>
    %201 = tpu.matmul %200, %7, %cst_72 {dimension_numbers = #tpu.dot_dimension_numbers<[1], [0], [0], [1], [0, 0, 1, 1], [], []>} : vector<8x128xf32>, vector<128x384xf32>, vector<8x384xf32> -> vector<8x384xf32>
    %202 = vector.broadcast %8 : vector<1x384xf32> to vector<8x384xf32>
    %203 = arith.addf %201, %202 : vector<8x384xf32>
    %204 = vector.extract_strided_slice %199 {offsets = [0, 0], sizes = [8, 128], strides = [1, 1]} : vector<8x384xf32> to vector<8x128xf32>
    %205 = vector.extract_strided_slice %203 {offsets = [0, 0], sizes = [8, 128], strides = [1, 1]} : vector<8x384xf32> to vector<8x128xf32>
    %206 = arith.addf %204, %205 : vector<8x128xf32>
    %207 = arith.negf %206 : vector<8x128xf32>
    %208 = math.exp %207 : vector<8x128xf32>
    %cst_73 = arith.constant 1.000000e+00 : f32
    %209 = vector.broadcast %cst_73 : f32 to vector<8x128xf32>
    %210 = arith.addf %209, %208 : vector<8x128xf32>
    %211 = arith.divf %209, %210 : vector<8x128xf32>
    %212 = vector.extract_strided_slice %199 {offsets = [0, 128], sizes = [8, 128], strides = [1, 1]} : vector<8x384xf32> to vector<8x128xf32>
    %213 = vector.extract_strided_slice %203 {offsets = [0, 128], sizes = [8, 128], strides = [1, 1]} : vector<8x384xf32> to vector<8x128xf32>
    %214 = arith.addf %212, %213 : vector<8x128xf32>
    %215 = arith.negf %214 : vector<8x128xf32>
    %216 = math.exp %215 : vector<8x128xf32>
    %cst_74 = arith.constant 1.000000e+00 : f32
    %217 = vector.broadcast %cst_74 : f32 to vector<8x128xf32>
    %218 = arith.addf %217, %216 : vector<8x128xf32>
    %219 = arith.divf %217, %218 : vector<8x128xf32>
    %220 = vector.extract_strided_slice %199 {offsets = [0, 256], sizes = [8, 128], strides = [1, 1]} : vector<8x384xf32> to vector<8x128xf32>
    %221 = vector.extract_strided_slice %203 {offsets = [0, 256], sizes = [8, 128], strides = [1, 1]} : vector<8x384xf32> to vector<8x128xf32>
    %222 = arith.mulf %211, %221 : vector<8x128xf32>
    %223 = arith.addf %220, %222 : vector<8x128xf32>
    %224 = math.tanh %223 : vector<8x128xf32>
    %cst_75 = arith.constant 1.000000e+00 : f32
    %225 = vector.broadcast %cst_75 : f32 to vector<8x128xf32>
    %226 = arith.subf %225, %219 : vector<8x128xf32>
    %227 = arith.mulf %226, %224 : vector<8x128xf32>
    %228 = arith.mulf %219, %200 : vector<8x128xf32>
    %229 = arith.addf %227, %228 : vector<8x128xf32>
    %c0_76 = arith.constant 0 : index
    %c0_77 = arith.constant 0 : index
    %230 = vector.load %arg15[%c0_76, %c0_77] : memref<8x128xf32, #tpu.memory_space<vmem>>, vector<8x128xf32>
    tpu.vector_store %arg15[%c0_76, %c0_77], %229 {strides = array<i32>} : memref<8x128xf32, #tpu.memory_space<vmem>>, vector<8x128xf32>,
    %231 = arith.index_cast %197 : i32 to index
    %c0_78 = arith.constant 0 : index
    %232 = vector.load %arg16[%231, %c0_78] : memref<64x128xf32, #tpu.memory_space<vmem>>, vector<8x128xf32>
    tpu.vector_store %arg16[%231, %c0_78], %229 {strides = array<i32>} : memref<64x128xf32, #tpu.memory_space<vmem>>, vector<8x128xf32>,
    %c6_i32 = arith.constant 6 : i32
    %c8_i32_79 = arith.constant 8 : i32
    %233 = arith.muli %c6_i32, %c8_i32_79 : i32
    %234 = tpu.assume_multiple %233, 8 : i32
    %235 = arith.index_cast %234 : i32 to index
    %c0_80 = arith.constant 0 : index
    %236 = vector.load %arg17[%235, %c0_80] : memref<64x384xf32, #tpu.memory_space<vmem>>, vector<8x384xf32>
    %c0_81 = arith.constant 0 : index
    %c0_82 = arith.constant 0 : index
    %237 = vector.load %arg15[%c0_81, %c0_82] : memref<8x128xf32, #tpu.memory_space<vmem>>, vector<8x128xf32>
    %cst_83 = arith.constant dense<0.000000e+00> : vector<8x384xf32>
    %238 = tpu.matmul %237, %7, %cst_83 {dimension_numbers = #tpu.dot_dimension_numbers<[1], [0], [0], [1], [0, 0, 1, 1], [], []>} : vector<8x128xf32>, vector<128x384xf32>, vector<8x384xf32> -> vector<8x384xf32>
    %239 = vector.broadcast %8 : vector<1x384xf32> to vector<8x384xf32>
    %240 = arith.addf %238, %239 : vector<8x384xf32>
    %241 = vector.extract_strided_slice %236 {offsets = [0, 0], sizes = [8, 128], strides = [1, 1]} : vector<8x384xf32> to vector<8x128xf32>
    %242 = vector.extract_strided_slice %240 {offsets = [0, 0], sizes = [8, 128], strides = [1, 1]} : vector<8x384xf32> to vector<8x128xf32>
    %243 = arith.addf %241, %242 : vector<8x128xf32>
    %244 = arith.negf %243 : vector<8x128xf32>
    %245 = math.exp %244 : vector<8x128xf32>
    %cst_84 = arith.constant 1.000000e+00 : f32
    %246 = vector.broadcast %cst_84 : f32 to vector<8x128xf32>
    %247 = arith.addf %246, %245 : vector<8x128xf32>
    %248 = arith.divf %246, %247 : vector<8x128xf32>
    %249 = vector.extract_strided_slice %236 {offsets = [0, 128], sizes = [8, 128], strides = [1, 1]} : vector<8x384xf32> to vector<8x128xf32>
    %250 = vector.extract_strided_slice %240 {offsets = [0, 128], sizes = [8, 128], strides = [1, 1]} : vector<8x384xf32> to vector<8x128xf32>
    %251 = arith.addf %249, %250 : vector<8x128xf32>
    %252 = arith.negf %251 : vector<8x128xf32>
    %253 = math.exp %252 : vector<8x128xf32>
    %cst_85 = arith.constant 1.000000e+00 : f32
    %254 = vector.broadcast %cst_85 : f32 to vector<8x128xf32>
    %255 = arith.addf %254, %253 : vector<8x128xf32>
    %256 = arith.divf %254, %255 : vector<8x128xf32>
    %257 = vector.extract_strided_slice %236 {offsets = [0, 256], sizes = [8, 128], strides = [1, 1]} : vector<8x384xf32> to vector<8x128xf32>
    %258 = vector.extract_strided_slice %240 {offsets = [0, 256], sizes = [8, 128], strides = [1, 1]} : vector<8x384xf32> to vector<8x128xf32>
    %259 = arith.mulf %248, %258 : vector<8x128xf32>
    %260 = arith.addf %257, %259 : vector<8x128xf32>
    %261 = math.tanh %260 : vector<8x128xf32>
    %cst_86 = arith.constant 1.000000e+00 : f32
    %262 = vector.broadcast %cst_86 : f32 to vector<8x128xf32>
    %263 = arith.subf %262, %256 : vector<8x128xf32>
    %264 = arith.mulf %263, %261 : vector<8x128xf32>
    %265 = arith.mulf %256, %237 : vector<8x128xf32>
    %266 = arith.addf %264, %265 : vector<8x128xf32>
    %c0_87 = arith.constant 0 : index
    %c0_88 = arith.constant 0 : index
    %267 = vector.load %arg15[%c0_87, %c0_88] : memref<8x128xf32, #tpu.memory_space<vmem>>, vector<8x128xf32>
    tpu.vector_store %arg15[%c0_87, %c0_88], %266 {strides = array<i32>} : memref<8x128xf32, #tpu.memory_space<vmem>>, vector<8x128xf32>,
    %268 = arith.index_cast %234 : i32 to index
    %c0_89 = arith.constant 0 : index
    %269 = vector.load %arg16[%268, %c0_89] : memref<64x128xf32, #tpu.memory_space<vmem>>, vector<8x128xf32>
    tpu.vector_store %arg16[%268, %c0_89], %266 {strides = array<i32>} : memref<64x128xf32, #tpu.memory_space<vmem>>, vector<8x128xf32>,
    %c7_i32 = arith.constant 7 : i32
    %c8_i32_90 = arith.constant 8 : i32
    %270 = arith.muli %c7_i32, %c8_i32_90 : i32
    %271 = tpu.assume_multiple %270, 8 : i32
    %272 = arith.index_cast %271 : i32 to index
    %c0_91 = arith.constant 0 : index
    %273 = vector.load %arg17[%272, %c0_91] : memref<64x384xf32, #tpu.memory_space<vmem>>, vector<8x384xf32>
    %c0_92 = arith.constant 0 : index
    %c0_93 = arith.constant 0 : index
    %274 = vector.load %arg15[%c0_92, %c0_93] : memref<8x128xf32, #tpu.memory_space<vmem>>, vector<8x128xf32>
    %cst_94 = arith.constant dense<0.000000e+00> : vector<8x384xf32>
    %275 = tpu.matmul %274, %7, %cst_94 {dimension_numbers = #tpu.dot_dimension_numbers<[1], [0], [0], [1], [0, 0, 1, 1], [], []>} : vector<8x128xf32>, vector<128x384xf32>, vector<8x384xf32> -> vector<8x384xf32>
    %276 = vector.broadcast %8 : vector<1x384xf32> to vector<8x384xf32>
    %277 = arith.addf %275, %276 : vector<8x384xf32>
    %278 = vector.extract_strided_slice %273 {offsets = [0, 0], sizes = [8, 128], strides = [1, 1]} : vector<8x384xf32> to vector<8x128xf32>
    %279 = vector.extract_strided_slice %277 {offsets = [0, 0], sizes = [8, 128], strides = [1, 1]} : vector<8x384xf32> to vector<8x128xf32>
    %280 = arith.addf %278, %279 : vector<8x128xf32>
    %281 = arith.negf %280 : vector<8x128xf32>
    %282 = math.exp %281 : vector<8x128xf32>
    %cst_95 = arith.constant 1.000000e+00 : f32
    %283 = vector.broadcast %cst_95 : f32 to vector<8x128xf32>
    %284 = arith.addf %283, %282 : vector<8x128xf32>
    %285 = arith.divf %283, %284 : vector<8x128xf32>
    %286 = vector.extract_strided_slice %273 {offsets = [0, 128], sizes = [8, 128], strides = [1, 1]} : vector<8x384xf32> to vector<8x128xf32>
    %287 = vector.extract_strided_slice %277 {offsets = [0, 128], sizes = [8, 128], strides = [1, 1]} : vector<8x384xf32> to vector<8x128xf32>
    %288 = arith.addf %286, %287 : vector<8x128xf32>
    %289 = arith.negf %288 : vector<8x128xf32>
    %290 = math.exp %289 : vector<8x128xf32>
    %cst_96 = arith.constant 1.000000e+00 : f32
    %291 = vector.broadcast %cst_96 : f32 to vector<8x128xf32>
    %292 = arith.addf %291, %290 : vector<8x128xf32>
    %293 = arith.divf %291, %292 : vector<8x128xf32>
    %294 = vector.extract_strided_slice %273 {offsets = [0, 256], sizes = [8, 128], strides = [1, 1]} : vector<8x384xf32> to vector<8x128xf32>
    %295 = vector.extract_strided_slice %277 {offsets = [0, 256], sizes = [8, 128], strides = [1, 1]} : vector<8x384xf32> to vector<8x128xf32>
    %296 = arith.mulf %285, %295 : vector<8x128xf32>
    %297 = arith.addf %294, %296 : vector<8x128xf32>
    %298 = math.tanh %297 : vector<8x128xf32>
    %cst_97 = arith.constant 1.000000e+00 : f32
    %299 = vector.broadcast %cst_97 : f32 to vector<8x128xf32>
    %300 = arith.subf %299, %293 : vector<8x128xf32>
    %301 = arith.mulf %300, %298 : vector<8x128xf32>
    %302 = arith.mulf %293, %274 : vector<8x128xf32>
    %303 = arith.addf %301, %302 : vector<8x128xf32>
    %c0_98 = arith.constant 0 : index
    %c0_99 = arith.constant 0 : index
    %304 = vector.load %arg15[%c0_98, %c0_99] : memref<8x128xf32, #tpu.memory_space<vmem>>, vector<8x128xf32>
    tpu.vector_store %arg15[%c0_98, %c0_99], %303 {strides = array<i32>} : memref<8x128xf32, #tpu.memory_space<vmem>>, vector<8x128xf32>,
    %305 = arith.index_cast %271 : i32 to index
    %c0_100 = arith.constant 0 : index
    %306 = vector.load %arg16[%305, %c0_100] : memref<64x128xf32, #tpu.memory_space<vmem>>, vector<8x128xf32>
    tpu.vector_store %arg16[%305, %c0_100], %303 {strides = array<i32>} : memref<64x128xf32, #tpu.memory_space<vmem>>, vector<8x128xf32>,
    %c8_i32_101 = arith.constant 8 : i32
    %c0_102 = arith.constant 0 : index
    %c0_103 = arith.constant 0 : index
    %307 = vector.load %arg16[%c0_102, %c0_103] : memref<64x128xf32, #tpu.memory_space<vmem>>, vector<64x128xf32>
    %c0_104 = arith.constant 0 : index
    %c0_105 = arith.constant 0 : index
    %308 = vector.load %arg6[%c0_104, %c0_105] : memref<128x384xf32, #tpu.memory_space<vmem>>, vector<128x384xf32>
    %cst_106 = arith.constant dense<0.000000e+00> : vector<64x384xf32>
    %309 = tpu.matmul %307, %308, %cst_106 {dimension_numbers = #tpu.dot_dimension_numbers<[1], [0], [0], [1], [0, 0, 1, 1], [], []>} : vector<64x128xf32>, vector<128x384xf32>, vector<64x384xf32> -> vector<64x384xf32>
    %c0_107 = arith.constant 0 : index
    %c0_108 = arith.constant 0 : index
    %310 = vector.load %arg8[%c0_107, %c0_108] : memref<1x384xf32, #tpu.memory_space<vmem>>, vector<1x384xf32>
    %311 = vector.broadcast %310 : vector<1x384xf32> to vector<64x384xf32>
    %312 = arith.addf %309, %311 : vector<64x384xf32>
    %c0_109 = arith.constant 0 : index
    %c0_110 = arith.constant 0 : index
    %313 = vector.load %arg17[%c0_109, %c0_110] : memref<64x384xf32, #tpu.memory_space<vmem>>, vector<64x384xf32>
    tpu.vector_store %arg17[%c0_109, %c0_110], %312 {strides = array<i32>} : memref<64x384xf32, #tpu.memory_space<vmem>>, vector<64x384xf32>,
    %c0_111 = arith.constant 0 : index
    %c0_112 = arith.constant 0 : index
    %314 = vector.load %arg7[%c0_111, %c0_112] : memref<128x384xf32, #tpu.memory_space<vmem>>, vector<128x384xf32>
    %c0_113 = arith.constant 0 : index
    %c0_114 = arith.constant 0 : index
    %315 = vector.load %arg9[%c0_113, %c0_114] : memref<1x384xf32, #tpu.memory_space<vmem>>, vector<1x384xf32>
    %cst_115 = arith.constant 0.000000e+00 : f32
    %316 = vector.broadcast %cst_115 : f32 to vector<8x128xf32>
    %c0_116 = arith.constant 0 : index
    %c0_117 = arith.constant 0 : index
    %317 = vector.load %arg15[%c0_116, %c0_117] : memref<8x128xf32, #tpu.memory_space<vmem>>, vector<8x128xf32>
    tpu.vector_store %arg15[%c0_116, %c0_117], %316 {strides = array<i32>} : memref<8x128xf32, #tpu.memory_space<vmem>>, vector<8x128xf32>,
    %c0_i32_118 = arith.constant 0 : i32
    %c8_i32_119 = arith.constant 8 : i32
    %318 = arith.muli %c0_i32_118, %c8_i32_119 : i32
    %319 = tpu.assume_multiple %318, 8 : i32
    %320 = arith.index_cast %319 : i32 to index
    %c0_120 = arith.constant 0 : index
    %321 = vector.load %arg17[%320, %c0_120] : memref<64x384xf32, #tpu.memory_space<vmem>>, vector<8x384xf32>
    %c0_121 = arith.constant 0 : index
    %c0_122 = arith.constant 0 : index
    %322 = vector.load %arg15[%c0_121, %c0_122] : memref<8x128xf32, #tpu.memory_space<vmem>>, vector<8x128xf32>
    %cst_123 = arith.constant dense<0.000000e+00> : vector<8x384xf32>
    %323 = tpu.matmul %322, %314, %cst_123 {dimension_numbers = #tpu.dot_dimension_numbers<[1], [0], [0], [1], [0, 0, 1, 1], [], []>} : vector<8x128xf32>, vector<128x384xf32>, vector<8x384xf32> -> vector<8x384xf32>
    %324 = vector.broadcast %315 : vector<1x384xf32> to vector<8x384xf32>
    %325 = arith.addf %323, %324 : vector<8x384xf32>
    %326 = vector.extract_strided_slice %321 {offsets = [0, 0], sizes = [8, 128], strides = [1, 1]} : vector<8x384xf32> to vector<8x128xf32>
    %327 = vector.extract_strided_slice %325 {offsets = [0, 0], sizes = [8, 128], strides = [1, 1]} : vector<8x384xf32> to vector<8x128xf32>
    %328 = arith.addf %326, %327 : vector<8x128xf32>
    %329 = arith.negf %328 : vector<8x128xf32>
    %330 = math.exp %329 : vector<8x128xf32>
    %cst_124 = arith.constant 1.000000e+00 : f32
    %331 = vector.broadcast %cst_124 : f32 to vector<8x128xf32>
    %332 = arith.addf %331, %330 : vector<8x128xf32>
    %333 = arith.divf %331, %332 : vector<8x128xf32>
    %334 = vector.extract_strided_slice %321 {offsets = [0, 128], sizes = [8, 128], strides = [1, 1]} : vector<8x384xf32> to vector<8x128xf32>
    %335 = vector.extract_strided_slice %325 {offsets = [0, 128], sizes = [8, 128], strides = [1, 1]} : vector<8x384xf32> to vector<8x128xf32>
    %336 = arith.addf %334, %335 : vector<8x128xf32>
    %337 = arith.negf %336 : vector<8x128xf32>
    %338 = math.exp %337 : vector<8x128xf32>
    %cst_125 = arith.constant 1.000000e+00 : f32
    %339 = vector.broadcast %cst_125 : f32 to vector<8x128xf32>
    %340 = arith.addf %339, %338 : vector<8x128xf32>
    %341 = arith.divf %339, %340 : vector<8x128xf32>
    %342 = vector.extract_strided_slice %321 {offsets = [0, 256], sizes = [8, 128], strides = [1, 1]} : vector<8x384xf32> to vector<8x128xf32>
    %343 = vector.extract_strided_slice %325 {offsets = [0, 256], sizes = [8, 128], strides = [1, 1]} : vector<8x384xf32> to vector<8x128xf32>
    %344 = arith.mulf %333, %343 : vector<8x128xf32>
    %345 = arith.addf %342, %344 : vector<8x128xf32>
    %346 = math.tanh %345 : vector<8x128xf32>
    %cst_126 = arith.constant 1.000000e+00 : f32
    %347 = vector.broadcast %cst_126 : f32 to vector<8x128xf32>
    %348 = arith.subf %347, %341 : vector<8x128xf32>
    %349 = arith.mulf %348, %346 : vector<8x128xf32>
    %350 = arith.mulf %341, %322 : vector<8x128xf32>
    %351 = arith.addf %349, %350 : vector<8x128xf32>
    %c0_127 = arith.constant 0 : index
    %c0_128 = arith.constant 0 : index
    %352 = vector.load %arg15[%c0_127, %c0_128] : memref<8x128xf32, #tpu.memory_space<vmem>>, vector<8x128xf32>
    tpu.vector_store %arg15[%c0_127, %c0_128], %351 {strides = array<i32>} : memref<8x128xf32, #tpu.memory_space<vmem>>, vector<8x128xf32>,
    %353 = arith.index_cast %319 : i32 to index
    %c0_129 = arith.constant 0 : index
    %354 = vector.load %arg16[%353, %c0_129] : memref<64x128xf32, #tpu.memory_space<vmem>>, vector<8x128xf32>
    tpu.vector_store %arg16[%353, %c0_129], %351 {strides = array<i32>} : memref<64x128xf32, #tpu.memory_space<vmem>>, vector<8x128xf32>,
    %c1_i32_130 = arith.constant 1 : i32
    %c8_i32_131 = arith.constant 8 : i32
    %355 = arith.muli %c1_i32_130, %c8_i32_131 : i32
    %356 = tpu.assume_multiple %355, 8 : i32
    %357 = arith.index_cast %356 : i32 to index
    %c0_132 = arith.constant 0 : index
    %358 = vector.load %arg17[%357, %c0_132] : memref<64x384xf32, #tpu.memory_space<vmem>>, vector<8x384xf32>
    %c0_133 = arith.constant 0 : index
    %c0_134 = arith.constant 0 : index
    %359 = vector.load %arg15[%c0_133, %c0_134] : memref<8x128xf32, #tpu.memory_space<vmem>>, vector<8x128xf32>
    %cst_135 = arith.constant dense<0.000000e+00> : vector<8x384xf32>
    %360 = tpu.matmul %359, %314, %cst_135 {dimension_numbers = #tpu.dot_dimension_numbers<[1], [0], [0], [1], [0, 0, 1, 1], [], []>} : vector<8x128xf32>, vector<128x384xf32>, vector<8x384xf32> -> vector<8x384xf32>
    %361 = vector.broadcast %315 : vector<1x384xf32> to vector<8x384xf32>
    %362 = arith.addf %360, %361 : vector<8x384xf32>
    %363 = vector.extract_strided_slice %358 {offsets = [0, 0], sizes = [8, 128], strides = [1, 1]} : vector<8x384xf32> to vector<8x128xf32>
    %364 = vector.extract_strided_slice %362 {offsets = [0, 0], sizes = [8, 128], strides = [1, 1]} : vector<8x384xf32> to vector<8x128xf32>
    %365 = arith.addf %363, %364 : vector<8x128xf32>
    %366 = arith.negf %365 : vector<8x128xf32>
    %367 = math.exp %366 : vector<8x128xf32>
    %cst_136 = arith.constant 1.000000e+00 : f32
    %368 = vector.broadcast %cst_136 : f32 to vector<8x128xf32>
    %369 = arith.addf %368, %367 : vector<8x128xf32>
    %370 = arith.divf %368, %369 : vector<8x128xf32>
    %371 = vector.extract_strided_slice %358 {offsets = [0, 128], sizes = [8, 128], strides = [1, 1]} : vector<8x384xf32> to vector<8x128xf32>
    %372 = vector.extract_strided_slice %362 {offsets = [0, 128], sizes = [8, 128], strides = [1, 1]} : vector<8x384xf32> to vector<8x128xf32>
    %373 = arith.addf %371, %372 : vector<8x128xf32>
    %374 = arith.negf %373 : vector<8x128xf32>
    %375 = math.exp %374 : vector<8x128xf32>
    %cst_137 = arith.constant 1.000000e+00 : f32
    %376 = vector.broadcast %cst_137 : f32 to vector<8x128xf32>
    %377 = arith.addf %376, %375 : vector<8x128xf32>
    %378 = arith.divf %376, %377 : vector<8x128xf32>
    %379 = vector.extract_strided_slice %358 {offsets = [0, 256], sizes = [8, 128], strides = [1, 1]} : vector<8x384xf32> to vector<8x128xf32>
    %380 = vector.extract_strided_slice %362 {offsets = [0, 256], sizes = [8, 128], strides = [1, 1]} : vector<8x384xf32> to vector<8x128xf32>
    %381 = arith.mulf %370, %380 : vector<8x128xf32>
    %382 = arith.addf %379, %381 : vector<8x128xf32>
    %383 = math.tanh %382 : vector<8x128xf32>
    %cst_138 = arith.constant 1.000000e+00 : f32
    %384 = vector.broadcast %cst_138 : f32 to vector<8x128xf32>
    %385 = arith.subf %384, %378 : vector<8x128xf32>
    %386 = arith.mulf %385, %383 : vector<8x128xf32>
    %387 = arith.mulf %378, %359 : vector<8x128xf32>
    %388 = arith.addf %386, %387 : vector<8x128xf32>
    %c0_139 = arith.constant 0 : index
    %c0_140 = arith.constant 0 : index
    %389 = vector.load %arg15[%c0_139, %c0_140] : memref<8x128xf32, #tpu.memory_space<vmem>>, vector<8x128xf32>
    tpu.vector_store %arg15[%c0_139, %c0_140], %388 {strides = array<i32>} : memref<8x128xf32, #tpu.memory_space<vmem>>, vector<8x128xf32>,
    %390 = arith.index_cast %356 : i32 to index
    %c0_141 = arith.constant 0 : index
    %391 = vector.load %arg16[%390, %c0_141] : memref<64x128xf32, #tpu.memory_space<vmem>>, vector<8x128xf32>
    tpu.vector_store %arg16[%390, %c0_141], %388 {strides = array<i32>} : memref<64x128xf32, #tpu.memory_space<vmem>>, vector<8x128xf32>,
    %c2_i32_142 = arith.constant 2 : i32
    %c8_i32_143 = arith.constant 8 : i32
    %392 = arith.muli %c2_i32_142, %c8_i32_143 : i32
    %393 = tpu.assume_multiple %392, 8 : i32
    %394 = arith.index_cast %393 : i32 to index
    %c0_144 = arith.constant 0 : index
    %395 = vector.load %arg17[%394, %c0_144] : memref<64x384xf32, #tpu.memory_space<vmem>>, vector<8x384xf32>
    %c0_145 = arith.constant 0 : index
    %c0_146 = arith.constant 0 : index
    %396 = vector.load %arg15[%c0_145, %c0_146] : memref<8x128xf32, #tpu.memory_space<vmem>>, vector<8x128xf32>
    %cst_147 = arith.constant dense<0.000000e+00> : vector<8x384xf32>
    %397 = tpu.matmul %396, %314, %cst_147 {dimension_numbers = #tpu.dot_dimension_numbers<[1], [0], [0], [1], [0, 0, 1, 1], [], []>} : vector<8x128xf32>, vector<128x384xf32>, vector<8x384xf32> -> vector<8x384xf32>
    %398 = vector.broadcast %315 : vector<1x384xf32> to vector<8x384xf32>
    %399 = arith.addf %397, %398 : vector<8x384xf32>
    %400 = vector.extract_strided_slice %395 {offsets = [0, 0], sizes = [8, 128], strides = [1, 1]} : vector<8x384xf32> to vector<8x128xf32>
    %401 = vector.extract_strided_slice %399 {offsets = [0, 0], sizes = [8, 128], strides = [1, 1]} : vector<8x384xf32> to vector<8x128xf32>
    %402 = arith.addf %400, %401 : vector<8x128xf32>
    %403 = arith.negf %402 : vector<8x128xf32>
    %404 = math.exp %403 : vector<8x128xf32>
    %cst_148 = arith.constant 1.000000e+00 : f32
    %405 = vector.broadcast %cst_148 : f32 to vector<8x128xf32>
    %406 = arith.addf %405, %404 : vector<8x128xf32>
    %407 = arith.divf %405, %406 : vector<8x128xf32>
    %408 = vector.extract_strided_slice %395 {offsets = [0, 128], sizes = [8, 128], strides = [1, 1]} : vector<8x384xf32> to vector<8x128xf32>
    %409 = vector.extract_strided_slice %399 {offsets = [0, 128], sizes = [8, 128], strides = [1, 1]} : vector<8x384xf32> to vector<8x128xf32>
    %410 = arith.addf %408, %409 : vector<8x128xf32>
    %411 = arith.negf %410 : vector<8x128xf32>
    %412 = math.exp %411 : vector<8x128xf32>
    %cst_149 = arith.constant 1.000000e+00 : f32
    %413 = vector.broadcast %cst_149 : f32 to vector<8x128xf32>
    %414 = arith.addf %413, %412 : vector<8x128xf32>
    %415 = arith.divf %413, %414 : vector<8x128xf32>
    %416 = vector.extract_strided_slice %395 {offsets = [0, 256], sizes = [8, 128], strides = [1, 1]} : vector<8x384xf32> to vector<8x128xf32>
    %417 = vector.extract_strided_slice %399 {offsets = [0, 256], sizes = [8, 128], strides = [1, 1]} : vector<8x384xf32> to vector<8x128xf32>
    %418 = arith.mulf %407, %417 : vector<8x128xf32>
    %419 = arith.addf %416, %418 : vector<8x128xf32>
    %420 = math.tanh %419 : vector<8x128xf32>
    %cst_150 = arith.constant 1.000000e+00 : f32
    %421 = vector.broadcast %cst_150 : f32 to vector<8x128xf32>
    %422 = arith.subf %421, %415 : vector<8x128xf32>
    %423 = arith.mulf %422, %420 : vector<8x128xf32>
    %424 = arith.mulf %415, %396 : vector<8x128xf32>
    %425 = arith.addf %423, %424 : vector<8x128xf32>
    %c0_151 = arith.constant 0 : index
    %c0_152 = arith.constant 0 : index
    %426 = vector.load %arg15[%c0_151, %c0_152] : memref<8x128xf32, #tpu.memory_space<vmem>>, vector<8x128xf32>
    tpu.vector_store %arg15[%c0_151, %c0_152], %425 {strides = array<i32>} : memref<8x128xf32, #tpu.memory_space<vmem>>, vector<8x128xf32>,
    %427 = arith.index_cast %393 : i32 to index
    %c0_153 = arith.constant 0 : index
    %428 = vector.load %arg16[%427, %c0_153] : memref<64x128xf32, #tpu.memory_space<vmem>>, vector<8x128xf32>
    tpu.vector_store %arg16[%427, %c0_153], %425 {strides = array<i32>} : memref<64x128xf32, #tpu.memory_space<vmem>>, vector<8x128xf32>,
    %c3_i32_154 = arith.constant 3 : i32
    %c8_i32_155 = arith.constant 8 : i32
    %429 = arith.muli %c3_i32_154, %c8_i32_155 : i32
    %430 = tpu.assume_multiple %429, 8 : i32
    %431 = arith.index_cast %430 : i32 to index
    %c0_156 = arith.constant 0 : index
    %432 = vector.load %arg17[%431, %c0_156] : memref<64x384xf32, #tpu.memory_space<vmem>>, vector<8x384xf32>
    %c0_157 = arith.constant 0 : index
    %c0_158 = arith.constant 0 : index
    %433 = vector.load %arg15[%c0_157, %c0_158] : memref<8x128xf32, #tpu.memory_space<vmem>>, vector<8x128xf32>
    %cst_159 = arith.constant dense<0.000000e+00> : vector<8x384xf32>
    %434 = tpu.matmul %433, %314, %cst_159 {dimension_numbers = #tpu.dot_dimension_numbers<[1], [0], [0], [1], [0, 0, 1, 1], [], []>} : vector<8x128xf32>, vector<128x384xf32>, vector<8x384xf32> -> vector<8x384xf32>
    %435 = vector.broadcast %315 : vector<1x384xf32> to vector<8x384xf32>
    %436 = arith.addf %434, %435 : vector<8x384xf32>
    %437 = vector.extract_strided_slice %432 {offsets = [0, 0], sizes = [8, 128], strides = [1, 1]} : vector<8x384xf32> to vector<8x128xf32>
    %438 = vector.extract_strided_slice %436 {offsets = [0, 0], sizes = [8, 128], strides = [1, 1]} : vector<8x384xf32> to vector<8x128xf32>
    %439 = arith.addf %437, %438 : vector<8x128xf32>
    %440 = arith.negf %439 : vector<8x128xf32>
    %441 = math.exp %440 : vector<8x128xf32>
    %cst_160 = arith.constant 1.000000e+00 : f32
    %442 = vector.broadcast %cst_160 : f32 to vector<8x128xf32>
    %443 = arith.addf %442, %441 : vector<8x128xf32>
    %444 = arith.divf %442, %443 : vector<8x128xf32>
    %445 = vector.extract_strided_slice %432 {offsets = [0, 128], sizes = [8, 128], strides = [1, 1]} : vector<8x384xf32> to vector<8x128xf32>
    %446 = vector.extract_strided_slice %436 {offsets = [0, 128], sizes = [8, 128], strides = [1, 1]} : vector<8x384xf32> to vector<8x128xf32>
    %447 = arith.addf %445, %446 : vector<8x128xf32>
    %448 = arith.negf %447 : vector<8x128xf32>
    %449 = math.exp %448 : vector<8x128xf32>
    %cst_161 = arith.constant 1.000000e+00 : f32
    %450 = vector.broadcast %cst_161 : f32 to vector<8x128xf32>
    %451 = arith.addf %450, %449 : vector<8x128xf32>
    %452 = arith.divf %450, %451 : vector<8x128xf32>
    %453 = vector.extract_strided_slice %432 {offsets = [0, 256], sizes = [8, 128], strides = [1, 1]} : vector<8x384xf32> to vector<8x128xf32>
    %454 = vector.extract_strided_slice %436 {offsets = [0, 256], sizes = [8, 128], strides = [1, 1]} : vector<8x384xf32> to vector<8x128xf32>
    %455 = arith.mulf %444, %454 : vector<8x128xf32>
    %456 = arith.addf %453, %455 : vector<8x128xf32>
    %457 = math.tanh %456 : vector<8x128xf32>
    %cst_162 = arith.constant 1.000000e+00 : f32
    %458 = vector.broadcast %cst_162 : f32 to vector<8x128xf32>
    %459 = arith.subf %458, %452 : vector<8x128xf32>
    %460 = arith.mulf %459, %457 : vector<8x128xf32>
    %461 = arith.mulf %452, %433 : vector<8x128xf32>
    %462 = arith.addf %460, %461 : vector<8x128xf32>
    %c0_163 = arith.constant 0 : index
    %c0_164 = arith.constant 0 : index
    %463 = vector.load %arg15[%c0_163, %c0_164] : memref<8x128xf32, #tpu.memory_space<vmem>>, vector<8x128xf32>
    tpu.vector_store %arg15[%c0_163, %c0_164], %462 {strides = array<i32>} : memref<8x128xf32, #tpu.memory_space<vmem>>, vector<8x128xf32>,
    %464 = arith.index_cast %430 : i32 to index
    %c0_165 = arith.constant 0 : index
    %465 = vector.load %arg16[%464, %c0_165] : memref<64x128xf32, #tpu.memory_space<vmem>>, vector<8x128xf32>
    tpu.vector_store %arg16[%464, %c0_165], %462 {strides = array<i32>} : memref<64x128xf32, #tpu.memory_space<vmem>>, vector<8x128xf32>,
    %c4_i32_166 = arith.constant 4 : i32
    %c8_i32_167 = arith.constant 8 : i32
    %466 = arith.muli %c4_i32_166, %c8_i32_167 : i32
    %467 = tpu.assume_multiple %466, 8 : i32
    %468 = arith.index_cast %467 : i32 to index
    %c0_168 = arith.constant 0 : index
    %469 = vector.load %arg17[%468, %c0_168] : memref<64x384xf32, #tpu.memory_space<vmem>>, vector<8x384xf32>
    %c0_169 = arith.constant 0 : index
    %c0_170 = arith.constant 0 : index
    %470 = vector.load %arg15[%c0_169, %c0_170] : memref<8x128xf32, #tpu.memory_space<vmem>>, vector<8x128xf32>
    %cst_171 = arith.constant dense<0.000000e+00> : vector<8x384xf32>
    %471 = tpu.matmul %470, %314, %cst_171 {dimension_numbers = #tpu.dot_dimension_numbers<[1], [0], [0], [1], [0, 0, 1, 1], [], []>} : vector<8x128xf32>, vector<128x384xf32>, vector<8x384xf32> -> vector<8x384xf32>
    %472 = vector.broadcast %315 : vector<1x384xf32> to vector<8x384xf32>
    %473 = arith.addf %471, %472 : vector<8x384xf32>
    %474 = vector.extract_strided_slice %469 {offsets = [0, 0], sizes = [8, 128], strides = [1, 1]} : vector<8x384xf32> to vector<8x128xf32>
    %475 = vector.extract_strided_slice %473 {offsets = [0, 0], sizes = [8, 128], strides = [1, 1]} : vector<8x384xf32> to vector<8x128xf32>
    %476 = arith.addf %474, %475 : vector<8x128xf32>
    %477 = arith.negf %476 : vector<8x128xf32>
    %478 = math.exp %477 : vector<8x128xf32>
    %cst_172 = arith.constant 1.000000e+00 : f32
    %479 = vector.broadcast %cst_172 : f32 to vector<8x128xf32>
    %480 = arith.addf %479, %478 : vector<8x128xf32>
    %481 = arith.divf %479, %480 : vector<8x128xf32>
    %482 = vector.extract_strided_slice %469 {offsets = [0, 128], sizes = [8, 128], strides = [1, 1]} : vector<8x384xf32> to vector<8x128xf32>
    %483 = vector.extract_strided_slice %473 {offsets = [0, 128], sizes = [8, 128], strides = [1, 1]} : vector<8x384xf32> to vector<8x128xf32>
    %484 = arith.addf %482, %483 : vector<8x128xf32>
    %485 = arith.negf %484 : vector<8x128xf32>
    %486 = math.exp %485 : vector<8x128xf32>
    %cst_173 = arith.constant 1.000000e+00 : f32
    %487 = vector.broadcast %cst_173 : f32 to vector<8x128xf32>
    %488 = arith.addf %487, %486 : vector<8x128xf32>
    %489 = arith.divf %487, %488 : vector<8x128xf32>
    %490 = vector.extract_strided_slice %469 {offsets = [0, 256], sizes = [8, 128], strides = [1, 1]} : vector<8x384xf32> to vector<8x128xf32>
    %491 = vector.extract_strided_slice %473 {offsets = [0, 256], sizes = [8, 128], strides = [1, 1]} : vector<8x384xf32> to vector<8x128xf32>
    %492 = arith.mulf %481, %491 : vector<8x128xf32>
    %493 = arith.addf %490, %492 : vector<8x128xf32>
    %494 = math.tanh %493 : vector<8x128xf32>
    %cst_174 = arith.constant 1.000000e+00 : f32
    %495 = vector.broadcast %cst_174 : f32 to vector<8x128xf32>
    %496 = arith.subf %495, %489 : vector<8x128xf32>
    %497 = arith.mulf %496, %494 : vector<8x128xf32>
    %498 = arith.mulf %489, %470 : vector<8x128xf32>
    %499 = arith.addf %497, %498 : vector<8x128xf32>
    %c0_175 = arith.constant 0 : index
    %c0_176 = arith.constant 0 : index
    %500 = vector.load %arg15[%c0_175, %c0_176] : memref<8x128xf32, #tpu.memory_space<vmem>>, vector<8x128xf32>
    tpu.vector_store %arg15[%c0_175, %c0_176], %499 {strides = array<i32>} : memref<8x128xf32, #tpu.memory_space<vmem>>, vector<8x128xf32>,
    %501 = arith.index_cast %467 : i32 to index
    %c0_177 = arith.constant 0 : index
    %502 = vector.load %arg16[%501, %c0_177] : memref<64x128xf32, #tpu.memory_space<vmem>>, vector<8x128xf32>
    tpu.vector_store %arg16[%501, %c0_177], %499 {strides = array<i32>} : memref<64x128xf32, #tpu.memory_space<vmem>>, vector<8x128xf32>,
    %c5_i32_178 = arith.constant 5 : i32
    %c8_i32_179 = arith.constant 8 : i32
    %503 = arith.muli %c5_i32_178, %c8_i32_179 : i32
    %504 = tpu.assume_multiple %503, 8 : i32
    %505 = arith.index_cast %504 : i32 to index
    %c0_180 = arith.constant 0 : index
    %506 = vector.load %arg17[%505, %c0_180] : memref<64x384xf32, #tpu.memory_space<vmem>>, vector<8x384xf32>
    %c0_181 = arith.constant 0 : index
    %c0_182 = arith.constant 0 : index
    %507 = vector.load %arg15[%c0_181, %c0_182] : memref<8x128xf32, #tpu.memory_space<vmem>>, vector<8x128xf32>
    %cst_183 = arith.constant dense<0.000000e+00> : vector<8x384xf32>
    %508 = tpu.matmul %507, %314, %cst_183 {dimension_numbers = #tpu.dot_dimension_numbers<[1], [0], [0], [1], [0, 0, 1, 1], [], []>} : vector<8x128xf32>, vector<128x384xf32>, vector<8x384xf32> -> vector<8x384xf32>
    %509 = vector.broadcast %315 : vector<1x384xf32> to vector<8x384xf32>
    %510 = arith.addf %508, %509 : vector<8x384xf32>
    %511 = vector.extract_strided_slice %506 {offsets = [0, 0], sizes = [8, 128], strides = [1, 1]} : vector<8x384xf32> to vector<8x128xf32>
    %512 = vector.extract_strided_slice %510 {offsets = [0, 0], sizes = [8, 128], strides = [1, 1]} : vector<8x384xf32> to vector<8x128xf32>
    %513 = arith.addf %511, %512 : vector<8x128xf32>
    %514 = arith.negf %513 : vector<8x128xf32>
    %515 = math.exp %514 : vector<8x128xf32>
    %cst_184 = arith.constant 1.000000e+00 : f32
    %516 = vector.broadcast %cst_184 : f32 to vector<8x128xf32>
    %517 = arith.addf %516, %515 : vector<8x128xf32>
    %518 = arith.divf %516, %517 : vector<8x128xf32>
    %519 = vector.extract_strided_slice %506 {offsets = [0, 128], sizes = [8, 128], strides = [1, 1]} : vector<8x384xf32> to vector<8x128xf32>
    %520 = vector.extract_strided_slice %510 {offsets = [0, 128], sizes = [8, 128], strides = [1, 1]} : vector<8x384xf32> to vector<8x128xf32>
    %521 = arith.addf %519, %520 : vector<8x128xf32>
    %522 = arith.negf %521 : vector<8x128xf32>
    %523 = math.exp %522 : vector<8x128xf32>
    %cst_185 = arith.constant 1.000000e+00 : f32
    %524 = vector.broadcast %cst_185 : f32 to vector<8x128xf32>
    %525 = arith.addf %524, %523 : vector<8x128xf32>
    %526 = arith.divf %524, %525 : vector<8x128xf32>
    %527 = vector.extract_strided_slice %506 {offsets = [0, 256], sizes = [8, 128], strides = [1, 1]} : vector<8x384xf32> to vector<8x128xf32>
    %528 = vector.extract_strided_slice %510 {offsets = [0, 256], sizes = [8, 128], strides = [1, 1]} : vector<8x384xf32> to vector<8x128xf32>
    %529 = arith.mulf %518, %528 : vector<8x128xf32>
    %530 = arith.addf %527, %529 : vector<8x128xf32>
    %531 = math.tanh %530 : vector<8x128xf32>
    %cst_186 = arith.constant 1.000000e+00 : f32
    %532 = vector.broadcast %cst_186 : f32 to vector<8x128xf32>
    %533 = arith.subf %532, %526 : vector<8x128xf32>
    %534 = arith.mulf %533, %531 : vector<8x128xf32>
    %535 = arith.mulf %526, %507 : vector<8x128xf32>
    %536 = arith.addf %534, %535 : vector<8x128xf32>
    %c0_187 = arith.constant 0 : index
    %c0_188 = arith.constant 0 : index
    %537 = vector.load %arg15[%c0_187, %c0_188] : memref<8x128xf32, #tpu.memory_space<vmem>>, vector<8x128xf32>
    tpu.vector_store %arg15[%c0_187, %c0_188], %536 {strides = array<i32>} : memref<8x128xf32, #tpu.memory_space<vmem>>, vector<8x128xf32>,
    %538 = arith.index_cast %504 : i32 to index
    %c0_189 = arith.constant 0 : index
    %539 = vector.load %arg16[%538, %c0_189] : memref<64x128xf32, #tpu.memory_space<vmem>>, vector<8x128xf32>
    tpu.vector_store %arg16[%538, %c0_189], %536 {strides = array<i32>} : memref<64x128xf32, #tpu.memory_space<vmem>>, vector<8x128xf32>,
    %c6_i32_190 = arith.constant 6 : i32
    %c8_i32_191 = arith.constant 8 : i32
    %540 = arith.muli %c6_i32_190, %c8_i32_191 : i32
    %541 = tpu.assume_multiple %540, 8 : i32
    %542 = arith.index_cast %541 : i32 to index
    %c0_192 = arith.constant 0 : index
    %543 = vector.load %arg17[%542, %c0_192] : memref<64x384xf32, #tpu.memory_space<vmem>>, vector<8x384xf32>
    %c0_193 = arith.constant 0 : index
    %c0_194 = arith.constant 0 : index
    %544 = vector.load %arg15[%c0_193, %c0_194] : memref<8x128xf32, #tpu.memory_space<vmem>>, vector<8x128xf32>
    %cst_195 = arith.constant dense<0.000000e+00> : vector<8x384xf32>
    %545 = tpu.matmul %544, %314, %cst_195 {dimension_numbers = #tpu.dot_dimension_numbers<[1], [0], [0], [1], [0, 0, 1, 1], [], []>} : vector<8x128xf32>, vector<128x384xf32>, vector<8x384xf32> -> vector<8x384xf32>
    %546 = vector.broadcast %315 : vector<1x384xf32> to vector<8x384xf32>
    %547 = arith.addf %545, %546 : vector<8x384xf32>
    %548 = vector.extract_strided_slice %543 {offsets = [0, 0], sizes = [8, 128], strides = [1, 1]} : vector<8x384xf32> to vector<8x128xf32>
    %549 = vector.extract_strided_slice %547 {offsets = [0, 0], sizes = [8, 128], strides = [1, 1]} : vector<8x384xf32> to vector<8x128xf32>
    %550 = arith.addf %548, %549 : vector<8x128xf32>
    %551 = arith.negf %550 : vector<8x128xf32>
    %552 = math.exp %551 : vector<8x128xf32>
    %cst_196 = arith.constant 1.000000e+00 : f32
    %553 = vector.broadcast %cst_196 : f32 to vector<8x128xf32>
    %554 = arith.addf %553, %552 : vector<8x128xf32>
    %555 = arith.divf %553, %554 : vector<8x128xf32>
    %556 = vector.extract_strided_slice %543 {offsets = [0, 128], sizes = [8, 128], strides = [1, 1]} : vector<8x384xf32> to vector<8x128xf32>
    %557 = vector.extract_strided_slice %547 {offsets = [0, 128], sizes = [8, 128], strides = [1, 1]} : vector<8x384xf32> to vector<8x128xf32>
    %558 = arith.addf %556, %557 : vector<8x128xf32>
    %559 = arith.negf %558 : vector<8x128xf32>
    %560 = math.exp %559 : vector<8x128xf32>
    %cst_197 = arith.constant 1.000000e+00 : f32
    %561 = vector.broadcast %cst_197 : f32 to vector<8x128xf32>
    %562 = arith.addf %561, %560 : vector<8x128xf32>
    %563 = arith.divf %561, %562 : vector<8x128xf32>
    %564 = vector.extract_strided_slice %543 {offsets = [0, 256], sizes = [8, 128], strides = [1, 1]} : vector<8x384xf32> to vector<8x128xf32>
    %565 = vector.extract_strided_slice %547 {offsets = [0, 256], sizes = [8, 128], strides = [1, 1]} : vector<8x384xf32> to vector<8x128xf32>
    %566 = arith.mulf %555, %565 : vector<8x128xf32>
    %567 = arith.addf %564, %566 : vector<8x128xf32>
    %568 = math.tanh %567 : vector<8x128xf32>
    %cst_198 = arith.constant 1.000000e+00 : f32
    %569 = vector.broadcast %cst_198 : f32 to vector<8x128xf32>
    %570 = arith.subf %569, %563 : vector<8x128xf32>
    %571 = arith.mulf %570, %568 : vector<8x128xf32>
    %572 = arith.mulf %563, %544 : vector<8x128xf32>
    %573 = arith.addf %571, %572 : vector<8x128xf32>
    %c0_199 = arith.constant 0 : index
    %c0_200 = arith.constant 0 : index
    %574 = vector.load %arg15[%c0_199, %c0_200] : memref<8x128xf32, #tpu.memory_space<vmem>>, vector<8x128xf32>
    tpu.vector_store %arg15[%c0_199, %c0_200], %573 {strides = array<i32>} : memref<8x128xf32, #tpu.memory_space<vmem>>, vector<8x128xf32>,
    %575 = arith.index_cast %541 : i32 to index
    %c0_201 = arith.constant 0 : index
    %576 = vector.load %arg16[%575, %c0_201] : memref<64x128xf32, #tpu.memory_space<vmem>>, vector<8x128xf32>
    tpu.vector_store %arg16[%575, %c0_201], %573 {strides = array<i32>} : memref<64x128xf32, #tpu.memory_space<vmem>>, vector<8x128xf32>,
    %c7_i32_202 = arith.constant 7 : i32
    %c8_i32_203 = arith.constant 8 : i32
    %577 = arith.muli %c7_i32_202, %c8_i32_203 : i32
    %578 = tpu.assume_multiple %577, 8 : i32
    %579 = arith.index_cast %578 : i32 to index
    %c0_204 = arith.constant 0 : index
    %580 = vector.load %arg17[%579, %c0_204] : memref<64x384xf32, #tpu.memory_space<vmem>>, vector<8x384xf32>
    %c0_205 = arith.constant 0 : index
    %c0_206 = arith.constant 0 : index
    %581 = vector.load %arg15[%c0_205, %c0_206] : memref<8x128xf32, #tpu.memory_space<vmem>>, vector<8x128xf32>
    %cst_207 = arith.constant dense<0.000000e+00> : vector<8x384xf32>
    %582 = tpu.matmul %581, %314, %cst_207 {dimension_numbers = #tpu.dot_dimension_numbers<[1], [0], [0], [1], [0, 0, 1, 1], [], []>} : vector<8x128xf32>, vector<128x384xf32>, vector<8x384xf32> -> vector<8x384xf32>
    %583 = vector.broadcast %315 : vector<1x384xf32> to vector<8x384xf32>
    %584 = arith.addf %582, %583 : vector<8x384xf32>
    %585 = vector.extract_strided_slice %580 {offsets = [0, 0], sizes = [8, 128], strides = [1, 1]} : vector<8x384xf32> to vector<8x128xf32>
    %586 = vector.extract_strided_slice %584 {offsets = [0, 0], sizes = [8, 128], strides = [1, 1]} : vector<8x384xf32> to vector<8x128xf32>
    %587 = arith.addf %585, %586 : vector<8x128xf32>
    %588 = arith.negf %587 : vector<8x128xf32>
    %589 = math.exp %588 : vector<8x128xf32>
    %cst_208 = arith.constant 1.000000e+00 : f32
    %590 = vector.broadcast %cst_208 : f32 to vector<8x128xf32>
    %591 = arith.addf %590, %589 : vector<8x128xf32>
    %592 = arith.divf %590, %591 : vector<8x128xf32>
    %593 = vector.extract_strided_slice %580 {offsets = [0, 128], sizes = [8, 128], strides = [1, 1]} : vector<8x384xf32> to vector<8x128xf32>
    %594 = vector.extract_strided_slice %584 {offsets = [0, 128], sizes = [8, 128], strides = [1, 1]} : vector<8x384xf32> to vector<8x128xf32>
    %595 = arith.addf %593, %594 : vector<8x128xf32>
    %596 = arith.negf %595 : vector<8x128xf32>
    %597 = math.exp %596 : vector<8x128xf32>
    %cst_209 = arith.constant 1.000000e+00 : f32
    %598 = vector.broadcast %cst_209 : f32 to vector<8x128xf32>
    %599 = arith.addf %598, %597 : vector<8x128xf32>
    %600 = arith.divf %598, %599 : vector<8x128xf32>
    %601 = vector.extract_strided_slice %580 {offsets = [0, 256], sizes = [8, 128], strides = [1, 1]} : vector<8x384xf32> to vector<8x128xf32>
    %602 = vector.extract_strided_slice %584 {offsets = [0, 256], sizes = [8, 128], strides = [1, 1]} : vector<8x384xf32> to vector<8x128xf32>
    %603 = arith.mulf %592, %602 : vector<8x128xf32>
    %604 = arith.addf %601, %603 : vector<8x128xf32>
    %605 = math.tanh %604 : vector<8x128xf32>
    %cst_210 = arith.constant 1.000000e+00 : f32
    %606 = vector.broadcast %cst_210 : f32 to vector<8x128xf32>
    %607 = arith.subf %606, %600 : vector<8x128xf32>
    %608 = arith.mulf %607, %605 : vector<8x128xf32>
    %609 = arith.mulf %600, %581 : vector<8x128xf32>
    %610 = arith.addf %608, %609 : vector<8x128xf32>
    %c0_211 = arith.constant 0 : index
    %c0_212 = arith.constant 0 : index
    %611 = vector.load %arg15[%c0_211, %c0_212] : memref<8x128xf32, #tpu.memory_space<vmem>>, vector<8x128xf32>
    tpu.vector_store %arg15[%c0_211, %c0_212], %610 {strides = array<i32>} : memref<8x128xf32, #tpu.memory_space<vmem>>, vector<8x128xf32>,
    %612 = arith.index_cast %578 : i32 to index
    %c0_213 = arith.constant 0 : index
    %613 = vector.load %arg16[%612, %c0_213] : memref<64x128xf32, #tpu.memory_space<vmem>>, vector<8x128xf32>
    tpu.vector_store %arg16[%612, %c0_213], %610 {strides = array<i32>} : memref<64x128xf32, #tpu.memory_space<vmem>>, vector<8x128xf32>,
    %c8_i32_214 = arith.constant 8 : i32
    %c0_215 = arith.constant 0 : index
    %c0_216 = arith.constant 0 : index
    %614 = vector.load %arg16[%c0_215, %c0_216] : memref<64x128xf32, #tpu.memory_space<vmem>>, vector<64x128xf32>
    %c0_217 = arith.constant 0 : index
    %c0_218 = arith.constant 0 : index
    %615 = vector.load %arg10[%c0_217, %c0_218] : memref<128x128xf32, #tpu.memory_space<vmem>>, vector<128x128xf32>
    %cst_219 = arith.constant dense<0.000000e+00> : vector<64x128xf32>
    %616 = tpu.matmul %614, %615, %cst_219 {dimension_numbers = #tpu.dot_dimension_numbers<[1], [0], [0], [1], [0, 0, 1, 1], [], []>} : vector<64x128xf32>, vector<128x128xf32>, vector<64x128xf32> -> vector<64x128xf32>
    %c0_220 = arith.constant 0 : index
    %c0_221 = arith.constant 0 : index
    %617 = vector.load %arg11[%c0_220, %c0_221] : memref<1x128xf32, #tpu.memory_space<vmem>>, vector<1x128xf32>
    %618 = vector.broadcast %617 : vector<1x128xf32> to vector<64x128xf32>
    %619 = arith.addf %616, %618 : vector<64x128xf32>
    %cst_222 = arith.constant 0.000000e+00 : f32
    %620 = vector.broadcast %cst_222 : f32 to vector<64x128xf32>
    %621 = arith.maximumf %619, %620 : vector<64x128xf32>
    %c0_223 = arith.constant 0 : index
    %c0_224 = arith.constant 0 : index
    %622 = vector.load %arg12[%c0_223, %c0_224] : memref<128x128xf32, #tpu.memory_space<vmem>>, vector<128x128xf32>
    %cst_225 = arith.constant dense<0.000000e+00> : vector<64x128xf32>
    %623 = tpu.matmul %621, %622, %cst_225 {dimension_numbers = #tpu.dot_dimension_numbers<[1], [0], [0], [1], [0, 0, 1, 1], [], []>} : vector<64x128xf32>, vector<128x128xf32>, vector<64x128xf32> -> vector<64x128xf32>
    %c0_226 = arith.constant 0 : index
    %c0_227 = arith.constant 0 : index
    %624 = vector.load %arg13[%c0_226, %c0_227] : memref<1x128xf32, #tpu.memory_space<vmem>>, vector<1x128xf32>
    %625 = vector.broadcast %624 : vector<1x128xf32> to vector<64x128xf32>
    %626 = arith.addf %623, %625 : vector<64x128xf32>
    %c0_228 = arith.constant 0 : index
    %c0_229 = arith.constant 0 : index
    %627 = vector.load %arg14[%c0_228, %c0_229] : memref<64x128xf32, #tpu.memory_space<vmem>>, vector<64x128xf32>
    tpu.vector_store %arg14[%c0_228, %c0_229], %626 {strides = array<i32>} : memref<64x128xf32, #tpu.memory_space<vmem>>, vector<64x128xf32>,
    return
  }
  func.func @transform_0(%arg0: i32) -> (i32, i32) {
    %c0_i32 = arith.constant 0 : i32
    %c0_i32_0 = arith.constant 0 : i32
    %c0_i32_1 = arith.constant 0 : i32
    return %c0_i32, %c0_i32_0 : i32, i32
  }
  func.func @transform_1(%arg0: i32) -> (i32, i32) {
    %c0_i32 = arith.constant 0 : i32
    %c0_i32_0 = arith.constant 0 : i32
    %c0_i32_1 = arith.constant 0 : i32
    return %c0_i32, %c0_i32_0 : i32, i32
  }
  func.func @transform_2(%arg0: i32) -> (i32, i32) {
    %c0_i32 = arith.constant 0 : i32
    %c0_i32_0 = arith.constant 0 : i32
    %c0_i32_1 = arith.constant 0 : i32
    return %c0_i32, %c0_i32_0 : i32, i32
  }
  func.func @transform_3(%arg0: i32) -> (i32, i32) {
    %c0_i32 = arith.constant 0 : i32
    %c0_i32_0 = arith.constant 0 : i32
    %c0_i32_1 = arith.constant 0 : i32
    return %c0_i32, %c0_i32_0 : i32, i32
  }
  func.func @transform_4(%arg0: i32) -> (i32, i32) {
    %c0_i32 = arith.constant 0 : i32
    %c0_i32_0 = arith.constant 0 : i32
    %c0_i32_1 = arith.constant 0 : i32
    return %c0_i32, %c0_i32_0 : i32, i32
  }
  func.func @transform_5(%arg0: i32) -> (i32, i32) {
    %c0_i32 = arith.constant 0 : i32
    %c0_i32_0 = arith.constant 0 : i32
    %c0_i32_1 = arith.constant 0 : i32
    return %c0_i32, %c0_i32_0 : i32, i32
  }
  func.func @transform_6(%arg0: i32) -> (i32, i32) {
    %c0_i32 = arith.constant 0 : i32
    %c0_i32_0 = arith.constant 0 : i32
    %c0_i32_1 = arith.constant 0 : i32
    return %c0_i32, %c0_i32_0 : i32, i32
  }
  func.func @transform_7(%arg0: i32) -> (i32, i32) {
    %c0_i32 = arith.constant 0 : i32
    %c0_i32_0 = arith.constant 0 : i32
    %c0_i32_1 = arith.constant 0 : i32
    return %c0_i32, %c0_i32_0 : i32, i32
  }
  func.func @transform_8(%arg0: i32) -> (i32, i32) {
    %c0_i32 = arith.constant 0 : i32
    %c0_i32_0 = arith.constant 0 : i32
    %c0_i32_1 = arith.constant 0 : i32
    return %c0_i32, %c0_i32_0 : i32, i32
  }
  func.func @transform_9(%arg0: i32) -> (i32, i32) {
    %c0_i32 = arith.constant 0 : i32
    %c0_i32_0 = arith.constant 0 : i32
    %c0_i32_1 = arith.constant 0 : i32
    return %c0_i32, %c0_i32_0 : i32, i32
  }
  func.func @transform_10(%arg0: i32) -> (i32, i32) {
    %c0_i32 = arith.constant 0 : i32
    %c0_i32_0 = arith.constant 0 : i32
    %c0_i32_1 = arith.constant 0 : i32
    return %c0_i32, %c0_i32_0 : i32, i32
  }
  func.func @transform_11(%arg0: i32) -> (i32, i32) {
    %c0_i32 = arith.constant 0 : i32
    %c0_i32_0 = arith.constant 0 : i32
    %c0_i32_1 = arith.constant 0 : i32
    return %c0_i32, %c0_i32_0 : i32, i32
  }
  func.func @transform_12(%arg0: i32) -> (i32, i32) {
    %c0_i32 = arith.constant 0 : i32
    %c0_i32_0 = arith.constant 0 : i32
    %c0_i32_1 = arith.constant 0 : i32
    return %c0_i32, %c0_i32_0 : i32, i32
  }
  func.func @transform_13(%arg0: i32) -> (i32, i32) {
    %c0_i32 = arith.constant 0 : i32
    %c0_i32_0 = arith.constant 0 : i32
    %c0_i32_1 = arith.constant 0 : i32
    return %c0_i32, %c0_i32_0 : i32, i32
  }
}

</mosaic_0001>

<llo_original>
// kernel: tpu_custom_call.1
$region0: #{tpu_custom_call.1}
  #allocation0 [shape = 'u32[]', space=smem, size = 0x4, offset = 0x4, fixed_abs, tag = 'smem constant byte address 0x4 - core index']
  #allocation1 [shape = 'u32[144,128]{1,0:T(1,128)}', space=vmem, size = 0x12000, scoped, tag = 'internal scratch']
  #allocation2 [shape = 'f32[8,128]{1,0:T(8,128)}', space=vmem, size = 0x1000, scoped, tag = 'scratch operand']
  #allocation3 [shape = 'f32[64,128]{1,0:T(8,128)}', space=vmem, size = 0x8000, scoped, tag = 'scratch operand']
  #allocation4 [shape = 'f32[64,384]{1,0:T(8,128)}', space=vmem, size = 0x18000, scoped, tag = 'scratch operand']
  %s0 = inlined_call_operand.hbm [shape: f32[64,128], index: 0, kind: input, shape index: {}]
  %s1 = inlined_call_operand.hbm [shape: f32[128,384], index: 1, kind: input, shape index: {}]
  %s2 = inlined_call_operand.hbm [shape: f32[128,384], index: 2, kind: input, shape index: {}]
  %s3 = inlined_call_operand.vmem [shape: f32[1,384], index: 3, kind: input, shape index: {}]
  %s4 = inlined_call_operand.vmem [shape: f32[1,384], index: 4, kind: input, shape index: {}]
  %s5 = inlined_call_operand.hbm [shape: f32[128,384], index: 5, kind: input, shape index: {}]
  %s6 = inlined_call_operand.hbm [shape: f32[128,384], index: 6, kind: input, shape index: {}]
  %s7 = inlined_call_operand.vmem [shape: f32[1,384], index: 7, kind: input, shape index: {}]
  %s8 = inlined_call_operand.vmem [shape: f32[1,384], index: 8, kind: input, shape index: {}]
  %s9 = inlined_call_operand.hbm [shape: f32[128,128], index: 9, kind: input, shape index: {}]
  %s10 = inlined_call_operand.vmem [shape: f32[1,128], index: 10, kind: input, shape index: {}]
  %s11 = inlined_call_operand.hbm [shape: f32[128,128], index: 11, kind: input, shape index: {}]
  %s12 = inlined_call_operand.vmem [shape: f32[1,128], index: 12, kind: input, shape index: {}]
  %s13 = inlined_call_operand.hbm [shape: f32[64,128], index: 13, kind: output, shape index: {}]
  %s14 = sld [smem:[#allocation0]]
  $region90: #{tpu_custom_call.1} parent=0
    _
  %s16 = ssub.s32 1, %s14
  %s17 = scalar_select 0, %s16, %s14
  $region1: #{tpu_custom_call.1} parent=0
    #allocation5 [shape = 'u8[32768]{0}', space=vmem, size = 0x8000, scoped, tag = 'input window, operand 0, single buffered']
    #allocation6 [shape = 's32[1]{0}', space=sflag, size = 0x4, scoped, tag = 'scoped memory for tpu_custom_call.1']
    #allocation7 [shape = 's32[1]{0}', space=sflag, size = 0x4, scoped, tag = 'scoped memory for tpu_custom_call.1']
    #allocation8 [shape = 'u8[196608]{0}', space=vmem, size = 0x30000, scoped, tag = 'input window, operand 1, single buffered']
    #allocation9 [shape = 's32[1]{0}', space=sflag, size = 0x4, scoped, tag = 'scoped memory for tpu_custom_call.1']
    #allocation10 [shape = 'u8[196608]{0}', space=vmem, size = 0x30000, scoped, tag = 'input window, operand 2, single buffered']
    #allocation11 [shape = 'u8[196608]{0}', space=vmem, size = 0x30000, scoped, tag = 'input window, operand 5, single buffered']
    #allocation12 [shape = 's32[1]{0}', space=sflag, size = 0x4, scoped, tag = 'scoped memory for tpu_custom_call.1']
    #allocation13 [shape = 'u8[196608]{0}', space=vmem, size = 0x30000, scoped, tag = 'input window, operand 6, single buffered']
    #allocation14 [shape = 'u8[65536]{0}', space=vmem, size = 0x10000, scoped, tag = 'input window, operand 9, single buffered']
    #allocation15 [shape = 's32[1]{0}', space=sflag, size = 0x4, scoped, tag = 'scoped memory for tpu_custom_call.1']
    #allocation16 [shape = 'u8[65536]{0}', space=vmem, size = 0x10000, scoped, tag = 'input window, operand 11, single buffered']
    #allocation17 [shape = 'u8[32768]{0}', space=vmem, size = 0x8000, scoped, tag = 'output window, operand 0, single buffered']
    %18 = vsyncpa [#allocation6], 0
    %19 = vsyncpa [#allocation9], 0
    %20 = vsyncpa [#allocation12], 0
    %21 = vsyncpa [#allocation15], 0
    %22 = vsyncpa [#allocation7], 0
    // Predicated region
    $region2: #{tpu_custom_call.1} parent=1 // pred_check
      _
    $region3: #{tpu_custom_call.1} parent=1 // pred_check_branch
      %24 = sbr.rel (0) target = $region5
    $region4: #{tpu_custom_call.1} parent=1 // pred_region
      %s26 = ssub.s32 1024, 1024
      %27 = vsyncadd [#allocation6], %s26
      %s28 = sshll.u32 [#allocation5], 4
      %s29 = int_to_ptr.vmem [resolvable:$true] %s28
      %34 = dma.hbm_to_vmem [thread:$0]  %s0, 1024, %s29, [#allocation6], 128, 128, 8
    $region5: #{tpu_custom_call.1} parent=1 // pred_fallthru
      _
    // Predicated region
    $region6: #{tpu_custom_call.1} parent=1 // pred_check
      _
    $region7: #{tpu_custom_call.1} parent=1 // pred_check_branch
      %36 = sbr.rel (0) target = $region9
    $region8: #{tpu_custom_call.1} parent=1 // pred_region
      %s38 = ssub.s32 6144, 6144
      %39 = vsyncadd [#allocation9], %s38
      %s40 = sshll.u32 [#allocation8], 4
      %s41 = int_to_ptr.vmem [resolvable:$true] %s40
      %46 = dma.hbm_to_vmem [thread:$0]  %s1, 6144, %s41, [#allocation9], 384, 384, 24
    $region9: #{tpu_custom_call.1} parent=1 // pred_fallthru
      _
    // Predicated region
    $region10: #{tpu_custom_call.1} parent=1 // pred_check
      _
    $region11: #{tpu_custom_call.1} parent=1 // pred_check_branch
      %48 = sbr.rel (0) target = $region13
    $region12: #{tpu_custom_call.1} parent=1 // pred_region
      %s50 = ssub.s32 6144, 6144
      %51 = vsyncadd [#allocation9], %s50
      %s52 = sshll.u32 [#allocation10], 4
      %s53 = int_to_ptr.vmem [resolvable:$true] %s52
      %58 = dma.hbm_to_vmem [thread:$0]  %s2, 6144, %s53, [#allocation9], 384, 384, 24
    $region13: #{tpu_custom_call.1} parent=1 // pred_fallthru
      _
    // Predicated region
    $region14: #{tpu_custom_call.1} parent=1 // pred_check
      _
    $region15: #{tpu_custom_call.1} parent=1 // pred_check_branch
      %60 = sbr.rel (0) target = $region17
    $region16: #{tpu_custom_call.1} parent=1 // pred_region
      _
    $region17: #{tpu_custom_call.1} parent=1 // pred_fallthru
      _
    // Predicated region
    $region18: #{tpu_custom_call.1} parent=1 // pred_check
      _
    $region19: #{tpu_custom_call.1} parent=1 // pred_check_branch
      %62 = sbr.rel (0) target = $region21
    $region20: #{tpu_custom_call.1} parent=1 // pred_region
      _
    $region21: #{tpu_custom_call.1} parent=1 // pred_fallthru
      _
    // Predicated region
    $region22: #{tpu_custom_call.1} parent=1 // pred_check
      _
    $region23: #{tpu_custom_call.1} parent=1 // pred_check_branch
      %64 = sbr.rel (0) target = $region25
    $region24: #{tpu_custom_call.1} parent=1 // pred_region
      %s66 = ssub.s32 6144, 6144
      %67 = vsyncadd [#allocation12], %s66
      %s68 = sshll.u32 [#allocation11], 4
      %s69 = int_to_ptr.vmem [resolvable:$true] %s68
      %74 = dma.hbm_to_vmem [thread:$0]  %s5, 6144, %s69, [#allocation12], 384, 384, 24
    $region25: #{tpu_custom_call.1} parent=1 // pred_fallthru
      _
    // Predicated region
    $region26: #{tpu_custom_call.1} parent=1 // pred_check
      _
    $region27: #{tpu_custom_call.1} parent=1 // pred_check_branch
      %76 = sbr.rel (0) target = $region29
    $region28: #{tpu_custom_call.1} parent=1 // pred_region
      %s78 = ssub.s32 6144, 6144
      %79 = vsyncadd [#allocation12], %s78
      %s80 = sshll.u32 [#allocation13], 4
      %s81 = int_to_ptr.vmem [resolvable:$true] %s80
      %86 = dma.hbm_to_vmem [thread:$0]  %s6, 6144, %s81, [#allocation12], 384, 384, 24
    $region29: #{tpu_custom_call.1} parent=1 // pred_fallthru
      _
    // Predicated region
    $region30: #{tpu_custom_call.1} parent=1 // pred_check
      _
    $region31: #{tpu_custom_call.1} parent=1 // pred_check_branch
      %88 = sbr.rel (0) target = $region33
    $region32: #{tpu_custom_call.1} parent=1 // pred_region
      _
    $region33: #{tpu_custom_call.1} parent=1 // pred_fallthru
      _
    // Predicated region
    $region34: #{tpu_custom_call.1} parent=1 // pred_check
      _
    $region35: #{tpu_custom_call.1} parent=1 // pred_check_branch
      %90 = sbr.rel (0) target = $region37
    $region36: #{tpu_custom_call.1} parent=1 // pred_region
      _
    $region37: #{tpu_custom_call.1} parent=1 // pred_fallthru
      _
    // Predicated region
    $region38: #{tpu_custom_call.1} parent=1 // pred_check
      _
    $region39: #{tpu_custom_call.1} parent=1 // pred_check_branch
      %92 = sbr.rel (0) target = $region41
    $region40: #{tpu_custom_call.1} parent=1 // pred_region
      %s94 = ssub.s32 2048, 2048
      %95 = vsyncadd [#allocation15], %s94
      %s96 = sshll.u32 [#allocation14], 4
      %s97 = int_to_ptr.vmem [resolvable:$true] %s96
      %102 = dma.hbm_to_vmem [thread:$0]  %s9, 2048, %s97, [#allocation15], 128, 128, 8
    $region41: #{tpu_custom_call.1} parent=1 // pred_fallthru
      _
    // Predicated region
    $region42: #{tpu_custom_call.1} parent=1 // pred_check
      _
    $region43: #{tpu_custom_call.1} parent=1 // pred_check_branch
      %104 = sbr.rel (0) target = $region45
    $region44: #{tpu_custom_call.1} parent=1 // pred_region
      _
    $region45: #{tpu_custom_call.1} parent=1 // pred_fallthru
      _
    // Predicated region
    $region46: #{tpu_custom_call.1} parent=1 // pred_check
      _
    $region47: #{tpu_custom_call.1} parent=1 // pred_check_branch
      %106 = sbr.rel (0) target = $region49
    $region48: #{tpu_custom_call.1} parent=1 // pred_region
      %s108 = ssub.s32 2048, 2048
      %109 = vsyncadd [#allocation15], %s108
      %s110 = sshll.u32 [#allocation16], 4
      %s111 = int_to_ptr.vmem [resolvable:$true] %s110
      %116 = dma.hbm_to_vmem [thread:$0]  %s11, 2048, %s111, [#allocation15], 128, 128, 8
    $region49: #{tpu_custom_call.1} parent=1 // pred_fallthru
      _
    // Predicated region
    $region50: #{tpu_custom_call.1} parent=1 // pred_check
      _
    $region51: #{tpu_custom_call.1} parent=1 // pred_check_branch
      %118 = sbr.rel (0) target = $region53
    $region52: #{tpu_custom_call.1} parent=1 // pred_region
      _
    $region53: #{tpu_custom_call.1} parent=1 // pred_fallthru
      _
    // Predicated region
    $region54: #{tpu_custom_call.1} parent=1 // pred_check
      _
    $region55: #{tpu_custom_call.1} parent=1 // pred_check_branch
      %120 = sbr.rel (0) target = $region57
    $region56: #{tpu_custom_call.1} parent=1 // pred_region
      %121 = dma.done [#allocation6], 1024
    $region57: #{tpu_custom_call.1} parent=1 // pred_fallthru
      _
    // Predicated region
    $region58: #{tpu_custom_call.1} parent=1 // pred_check
      _
    $region59: #{tpu_custom_call.1} parent=1 // pred_check_branch
      %123 = sbr.rel (0) target = $region61
    $region60: #{tpu_custom_call.1} parent=1 // pred_region
      %124 = dma.done [#allocation9], 6144
    $region61: #{tpu_custom_call.1} parent=1 // pred_fallthru
      _
    // Predicated region
    $region62: #{tpu_custom_call.1} parent=1 // pred_check
      _
    $region63: #{tpu_custom_call.1} parent=1 // pred_check_branch
      %126 = sbr.rel (0) target = $region65
    $region64: #{tpu_custom_call.1} parent=1 // pred_region
      %127 = dma.done [#allocation9], 6144
    $region65: #{tpu_custom_call.1} parent=1 // pred_fallthru
      _
    // Predicated region
    $region66: #{tpu_custom_call.1} parent=1 // pred_check
      _
    $region67: #{tpu_custom_call.1} parent=1 // pred_check_branch
      %129 = sbr.rel (0) target = $region69
    $region68: #{tpu_custom_call.1} parent=1 // pred_region
      %130 = dma.done [#allocation12], 6144
    $region69: #{tpu_custom_call.1} parent=1 // pred_fallthru
      _
    // Predicated region
    $region70: #{tpu_custom_call.1} parent=1 // pred_check
      _
    $region71: #{tpu_custom_call.1} parent=1 // pred_check_branch
      %132 = sbr.rel (0) target = $region73
    $region72: #{tpu_custom_call.1} parent=1 // pred_region
      %133 = dma.done [#allocation12], 6144
    $region73: #{tpu_custom_call.1} parent=1 // pred_fallthru
      _
    // Predicated region
    $region74: #{tpu_custom_call.1} parent=1 // pred_check
      _
    $region75: #{tpu_custom_call.1} parent=1 // pred_check_branch
      %135 = sbr.rel (0) target = $region77
    $region76: #{tpu_custom_call.1} parent=1 // pred_region
      %136 = dma.done [#allocation15], 2048
    $region77: #{tpu_custom_call.1} parent=1 // pred_fallthru
      _
    // Predicated region
    $region78: #{tpu_custom_call.1} parent=1 // pred_check
      _
    $region79: #{tpu_custom_call.1} parent=1 // pred_check_branch
      %138 = sbr.rel (0) target = $region81
    $region80: #{tpu_custom_call.1} parent=1 // pred_region
      %139 = dma.done [#allocation15], 2048
    $region81: #{tpu_custom_call.1} parent=1 // pred_fallthru
      _
    %v140 = vld [vmem:[#allocation5] sm:$0xff]
    %v141 = vld [vmem:[#allocation5 + $0x8] sm:$0xff]
    %v142 = vld [vmem:[#allocation5 + $0x10] sm:$0xff]
    %v143 = vld [vmem:[#allocation5 + $0x18] sm:$0xff]
    %v144 = vld [vmem:[#allocation5 + $0x20] sm:$0xff]
    %v145 = vld [vmem:[#allocation5 + $0x28] sm:$0xff]
    %v146 = vld [vmem:[#allocation5 + $0x30] sm:$0xff]
    %v147 = vld [vmem:[#allocation5 + $0x38] sm:$0xff]
    %v148 = vld [vmem:[#allocation8] sm:$0xff]
    %v149 = vld [vmem:[#allocation8 + $0x8] sm:$0xff]
    %v150 = vld [vmem:[#allocation8 + $0x10] sm:$0xff]
    %v151 = vld [vmem:[#allocation8 + $0x18] sm:$0xff]
    %v152 = vld [vmem:[#allocation8 + $0x20] sm:$0xff]
    %v153 = vld [vmem:[#allocation8 + $0x28] sm:$0xff]
    %v154 = vld [vmem:[#allocation8 + $0x30] sm:$0xff]
    %v155 = vld [vmem:[#allocation8 + $0x38] sm:$0xff]
    %v156 = vld [vmem:[#allocation8 + $0x40] sm:$0xff]
    %v157 = vld [vmem:[#allocation8 + $0x48] sm:$0xff]
    %v158 = vld [vmem:[#allocation8 + $0x50] sm:$0xff]
    %v159 = vld [vmem:[#allocation8 + $0x58] sm:$0xff]
    %v160 = vld [vmem:[#allocation8 + $0x60] sm:$0xff]
    %v161 = vld [vmem:[#allocation8 + $0x68] sm:$0xff]
    %v162 = vld [vmem:[#allocation8 + $0x70] sm:$0xff]
    %v163 = vld [vmem:[#allocation8 + $0x78] sm:$0xff]
    %v164 = vld [vmem:[#allocation8 + $0x80] sm:$0xff]
    %v165 = vld [vmem:[#allocation8 + $0x88] sm:$0xff]
    %v166 = vld [vmem:[#allocation8 + $0x90] sm:$0xff]
    %v167 = vld [vmem:[#allocation8 + $0x98] sm:$0xff]
    %v168 = vld [vmem:[#allocation8 + $0xa0] sm:$0xff]
    %v169 = vld [vmem:[#allocation8 + $0xa8] sm:$0xff]
    %v170 = vld [vmem:[#allocation8 + $0xb0] sm:$0xff]
    %v171 = vld [vmem:[#allocation8 + $0xb8] sm:$0xff]
    %v172 = vld [vmem:[#allocation8 + $0xc0] sm:$0xff]
    %v173 = vld [vmem:[#allocation8 + $0xc8] sm:$0xff]
    %v174 = vld [vmem:[#allocation8 + $0xd0] sm:$0xff]
    %v175 = vld [vmem:[#allocation8 + $0xd8] sm:$0xff]
    %v176 = vld [vmem:[#allocation8 + $0xe0] sm:$0xff]
    %v177 = vld [vmem:[#allocation8 + $0xe8] sm:$0xff]
    %v178 = vld [vmem:[#allocation8 + $0xf0] sm:$0xff]
    %v179 = vld [vmem:[#allocation8 + $0xf8] sm:$0xff]
    %v180 = vld [vmem:[#allocation8 + $0x100] sm:$0xff]
    %v181 = vld [vmem:[#allocation8 + $0x108] sm:$0xff]
    %v182 = vld [vmem:[#allocation8 + $0x110] sm:$0xff]
    %v183 = vld [vmem:[#allocation8 + $0x118] sm:$0xff]
    %v184 = vld [vmem:[#allocation8 + $0x120] sm:$0xff]
    %v185 = vld [vmem:[#allocation8 + $0x128] sm:$0xff]
    %v186 = vld [vmem:[#allocation8 + $0x130] sm:$0xff]
    %v187 = vld [vmem:[#allocation8 + $0x138] sm:$0xff]
    %v188 = vld [vmem:[#allocation8 + $0x140] sm:$0xff]
    %v189 = vld [vmem:[#allocation8 + $0x148] sm:$0xff]
    %v190 = vld [vmem:[#allocation8 + $0x150] sm:$0xff]
    %v191 = vld [vmem:[#allocation8 + $0x158] sm:$0xff]
    %v192 = vld [vmem:[#allocation8 + $0x160] sm:$0xff]
    %v193 = vld [vmem:[#allocation8 + $0x168] sm:$0xff]
    %v194 = vld [vmem:[#allocation8 + $0x170] sm:$0xff]
    %v195 = vld [vmem:[#allocation8 + $0x178] sm:$0xff]
    %v196 = vld [vmem:[%s3] sm:$0x7]
    %v198 = vlaneseq
    %v199 = vshrl.u32 %v198, 7
    %v200 = vsub.s32 0, %v199
    %v201 = vrot.slane %v196, %v200
    %v202 = vlaneseq
    %v203 = vshrl.u32 %v202, 7
    %v204 = vsub.s32 1, %v203
    %v205 = vrot.slane %v196, %v204
    %v206 = vlaneseq
    %v207 = vshrl.u32 %v206, 7
    %v208 = vsub.s32 2, %v207
    %v209 = vrot.slane %v196, %v208
    %213 = vmatprep.subr.mxu0 %v194
    %214 = vmatpush1.msra.mxu0 %v193
    %215 = vmatprep.subr.mxu0 %v191
    %216 = vmatpush1.msra.mxu0 %v190
    %217 = vmatprep.subr.mxu0 %v188
    %218 = vmatpush1.msra.mxu0 %v187
    %219 = vmatprep.subr.mxu0 %v185
    %220 = vmatpush1.msra.mxu0 %v184
    %221 = vmatprep.subr.mxu0 %v182
    %222 = vmatpush1.msra.mxu0 %v181
    %223 = vmatprep.subr.mxu0 %v179
    %224 = vmatpush1.msra.mxu0 %v178
    %225 = vmatprep.subr.mxu0 %v176
    %226 = vmatpush1.msra.mxu0 %v175
    %227 = vmatprep.subr.mxu0 %v173
    %228 = vmatpush1.msra.mxu0 %v172
    %229 = vmatprep.subr.mxu0 %v170
    %230 = vmatpush1.msra.mxu0 %v169
    %231 = vmatprep.subr.mxu0 %v167
    %232 = vmatpush1.msra.mxu0 %v166
    %233 = vmatprep.subr.mxu0 %v164
    %234 = vmatpush1.msra.mxu0 %v163
    %235 = vmatprep.subr.mxu0 %v161
    %236 = vmatpush1.msra.mxu0 %v160
    %237 = vmatprep.subr.mxu0 %v158
    %238 = vmatpush1.msra.mxu0 %v157
    %239 = vmatprep.subr.mxu0 %v155
    %240 = vmatpush1.msra.mxu0 %v154
    %241 = vmatprep.subr.mxu0 %v152
    %242 = vmatpush1.msra.mxu0 %v151
    %243 = vmatprep.subr.mxu0 %v149
    %244 = vmatpush1.msra.mxu0 %v148
    %245 = vmatprep.subr.mxu0 0.0
    %246 = vmatpush2.msra.mxu0 0.0
    %247 = vmatprep.subr.mxu0 0.0
    %248 = vmatpush2.msra.mxu0 0.0
    %249 = vmatprep.subr.mxu0 0.0
    %250 = vmatpush2.msra.mxu0 0.0
    %251 = vmatprep.subr.mxu0 0.0
    %252 = vmatpush2.msra.mxu0 0.0
    %253 = vmatprep.subr.mxu0 0.0
    %254 = vmatpush2.msra.mxu0 0.0
    %255 = vmatprep.subr.mxu0 0.0
    %256 = vmatpush2.msra.mxu0 0.0
    %257 = vmatprep.subr.mxu0 0.0
    %258 = vmatpush2.msra.mxu0 0.0
    %259 = vmatprep.subr.mxu0 0.0
    %260 = vmatpush2.msra.mxu0 0.0
    %261 = vmatprep.subr.mxu0 0.0
    %262 = vmatpush2.msra.mxu0 0.0
    %263 = vmatprep.subr.mxu0 0.0
    %264 = vmatpush2.msra.mxu0 0.0
    %265 = vmatprep.subr.mxu0 0.0
    %266 = vmatpush2.msra.mxu0 0.0
    %267 = vmatprep.subr.mxu0 0.0
    %268 = vmatpush2.msra.mxu0 0.0
    %269 = vmatprep.subr.mxu0 0.0
    %270 = vmatpush2.msra.mxu0 0.0
    %271 = vmatprep.subr.mxu0 0.0
    %272 = vmatpush2.msra.mxu0 0.0
    %273 = vmatprep.subr.mxu0 0.0
    %274 = vmatpush2.msra.mxu0 0.0
    %275 = vmatprep.subr.mxu0 0.0
    %276 = vmatpush2.msra.mxu0 0.0
    %277 = vmatprep.mubr.f32.mxu0 0.0
    %278 = vmatmul.mubr.f32.gmra.mxu0 %v140
    %v279 = vpop.f32.mrf.mxu0
    %v280 = vadd.f32 %v201, %v279
    %v281 = vpop.f32.mrf.mxu0
    %v282 = vadd.f32 %v205, %v281
    %283 = vmatprep.mubr.f32.mxu0 0.0
    %284 = vmatmul.mubr.f32.gmra.mxu0 %v141
    %v285 = vpop.f32.mrf.mxu0
    %v286 = vadd.f32 %v201, %v285
    %v287 = vpop.f32.mrf.mxu0
    %v288 = vadd.f32 %v205, %v287
    %289 = vmatprep.mubr.f32.mxu0 0.0
    %290 = vmatmul.mubr.f32.gmra.mxu0 %v142
    %v291 = vpop.f32.mrf.mxu0
    %v292 = vadd.f32 %v201, %v291
    %v293 = vpop.f32.mrf.mxu0
    %v294 = vadd.f32 %v205, %v293
    %295 = vmatprep.mubr.f32.mxu0 0.0
    %296 = vmatmul.mubr.f32.gmra.mxu0 %v143
    %v297 = vpop.f32.mrf.mxu0
    %v298 = vadd.f32 %v201, %v297
    %v299 = vpop.f32.mrf.mxu0
    %v300 = vadd.f32 %v205, %v299
    %301 = vmatprep.mubr.f32.mxu0 0.0
    %302 = vmatmul.mubr.f32.gmra.mxu0 %v144
    %v303 = vpop.f32.mrf.mxu0
    %v304 = vadd.f32 %v201, %v303
    %v305 = vpop.f32.mrf.mxu0
    %v306 = vadd.f32 %v205, %v305
    %307 = vmatprep.mubr.f32.mxu0 0.0
    %308 = vmatmul.mubr.f32.gmra.mxu0 %v145
    %v309 = vpop.f32.mrf.mxu0
    %v310 = vadd.f32 %v201, %v309
    %v311 = vpop.f32.mrf.mxu0
    %v312 = vadd.f32 %v205, %v311
    %313 = vmatprep.mubr.f32.mxu0 0.0
    %314 = vmatmul.mubr.f32.gmra.mxu0 %v146
    %v315 = vpop.f32.mrf.mxu0
    %v316 = vadd.f32 %v201, %v315
    %v317 = vpop.f32.mrf.mxu0
    %v318 = vadd.f32 %v205, %v317
    %319 = vmatprep.mubr.f32.mxu0 0.0
    %320 = vmatmul.mubr.f32.gmra.mxu0 %v147
    %v321 = vpop.f32.mrf.mxu0
    %v322 = vadd.f32 %v201, %v321
    %v323 = vpop.f32.mrf.mxu0
    %v324 = vadd.f32 %v205, %v323
    %325 = vdwg.mxu0
    %326 = vmatprep.subr.mxu0 0.0
    %327 = vmatpush1.msra.mxu0 %v195
    %328 = vmatprep.subr.mxu0 0.0
    %329 = vmatpush1.msra.mxu0 %v192
    %330 = vmatprep.subr.mxu0 0.0
    %331 = vmatpush1.msra.mxu0 %v189
    %332 = vmatprep.subr.mxu0 0.0
    %333 = vmatpush1.msra.mxu0 %v186
    %334 = vmatprep.subr.mxu0 0.0
    %335 = vmatpush1.msra.mxu0 %v183
    %336 = vmatprep.subr.mxu0 0.0
    %337 = vmatpush1.msra.mxu0 %v180
    %338 = vmatprep.subr.mxu0 0.0
    %339 = vmatpush1.msra.mxu0 %v177
    %340 = vmatprep.subr.mxu0 0.0
    %341 = vmatpush1.msra.mxu0 %v174
    %342 = vmatprep.subr.mxu0 0.0
    %343 = vmatpush1.msra.mxu0 %v171
    %344 = vmatprep.subr.mxu0 0.0
    %345 = vmatpush1.msra.mxu0 %v168
    %346 = vmatprep.subr.mxu0 0.0
    %347 = vmatpush1.msra.mxu0 %v165
    %348 = vmatprep.subr.mxu0 0.0
    %349 = vmatpush1.msra.mxu0 %v162
    %350 = vmatprep.subr.mxu0 0.0
    %351 = vmatpush1.msra.mxu0 %v159
    %352 = vmatprep.subr.mxu0 0.0
    %353 = vmatpush1.msra.mxu0 %v156
    %354 = vmatprep.subr.mxu0 0.0
    %355 = vmatpush1.msra.mxu0 %v153
    %356 = vmatprep.subr.mxu0 0.0
    %357 = vmatpush1.msra.mxu0 %v150
    %358 = vmatprep.subr.mxu0 0.0
    %359 = vmatpush2.msra.mxu0 0.0
    %360 = vmatprep.subr.mxu0 0.0
    %361 = vmatpush2.msra.mxu0 0.0
    %362 = vmatprep.subr.mxu0 0.0
    %363 = vmatpush2.msra.mxu0 0.0
    %364 = vmatprep.subr.mxu0 0.0
    %365 = vmatpush2.msra.mxu0 0.0
    %366 = vmatprep.subr.mxu0 0.0
    %367 = vmatpush2.msra.mxu0 0.0
    %368 = vmatprep.subr.mxu0 0.0
    %369 = vmatpush2.msra.mxu0 0.0
    %370 = vmatprep.subr.mxu0 0.0
    %371 = vmatpush2.msra.mxu0 0.0
    %372 = vmatprep.subr.mxu0 0.0
    %373 = vmatpush2.msra.mxu0 0.0
    %374 = vmatprep.subr.mxu0 0.0
    %375 = vmatpush2.msra.mxu0 0.0
    %376 = vmatprep.subr.mxu0 0.0
    %377 = vmatpush2.msra.mxu0 0.0
    %378 = vmatprep.subr.mxu0 0.0
    %379 = vmatpush2.msra.mxu0 0.0
    %380 = vmatprep.subr.mxu0 0.0
    %381 = vmatpush2.msra.mxu0 0.0
    %382 = vmatprep.subr.mxu0 0.0
    %383 = vmatpush2.msra.mxu0 0.0
    %384 = vmatprep.subr.mxu0 0.0
    %385 = vmatpush2.msra.mxu0 0.0
    %386 = vmatprep.subr.mxu0 0.0
    %387 = vmatpush2.msra.mxu0 0.0
    %388 = vmatprep.subr.mxu0 0.0
    %389 = vmatpush2.msra.mxu0 0.0
    %390 = vmatprep.mubr.f32.mxu0 0.0
    %391 = vmatmul.mubr.f32.gmra.mxu0 %v140
    %v392 = vpop.f32.mrf.mxu0
    %v393 = vadd.f32 %v209, %v392
    %v394 = vpop.f32.mrf.mxu0
    %395 = vmatprep.mubr.f32.mxu0 0.0
    %396 = vmatmul.mubr.f32.gmra.mxu0 %v141
    %v397 = vpop.f32.mrf.mxu0
    %v398 = vadd.f32 %v209, %v397
    %v399 = vpop.f32.mrf.mxu0
    %400 = vmatprep.mubr.f32.mxu0 0.0
    %401 = vmatmul.mubr.f32.gmra.mxu0 %v142
    %v402 = vpop.f32.mrf.mxu0
    %v403 = vadd.f32 %v209, %v402
    %v404 = vpop.f32.mrf.mxu0
    %405 = vmatprep.mubr.f32.mxu0 0.0
    %406 = vmatmul.mubr.f32.gmra.mxu0 %v143
    %v407 = vpop.f32.mrf.mxu0
    %v408 = vadd.f32 %v209, %v407
    %v409 = vpop.f32.mrf.mxu0
    %410 = vmatprep.mubr.f32.mxu0 0.0
    %411 = vmatmul.mubr.f32.gmra.mxu0 %v144
    %v412 = vpop.f32.mrf.mxu0
    %v413 = vadd.f32 %v209, %v412
    %v414 = vpop.f32.mrf.mxu0
    %415 = vmatprep.mubr.f32.mxu0 0.0
    %416 = vmatmul.mubr.f32.gmra.mxu0 %v145
    %v417 = vpop.f32.mrf.mxu0
    %v418 = vadd.f32 %v209, %v417
    %v419 = vpop.f32.mrf.mxu0
    %420 = vmatprep.mubr.f32.mxu0 0.0
    %421 = vmatmul.mubr.f32.gmra.mxu0 %v146
    %v422 = vpop.f32.mrf.mxu0
    %v423 = vadd.f32 %v209, %v422
    %v424 = vpop.f32.mrf.mxu0
    %425 = vmatprep.mubr.f32.mxu0 0.0
    %426 = vmatmul.mubr.f32.gmra.mxu0 %v147
    %v427 = vpop.f32.mrf.mxu0
    %v428 = vadd.f32 %v209, %v427
    %v429 = vpop.f32.mrf.mxu0
    %430 = vdwg.mxu0
    %431 = vst [vmem:[#allocation4] sm:$0xff] %v280
    %432 = vst [vmem:[#allocation4 + $0x8] sm:$0xff] %v282
    %433 = vst [vmem:[#allocation4 + $0x10] sm:$0xff] %v393
    %434 = vst [vmem:[#allocation4 + $0x18] sm:$0xff] %v286
    %435 = vst [vmem:[#allocation4 + $0x20] sm:$0xff] %v288
    %436 = vst [vmem:[#allocation4 + $0x28] sm:$0xff] %v398
    %437 = vst [vmem:[#allocation4 + $0x30] sm:$0xff] %v292
    %438 = vst [vmem:[#allocation4 + $0x38] sm:$0xff] %v294
    %439 = vst [vmem:[#allocation4 + $0x40] sm:$0xff] %v403
    %440 = vst [vmem:[#allocation4 + $0x48] sm:$0xff] %v298
    %441 = vst [vmem:[#allocation4 + $0x50] sm:$0xff] %v300
    %442 = vst [vmem:[#allocation4 + $0x58] sm:$0xff] %v408
    %443 = vst [vmem:[#allocation4 + $0x60] sm:$0xff] %v304
    %444 = vst [vmem:[#allocation4 + $0x68] sm:$0xff] %v306
    %445 = vst [vmem:[#allocation4 + $0x70] sm:$0xff] %v413
    %446 = vst [vmem:[#allocation4 + $0x78] sm:$0xff] %v310
    %447 = vst [vmem:[#allocation4 + $0x80] sm:$0xff] %v312
    %448 = vst [vmem:[#allocation4 + $0x88] sm:$0xff] %v418
    %449 = vst [vmem:[#allocation4 + $0x90] sm:$0xff] %v316
    %450 = vst [vmem:[#allocation4 + $0x98] sm:$0xff] %v318
    %451 = vst [vmem:[#allocation4 + $0xa0] sm:$0xff] %v423
    %452 = vst [vmem:[#allocation4 + $0xa8] sm:$0xff] %v322
    %453 = vst [vmem:[#allocation4 + $0xb0] sm:$0xff] %v324
    %454 = vst [vmem:[#allocation4 + $0xb8] sm:$0xff] %v428
    %v455 = vld [vmem:[#allocation10] sm:$0xff]
    %v456 = vld [vmem:[#allocation10 + $0x8] sm:$0xff]
    %v457 = vld [vmem:[#allocation10 + $0x10] sm:$0xff]
    %v458 = vld [vmem:[#allocation10 + $0x18] sm:$0xff]
    %v459 = vld [vmem:[#allocation10 + $0x20] sm:$0xff]
    %v460 = vld [vmem:[#allocation10 + $0x28] sm:$0xff]
    %v461 = vld [vmem:[#allocation10 + $0x30] sm:$0xff]
    %v462 = vld [vmem:[#allocation10 + $0x38] sm:$0xff]
    %v463 = vld [vmem:[#allocation10 + $0x40] sm:$0xff]
    %v464 = vld [vmem:[#allocation10 + $0x48] sm:$0xff]
    %v465 = vld [vmem:[#allocation10 + $0x50] sm:$0xff]
    %v466 = vld [vmem:[#allocation10 + $0x58] sm:$0xff]
    %v467 = vld [vmem:[#allocation10 + $0x60] sm:$0xff]
    %v468 = vld [vmem:[#allocation10 + $0x68] sm:$0xff]
    %v469 = vld [vmem:[#allocation10 + $0x70] sm:$0xff]
    %v470 = vld [vmem:[#allocation10 + $0x78] sm:$0xff]
    %v471 = vld [vmem:[#allocation10 + $0x80] sm:$0xff]
    %v472 = vld [vmem:[#allocation10 + $0x88] sm:$0xff]
    %v473 = vld [vmem:[#allocation10 + $0x90] sm:$0xff]
    %v474 = vld [vmem:[#allocation10 + $0x98] sm:$0xff]
    %v475 = vld [vmem:[#allocation10 + $0xa0] sm:$0xff]
    %v476 = vld [vmem:[#allocation10 + $0xa8] sm:$0xff]
    %v477 = vld [vmem:[#allocation10 + $0xb0] sm:$0xff]
    %v478 = vld [vmem:[#allocation10 + $0xb8] sm:$0xff]
    %v479 = vld [vmem:[#allocation10 + $0xc0] sm:$0xff]
    %v480 = vld [vmem:[#allocation10 + $0xc8] sm:$0xff]
    %v481 = vld [vmem:[#allocation10 + $0xd0] sm:$0xff]
    %v482 = vld [vmem:[#allocation10 + $0xd8] sm:$0xff]
    %v483 = vld [vmem:[#allocation10 + $0xe0] sm:$0xff]
    %v484 = vld [vmem:[#allocation10 + $0xe8] sm:$0xff]
    %v485 = vld [vmem:[#allocation10 + $0xf0] sm:$0xff]
    %v486 = vld [vmem:[#allocation10 + $0xf8] sm:$0xff]
    %v487 = vld [vmem:[#allocation10 + $0x100] sm:$0xff]
    %v488 = vld [vmem:[#allocation10 + $0x108] sm:$0xff]
    %v489 = vld [vmem:[#allocation10 + $0x110] sm:$0xff]
    %v490 = vld [vmem:[#allocation10 + $0x118] sm:$0xff]
    %v491 = vld [vmem:[#allocation10 + $0x120] sm:$0xff]
    %v492 = vld [vmem:[#allocation10 + $0x128] sm:$0xff]
    %v493 = vld [vmem:[#allocation10 + $0x130] sm:$0xff]
    %v494 = vld [vmem:[#allocation10 + $0x138] sm:$0xff]
    %v495 = vld [vmem:[#allocation10 + $0x140] sm:$0xff]
    %v496 = vld [vmem:[#allocation10 + $0x148] sm:$0xff]
    %v497 = vld [vmem:[#allocation10 + $0x150] sm:$0xff]
    %v498 = vld [vmem:[#allocation10 + $0x158] sm:$0xff]
    %v499 = vld [vmem:[#allocation10 + $0x160] sm:$0xff]
    %v500 = vld [vmem:[#allocation10 + $0x168] sm:$0xff]
    %v501 = vld [vmem:[#allocation10 + $0x170] sm:$0xff]
    %v502 = vld [vmem:[#allocation10 + $0x178] sm:$0xff]
    %v503 = vld [vmem:[%s4] sm:$0x7]
    %504 = vst [vmem:[#allocation2] sm:$0xff] 0.0
    %s505 = smul.u32 0, 3
    %s506 = smul.addr %s505, 8
    %s507 = scalar_lea.vmem [#allocation4], %s506
    %v508 = vld [vmem:[%s507] sm:$0xff]
    %v509 = vld [vmem:[%s507 + $0x8] sm:$0xff]
    %v510 = vld [vmem:[%s507 + $0x10] sm:$0xff]
    %v511 = vld [vmem:[#allocation2] sm:$0xff]
    %v513 = vlaneseq
    %v514 = vshrl.u32 %v513, 7
    %v515 = vsub.s32 0, %v514
    %v516 = vrot.slane %v503, %v515
    %v517 = vlaneseq
    %v518 = vshrl.u32 %v517, 7
    %v519 = vsub.s32 1, %v518
    %v520 = vrot.slane %v503, %v519
    %v521 = vlaneseq
    %v522 = vshrl.u32 %v521, 7
    %v523 = vsub.s32 2, %v522
    %v524 = vrot.slane %v503, %v523
    %528 = vmatprep.subr.mxu0 %v501
    %529 = vmatpush1.msra.mxu0 %v500
    %530 = vmatprep.subr.mxu0 %v498
    %531 = vmatpush1.msra.mxu0 %v497
    %532 = vmatprep.subr.mxu0 %v495
    %533 = vmatpush1.msra.mxu0 %v494
    %534 = vmatprep.subr.mxu0 %v492
    %535 = vmatpush1.msra.mxu0 %v491
    %536 = vmatprep.subr.mxu0 %v489
    %537 = vmatpush1.msra.mxu0 %v488
    %538 = vmatprep.subr.mxu0 %v486
    %539 = vmatpush1.msra.mxu0 %v485
    %540 = vmatprep.subr.mxu0 %v483
    %541 = vmatpush1.msra.mxu0 %v482
    %542 = vmatprep.subr.mxu0 %v480
    %543 = vmatpush1.msra.mxu0 %v479
    %544 = vmatprep.subr.mxu0 %v477
    %545 = vmatpush1.msra.mxu0 %v476
    %546 = vmatprep.subr.mxu0 %v474
    %547 = vmatpush1.msra.mxu0 %v473
    %548 = vmatprep.subr.mxu0 %v471
    %549 = vmatpush1.msra.mxu0 %v470
    %550 = vmatprep.subr.mxu0 %v468
    %551 = vmatpush1.msra.mxu0 %v467
    %552 = vmatprep.subr.mxu0 %v465
    %553 = vmatpush1.msra.mxu0 %v464
    %554 = vmatprep.subr.mxu0 %v462
    %555 = vmatpush1.msra.mxu0 %v461
    %556 = vmatprep.subr.mxu0 %v459
    %557 = vmatpush1.msra.mxu0 %v458
    %558 = vmatprep.subr.mxu0 %v456
    %559 = vmatpush1.msra.mxu0 %v455
    %560 = vmatprep.subr.mxu0 0.0
    %561 = vmatpush2.msra.mxu0 0.0
    %562 = vmatprep.subr.mxu0 0.0
    %563 = vmatpush2.msra.mxu0 0.0
    %564 = vmatprep.subr.mxu0 0.0
    %565 = vmatpush2.msra.mxu0 0.0
    %566 = vmatprep.subr.mxu0 0.0
    %567 = vmatpush2.msra.mxu0 0.0
    %568 = vmatprep.subr.mxu0 0.0
    %569 = vmatpush2.msra.mxu0 0.0
    %570 = vmatprep.subr.mxu0 0.0
    %571 = vmatpush2.msra.mxu0 0.0
    %572 = vmatprep.subr.mxu0 0.0
    %573 = vmatpush2.msra.mxu0 0.0
    %574 = vmatprep.subr.mxu0 0.0
    %575 = vmatpush2.msra.mxu0 0.0
    %576 = vmatprep.subr.mxu0 0.0
    %577 = vmatpush2.msra.mxu0 0.0
    %578 = vmatprep.subr.mxu0 0.0
    %579 = vmatpush2.msra.mxu0 0.0
    %580 = vmatprep.subr.mxu0 0.0
    %581 = vmatpush2.msra.mxu0 0.0
    %582 = vmatprep.subr.mxu0 0.0
    %583 = vmatpush2.msra.mxu0 0.0
    %584 = vmatprep.subr.mxu0 0.0
    %585 = vmatpush2.msra.mxu0 0.0
    %586 = vmatprep.subr.mxu0 0.0
    %587 = vmatpush2.msra.mxu0 0.0
    %588 = vmatprep.subr.mxu0 0.0
    %589 = vmatpush2.msra.mxu0 0.0
    %590 = vmatprep.subr.mxu0 0.0
    %591 = vmatpush2.msra.mxu0 0.0
    %592 = vmatprep.mubr.f32.mxu0 0.0
    %593 = vmatmul.mubr.f32.gmra.mxu0 %v511
    %v594 = vpop.f32.mrf.mxu0
    %v595 = vadd.f32 %v516, %v594
    %v596 = vpop.f32.mrf.mxu0
    %v597 = vadd.f32 %v520, %v596
    %598 = vdwg.mxu0
    %599 = vmatprep.subr.mxu0 0.0
    %600 = vmatpush1.msra.mxu0 %v502
    %601 = vmatprep.subr.mxu0 0.0
    %602 = vmatpush1.msra.mxu0 %v499
    %603 = vmatprep.subr.mxu0 0.0
    %604 = vmatpush1.msra.mxu0 %v496
    %605 = vmatprep.subr.mxu0 0.0
    %606 = vmatpush1.msra.mxu0 %v493
    %607 = vmatprep.subr.mxu0 0.0
    %608 = vmatpush1.msra.mxu0 %v490
    %609 = vmatprep.subr.mxu0 0.0
    %610 = vmatpush1.msra.mxu0 %v487
    %611 = vmatprep.subr.mxu0 0.0
    %612 = vmatpush1.msra.mxu0 %v484
    %613 = vmatprep.subr.mxu0 0.0
    %614 = vmatpush1.msra.mxu0 %v481
    %615 = vmatprep.subr.mxu0 0.0
    %616 = vmatpush1.msra.mxu0 %v478
    %617 = vmatprep.subr.mxu0 0.0
    %618 = vmatpush1.msra.mxu0 %v475
    %619 = vmatprep.subr.mxu0 0.0
    %620 = vmatpush1.msra.mxu0 %v472
    %621 = vmatprep.subr.mxu0 0.0
    %622 = vmatpush1.msra.mxu0 %v469
    %623 = vmatprep.subr.mxu0 0.0
    %624 = vmatpush1.msra.mxu0 %v466
    %625 = vmatprep.subr.mxu0 0.0
    %626 = vmatpush1.msra.mxu0 %v463
    %627 = vmatprep.subr.mxu0 0.0
    %628 = vmatpush1.msra.mxu0 %v460
    %629 = vmatprep.subr.mxu0 0.0
    %630 = vmatpush1.msra.mxu0 %v457
    %631 = vmatprep.subr.mxu0 0.0
    %632 = vmatpush2.msra.mxu0 0.0
    %633 = vmatprep.subr.mxu0 0.0
    %634 = vmatpush2.msra.mxu0 0.0
    %635 = vmatprep.subr.mxu0 0.0
    %636 = vmatpush2.msra.mxu0 0.0
    %637 = vmatprep.subr.mxu0 0.0
    %638 = vmatpush2.msra.mxu0 0.0
    %639 = vmatprep.subr.mxu0 0.0
    %640 = vmatpush2.msra.mxu0 0.0
    %641 = vmatprep.subr.mxu0 0.0
    %642 = vmatpush2.msra.mxu0 0.0
    %643 = vmatprep.subr.mxu0 0.0
    %644 = vmatpush2.msra.mxu0 0.0
    %645 = vmatprep.subr.mxu0 0.0
    %646 = vmatpush2.msra.mxu0 0.0
    %647 = vmatprep.subr.mxu0 0.0
    %648 = vmatpush2.msra.mxu0 0.0
    %649 = vmatprep.subr.mxu0 0.0
    %650 = vmatpush2.msra.mxu0 0.0
    %651 = vmatprep.subr.mxu0 0.0
    %652 = vmatpush2.msra.mxu0 0.0
    %653 = vmatprep.subr.mxu0 0.0
    %654 = vmatpush2.msra.mxu0 0.0
    %655 = vmatprep.subr.mxu0 0.0
    %656 = vmatpush2.msra.mxu0 0.0
    %657 = vmatprep.subr.mxu0 0.0
    %658 = vmatpush2.msra.mxu0 0.0
    %659 = vmatprep.subr.mxu0 0.0
    %660 = vmatpush2.msra.mxu0 0.0
    %661 = vmatprep.subr.mxu0 0.0
    %662 = vmatpush2.msra.mxu0 0.0
    %663 = vmatprep.mubr.f32.mxu0 0.0
    %664 = vmatmul.mubr.f32.gmra.mxu0 %v511
    %v665 = vpop.f32.mrf.mxu0
    %v666 = vadd.f32 %v524, %v665
    %v667 = vpop.f32.mrf.mxu0
    %668 = vdwg.mxu0
    %v669 = vadd.f32 %v508, %v595
    %v670 = vxor.u32 %v669, 2147483648
    %v671 = vmul.f32 %v670, 1.442695
    %v672 = vpow.pop %v671
    %v673 = vadd.f32 %v672, 1.0
    %v674 = vrcp.pop %v673
    %v675 = vmul.f32 1.0, %v674
    %v676 = vadd.f32 %v509, %v597
    %v677 = vxor.u32 %v676, 2147483648
    %v678 = vmul.f32 %v677, 1.442695
    %v679 = vpow.pop %v678
    %v680 = vadd.f32 %v679, 1.0
    %v681 = vrcp.pop %v680
    %v682 = vmul.f32 1.0, %v681
    %v683 = vmul.f32 %v675, %v666
    %v684 = vadd.f32 %v510, %v683
    %v685 = vtanh.pop %v684
    %v686 = vsub.f32 1.0, %v682
    %v687 = vmul.f32 %v686, %v685
    %v688 = vmul.f32 %v682, %v511
    %v689 = vadd.f32 %v687, %v688
    %690 = vst [vmem:[#allocation2] sm:$0xff] %v689
    %691 = vst [vmem:[#allocation3] sm:$0xff] %v689
    %s692 = smul.u32 1, 3
    %s693 = smul.addr %s692, 8
    %s694 = scalar_lea.vmem [#allocation4], %s693
    %v695 = vld [vmem:[%s694] sm:$0xff]
    %v696 = vld [vmem:[%s694 + $0x8] sm:$0xff]
    %v697 = vld [vmem:[%s694 + $0x10] sm:$0xff]
    %v698 = vld [vmem:[#allocation2] sm:$0xff]
    %699 = vmatprep.subr.mxu0 %v501
    %700 = vmatpush1.msra.mxu0 %v500
    %701 = vmatprep.subr.mxu0 %v498
    %702 = vmatpush1.msra.mxu0 %v497
    %703 = vmatprep.subr.mxu0 %v495
    %704 = vmatpush1.msra.mxu0 %v494
    %705 = vmatprep.subr.mxu0 %v492
    %706 = vmatpush1.msra.mxu0 %v491
    %707 = vmatprep.subr.mxu0 %v489
    %708 = vmatpush1.msra.mxu0 %v488
    %709 = vmatprep.subr.mxu0 %v486
    %710 = vmatpush1.msra.mxu0 %v485
    %711 = vmatprep.subr.mxu0 %v483
    %712 = vmatpush1.msra.mxu0 %v482
    %713 = vmatprep.subr.mxu0 %v480
    %714 = vmatpush1.msra.mxu0 %v479
    %715 = vmatprep.subr.mxu0 %v477
    %716 = vmatpush1.msra.mxu0 %v476
    %717 = vmatprep.subr.mxu0 %v474
    %718 = vmatpush1.msra.mxu0 %v473
    %719 = vmatprep.subr.mxu0 %v471
    %720 = vmatpush1.msra.mxu0 %v470
    %721 = vmatprep.subr.mxu0 %v468
    %722 = vmatpush1.msra.mxu0 %v467
    %723 = vmatprep.subr.mxu0 %v465
    %724 = vmatpush1.msra.mxu0 %v464
    %725 = vmatprep.subr.mxu0 %v462
    %726 = vmatpush1.msra.mxu0 %v461
    %727 = vmatprep.subr.mxu0 %v459
    %728 = vmatpush1.msra.mxu0 %v458
    %729 = vmatprep.subr.mxu0 %v456
    %730 = vmatpush1.msra.mxu0 %v455
    %731 = vmatprep.subr.mxu0 0.0
    %732 = vmatpush2.msra.mxu0 0.0
    %733 = vmatprep.subr.mxu0 0.0
    %734 = vmatpush2.msra.mxu0 0.0
    %735 = vmatprep.subr.mxu0 0.0
    %736 = vmatpush2.msra.mxu0 0.0
    %737 = vmatprep.subr.mxu0 0.0
    %738 = vmatpush2.msra.mxu0 0.0
    %739 = vmatprep.subr.mxu0 0.0
    %740 = vmatpush2.msra.mxu0 0.0
    %741 = vmatprep.subr.mxu0 0.0
    %742 = vmatpush2.msra.mxu0 0.0
    %743 = vmatprep.subr.mxu0 0.0
    %744 = vmatpush2.msra.mxu0 0.0
    %745 = vmatprep.subr.mxu0 0.0
    %746 = vmatpush2.msra.mxu0 0.0
    %747 = vmatprep.subr.mxu0 0.0
    %748 = vmatpush2.msra.mxu0 0.0
    %749 = vmatprep.subr.mxu0 0.0
    %750 = vmatpush2.msra.mxu0 0.0
    %751 = vmatprep.subr.mxu0 0.0
    %752 = vmatpush2.msra.mxu0 0.0
    %753 = vmatprep.subr.mxu0 0.0
    %754 = vmatpush2.msra.mxu0 0.0
    %755 = vmatprep.subr.mxu0 0.0
    %756 = vmatpush2.msra.mxu0 0.0
    %757 = vmatprep.subr.mxu0 0.0
    %758 = vmatpush2.msra.mxu0 0.0
    %759 = vmatprep.subr.mxu0 0.0
    %760 = vmatpush2.msra.mxu0 0.0
    %761 = vmatprep.subr.mxu0 0.0
    %762 = vmatpush2.msra.mxu0 0.0
    %763 = vmatprep.mubr.f32.mxu0 0.0
    %764 = vmatmul.mubr.f32.gmra.mxu0 %v698
    %v765 = vpop.f32.mrf.mxu0
    %v766 = vadd.f32 %v516, %v765
    %v767 = vpop.f32.mrf.mxu0
    %v768 = vadd.f32 %v520, %v767
    %769 = vdwg.mxu0
    %770 = vmatprep.subr.mxu0 0.0
    %771 = vmatpush1.msra.mxu0 %v502
    %772 = vmatprep.subr.mxu0 0.0
    %773 = vmatpush1.msra.mxu0 %v499
    %774 = vmatprep.subr.mxu0 0.0
    %775 = vmatpush1.msra.mxu0 %v496
    %776 = vmatprep.subr.mxu0 0.0
    %777 = vmatpush1.msra.mxu0 %v493
    %778 = vmatprep.subr.mxu0 0.0
    %779 = vmatpush1.msra.mxu0 %v490
    %780 = vmatprep.subr.mxu0 0.0
    %781 = vmatpush1.msra.mxu0 %v487
    %782 = vmatprep.subr.mxu0 0.0
    %783 = vmatpush1.msra.mxu0 %v484
    %784 = vmatprep.subr.mxu0 0.0
    %785 = vmatpush1.msra.mxu0 %v481
    %786 = vmatprep.subr.mxu0 0.0
    %787 = vmatpush1.msra.mxu0 %v478
    %788 = vmatprep.subr.mxu0 0.0
    %789 = vmatpush1.msra.mxu0 %v475
    %790 = vmatprep.subr.mxu0 0.0
    %791 = vmatpush1.msra.mxu0 %v472
    %792 = vmatprep.subr.mxu0 0.0
    %793 = vmatpush1.msra.mxu0 %v469
    %794 = vmatprep.subr.mxu0 0.0
    %795 = vmatpush1.msra.mxu0 %v466
    %796 = vmatprep.subr.mxu0 0.0
    %797 = vmatpush1.msra.mxu0 %v463
    %798 = vmatprep.subr.mxu0 0.0
    %799 = vmatpush1.msra.mxu0 %v460
    %800 = vmatprep.subr.mxu0 0.0
    %801 = vmatpush1.msra.mxu0 %v457
    %802 = vmatprep.subr.mxu0 0.0
    %803 = vmatpush2.msra.mxu0 0.0
    %804 = vmatprep.subr.mxu0 0.0
    %805 = vmatpush2.msra.mxu0 0.0
    %806 = vmatprep.subr.mxu0 0.0
    %807 = vmatpush2.msra.mxu0 0.0
    %808 = vmatprep.subr.mxu0 0.0
    %809 = vmatpush2.msra.mxu0 0.0
    %810 = vmatprep.subr.mxu0 0.0
    %811 = vmatpush2.msra.mxu0 0.0
    %812 = vmatprep.subr.mxu0 0.0
    %813 = vmatpush2.msra.mxu0 0.0
    %814 = vmatprep.subr.mxu0 0.0
    %815 = vmatpush2.msra.mxu0 0.0
    %816 = vmatprep.subr.mxu0 0.0
    %817 = vmatpush2.msra.mxu0 0.0
    %818 = vmatprep.subr.mxu0 0.0
    %819 = vmatpush2.msra.mxu0 0.0
    %820 = vmatprep.subr.mxu0 0.0
    %821 = vmatpush2.msra.mxu0 0.0
    %822 = vmatprep.subr.mxu0 0.0
    %823 = vmatpush2.msra.mxu0 0.0
    %824 = vmatprep.subr.mxu0 0.0
    %825 = vmatpush2.msra.mxu0 0.0
    %826 = vmatprep.subr.mxu0 0.0
    %827 = vmatpush2.msra.mxu0 0.0
    %828 = vmatprep.subr.mxu0 0.0
    %829 = vmatpush2.msra.mxu0 0.0
    %830 = vmatprep.subr.mxu0 0.0
    %831 = vmatpush2.msra.mxu0 0.0
    %832 = vmatprep.subr.mxu0 0.0
    %833 = vmatpush2.msra.mxu0 0.0
    %834 = vmatprep.mubr.f32.mxu0 0.0
    %835 = vmatmul.mubr.f32.gmra.mxu0 %v698
    %v836 = vpop.f32.mrf.mxu0
    %v837 = vadd.f32 %v524, %v836
    %v838 = vpop.f32.mrf.mxu0
    %839 = vdwg.mxu0
    %v840 = vadd.f32 %v695, %v766
    %v841 = vxor.u32 %v840, 2147483648
    %v842 = vmul.f32 %v841, 1.442695
    %v843 = vpow.pop %v842
    %v844 = vadd.f32 %v843, 1.0
    %v845 = vrcp.pop %v844
    %v846 = vmul.f32 1.0, %v845
    %v847 = vadd.f32 %v696, %v768
    %v848 = vxor.u32 %v847, 2147483648
    %v849 = vmul.f32 %v848, 1.442695
    %v850 = vpow.pop %v849
    %v851 = vadd.f32 %v850, 1.0
    %v852 = vrcp.pop %v851
    %v853 = vmul.f32 1.0, %v852
    %v854 = vmul.f32 %v846, %v837
    %v855 = vadd.f32 %v697, %v854
    %v856 = vtanh.pop %v855
    %v857 = vsub.f32 1.0, %v853
    %v858 = vmul.f32 %v857, %v856
    %v859 = vmul.f32 %v853, %v698
    %v860 = vadd.f32 %v858, %v859
    %861 = vst [vmem:[#allocation2] sm:$0xff] %v860
    %s862 = scalar_lea.vmem [#allocation3], 8
    %863 = vst [vmem:[%s862] sm:$0xff] %v860
    %s864 = smul.u32 2, 3
    %s865 = smul.addr %s864, 8
    %s866 = scalar_lea.vmem [#allocation4], %s865
    %v867 = vld [vmem:[%s866] sm:$0xff]
    %v868 = vld [vmem:[%s866 + $0x8] sm:$0xff]
    %v869 = vld [vmem:[%s866 + $0x10] sm:$0xff]
    %v870 = vld [vmem:[#allocation2] sm:$0xff]
    %871 = vmatprep.subr.mxu0 %v501
    %872 = vmatpush1.msra.mxu0 %v500
    %873 = vmatprep.subr.mxu0 %v498
    %874 = vmatpush1.msra.mxu0 %v497
    %875 = vmatprep.subr.mxu0 %v495
    %876 = vmatpush1.msra.mxu0 %v494
    %877 = vmatprep.subr.mxu0 %v492
    %878 = vmatpush1.msra.mxu0 %v491
    %879 = vmatprep.subr.mxu0 %v489
    %880 = vmatpush1.msra.mxu0 %v488
    %881 = vmatprep.subr.mxu0 %v486
    %882 = vmatpush1.msra.mxu0 %v485
    %883 = vmatprep.subr.mxu0 %v483
    %884 = vmatpush1.msra.mxu0 %v482
    %885 = vmatprep.subr.mxu0 %v480
    %886 = vmatpush1.msra.mxu0 %v479
    %887 = vmatprep.subr.mxu0 %v477
    %888 = vmatpush1.msra.mxu0 %v476
    %889 = vmatprep.subr.mxu0 %v474
    %890 = vmatpush1.msra.mxu0 %v473
    %891 = vmatprep.subr.mxu0 %v471
    %892 = vmatpush1.msra.mxu0 %v470
    %893 = vmatprep.subr.mxu0 %v468
    %894 = vmatpush1.msra.mxu0 %v467
    %895 = vmatprep.subr.mxu0 %v465
    %896 = vmatpush1.msra.mxu0 %v464
    %897 = vmatprep.subr.mxu0 %v462
    %898 = vmatpush1.msra.mxu0 %v461
    %899 = vmatprep.subr.mxu0 %v459
    %900 = vmatpush1.msra.mxu0 %v458
    %901 = vmatprep.subr.mxu0 %v456
    %902 = vmatpush1.msra.mxu0 %v455
    %903 = vmatprep.subr.mxu0 0.0
    %904 = vmatpush2.msra.mxu0 0.0
    %905 = vmatprep.subr.mxu0 0.0
    %906 = vmatpush2.msra.mxu0 0.0
    %907 = vmatprep.subr.mxu0 0.0
    %908 = vmatpush2.msra.mxu0 0.0
    %909 = vmatprep.subr.mxu0 0.0
    %910 = vmatpush2.msra.mxu0 0.0
    %911 = vmatprep.subr.mxu0 0.0
    %912 = vmatpush2.msra.mxu0 0.0
    %913 = vmatprep.subr.mxu0 0.0
    %914 = vmatpush2.msra.mxu0 0.0
    %915 = vmatprep.subr.mxu0 0.0
    %916 = vmatpush2.msra.mxu0 0.0
    %917 = vmatprep.subr.mxu0 0.0
    %918 = vmatpush2.msra.mxu0 0.0
    %919 = vmatprep.subr.mxu0 0.0
    %920 = vmatpush2.msra.mxu0 0.0
    %921 = vmatprep.subr.mxu0 0.0
    %922 = vmatpush2.msra.mxu0 0.0
    %923 = vmatprep.subr.mxu0 0.0
    %924 = vmatpush2.msra.mxu0 0.0
    %925 = vmatprep.subr.mxu0 0.0
    %926 = vmatpush2.msra.mxu0 0.0
    %927 = vmatprep.subr.mxu0 0.0
    %928 = vmatpush2.msra.mxu0 0.0
    %929 = vmatprep.subr.mxu0 0.0
    %930 = vmatpush2.msra.mxu0 0.0
    %931 = vmatprep.subr.mxu0 0.0
    %932 = vmatpush2.msra.mxu0 0.0
    %933 = vmatprep.subr.mxu0 0.0
    %934 = vmatpush2.msra.mxu0 0.0
    %935 = vmatprep.mubr.f32.mxu0 0.0
    %936 = vmatmul.mubr.f32.gmra.mxu0 %v870
    %v937 = vpop.f32.mrf.mxu0
    %v938 = vadd.f32 %v516, %v937
    %v939 = vpop.f32.mrf.mxu0
    %v940 = vadd.f32 %v520, %v939
    %941 = vdwg.mxu0
    %942 = vmatprep.subr.mxu0 0.0
    %943 = vmatpush1.msra.mxu0 %v502
    %944 = vmatprep.subr.mxu0 0.0
    %945 = vmatpush1.msra.mxu0 %v499
    %946 = vmatprep.subr.mxu0 0.0
    %947 = vmatpush1.msra.mxu0 %v496
    %948 = vmatprep.subr.mxu0 0.0
    %949 = vmatpush1.msra.mxu0 %v493
    %950 = vmatprep.subr.mxu0 0.0
    %951 = vmatpush1.msra.mxu0 %v490
    %952 = vmatprep.subr.mxu0 0.0
    %953 = vmatpush1.msra.mxu0 %v487
    %954 = vmatprep.subr.mxu0 0.0
    %955 = vmatpush1.msra.mxu0 %v484
    %956 = vmatprep.subr.mxu0 0.0
    %957 = vmatpush1.msra.mxu0 %v481
    %958 = vmatprep.subr.mxu0 0.0
    %959 = vmatpush1.msra.mxu0 %v478
    %960 = vmatprep.subr.mxu0 0.0
    %961 = vmatpush1.msra.mxu0 %v475
    %962 = vmatprep.subr.mxu0 0.0
    %963 = vmatpush1.msra.mxu0 %v472
    %964 = vmatprep.subr.mxu0 0.0
    %965 = vmatpush1.msra.mxu0 %v469
    %966 = vmatprep.subr.mxu0 0.0
    %967 = vmatpush1.msra.mxu0 %v466
    %968 = vmatprep.subr.mxu0 0.0
    %969 = vmatpush1.msra.mxu0 %v463
    %970 = vmatprep.subr.mxu0 0.0
    %971 = vmatpush1.msra.mxu0 %v460
    %972 = vmatprep.subr.mxu0 0.0
    %973 = vmatpush1.msra.mxu0 %v457
    %974 = vmatprep.subr.mxu0 0.0
    %975 = vmatpush2.msra.mxu0 0.0
    %976 = vmatprep.subr.mxu0 0.0
    %977 = vmatpush2.msra.mxu0 0.0
    %978 = vmatprep.subr.mxu0 0.0
    %979 = vmatpush2.msra.mxu0 0.0
    %980 = vmatprep.subr.mxu0 0.0
    %981 = vmatpush2.msra.mxu0 0.0
    %982 = vmatprep.subr.mxu0 0.0
    %983 = vmatpush2.msra.mxu0 0.0
    %984 = vmatprep.subr.mxu0 0.0
    %985 = vmatpush2.msra.mxu0 0.0
    %986 = vmatprep.subr.mxu0 0.0
    %987 = vmatpush2.msra.mxu0 0.0
    %988 = vmatprep.subr.mxu0 0.0
    %989 = vmatpush2.msra.mxu0 0.0
    %990 = vmatprep.subr.mxu0 0.0
    %991 = vmatpush2.msra.mxu0 0.0
    %992 = vmatprep.subr.mxu0 0.0
    %993 = vmatpush2.msra.mxu0 0.0
    %994 = vmatprep.subr.mxu0 0.0
    %995 = vmatpush2.msra.mxu0 0.0
    %996 = vmatprep.subr.mxu0 0.0
    %997 = vmatpush2.msra.mxu0 0.0
    %998 = vmatprep.subr.mxu0 0.0
    %999 = vmatpush2.msra.mxu0 0.0
    %1000 = vmatprep.subr.mxu0 0.0
    %1001 = vmatpush2.msra.mxu0 0.0
    %1002 = vmatprep.subr.mxu0 0.0
    %1003 = vmatpush2.msra.mxu0 0.0
    %1004 = vmatprep.subr.mxu0 0.0
    %1005 = vmatpush2.msra.mxu0 0.0
    %1006 = vmatprep.mubr.f32.mxu0 0.0
    %1007 = vmatmul.mubr.f32.gmra.mxu0 %v870
    %v1008 = vpop.f32.mrf.mxu0
    %v1009 = vadd.f32 %v524, %v1008
    %v1010 = vpop.f32.mrf.mxu0
    %1011 = vdwg.mxu0
    %v1012 = vadd.f32 %v867, %v938
    %v1013 = vxor.u32 %v1012, 2147483648
    %v1014 = vmul.f32 %v1013, 1.442695
    %v1015 = vpow.pop %v1014
    %v1016 = vadd.f32 %v1015, 1.0
    %v1017 = vrcp.pop %v1016
    %v1018 = vmul.f32 1.0, %v1017
    %v1019 = vadd.f32 %v868, %v940
    %v1020 = vxor.u32 %v1019, 2147483648
    %v1021 = vmul.f32 %v1020, 1.442695
    %v1022 = vpow.pop %v1021
    %v1023 = vadd.f32 %v1022, 1.0
    %v1024 = vrcp.pop %v1023
    %v1025 = vmul.f32 1.0, %v1024
    %v1026 = vmul.f32 %v1018, %v1009
    %v1027 = vadd.f32 %v869, %v1026
    %v1028 = vtanh.pop %v1027
    %v1029 = vsub.f32 1.0, %v1025
    %v1030 = vmul.f32 %v1029, %v1028
    %v1031 = vmul.f32 %v1025, %v870
    %v1032 = vadd.f32 %v1030, %v1031
    %1033 = vst [vmem:[#allocation2] sm:$0xff] %v1032
    %s1034 = scalar_lea.vmem [#allocation3], 16
    %1035 = vst [vmem:[%s1034] sm:$0xff] %v1032
    %s1036 = smul.u32 3, 3
    %s1037 = smul.addr %s1036, 8
    %s1038 = scalar_lea.vmem [#allocation4], %s1037
    %v1039 = vld [vmem:[%s1038] sm:$0xff]
    %v1040 = vld [vmem:[%s1038 + $0x8] sm:$0xff]
    %v1041 = vld [vmem:[%s1038 + $0x10] sm:$0xff]
    %v1042 = vld [vmem:[#allocation2] sm:$0xff]
    %1043 = vmatprep.subr.mxu0 %v501
    %1044 = vmatpush1.msra.mxu0 %v500
    %1045 = vmatprep.subr.mxu0 %v498
    %1046 = vmatpush1.msra.mxu0 %v497
    %1047 = vmatprep.subr.mxu0 %v495
    %1048 = vmatpush1.msra.mxu0 %v494
    %1049 = vmatprep.subr.mxu0 %v492
    %1050 = vmatpush1.msra.mxu0 %v491
    %1051 = vmatprep.subr.mxu0 %v489
    %1052 = vmatpush1.msra.mxu0 %v488
    %1053 = vmatprep.subr.mxu0 %v486
    %1054 = vmatpush1.msra.mxu0 %v485
    %1055 = vmatprep.subr.mxu0 %v483
    %1056 = vmatpush1.msra.mxu0 %v482
    %1057 = vmatprep.subr.mxu0 %v480
    %1058 = vmatpush1.msra.mxu0 %v479
    %1059 = vmatprep.subr.mxu0 %v477
    %1060 = vmatpush1.msra.mxu0 %v476
    %1061 = vmatprep.subr.mxu0 %v474
    %1062 = vmatpush1.msra.mxu0 %v473
    %1063 = vmatprep.subr.mxu0 %v471
    %1064 = vmatpush1.msra.mxu0 %v470
    %1065 = vmatprep.subr.mxu0 %v468
    %1066 = vmatpush1.msra.mxu0 %v467
    %1067 = vmatprep.subr.mxu0 %v465
    %1068 = vmatpush1.msra.mxu0 %v464
    %1069 = vmatprep.subr.mxu0 %v462
    %1070 = vmatpush1.msra.mxu0 %v461
    %1071 = vmatprep.subr.mxu0 %v459
    %1072 = vmatpush1.msra.mxu0 %v458
    %1073 = vmatprep.subr.mxu0 %v456
    %1074 = vmatpush1.msra.mxu0 %v455
    %1075 = vmatprep.subr.mxu0 0.0
    %1076 = vmatpush2.msra.mxu0 0.0
    %1077 = vmatprep.subr.mxu0 0.0
    %1078 = vmatpush2.msra.mxu0 0.0
    %1079 = vmatprep.subr.mxu0 0.0
    %1080 = vmatpush2.msra.mxu0 0.0
    %1081 = vmatprep.subr.mxu0 0.0
    %1082 = vmatpush2.msra.mxu0 0.0
    %1083 = vmatprep.subr.mxu0 0.0
    %1084 = vmatpush2.msra.mxu0 0.0
    %1085 = vmatprep.subr.mxu0 0.0
    %1086 = vmatpush2.msra.mxu0 0.0
    %1087 = vmatprep.subr.mxu0 0.0
    %1088 = vmatpush2.msra.mxu0 0.0
    %1089 = vmatprep.subr.mxu0 0.0
    %1090 = vmatpush2.msra.mxu0 0.0
    %1091 = vmatprep.subr.mxu0 0.0
    %1092 = vmatpush2.msra.mxu0 0.0
    %1093 = vmatprep.subr.mxu0 0.0
    %1094 = vmatpush2.msra.mxu0 0.0
    %1095 = vmatprep.subr.mxu0 0.0
    %1096 = vmatpush2.msra.mxu0 0.0
    %1097 = vmatprep.subr.mxu0 0.0
    %1098 = vmatpush2.msra.mxu0 0.0
    %1099 = vmatprep.subr.mxu0 0.0
    %1100 = vmatpush2.msra.mxu0 0.0
    %1101 = vmatprep.subr.mxu0 0.0
    %1102 = vmatpush2.msra.mxu0 0.0
    %1103 = vmatprep.subr.mxu0 0.0
    %1104 = vmatpush2.msra.mxu0 0.0
    %1105 = vmatprep.subr.mxu0 0.0
    %1106 = vmatpush2.msra.mxu0 0.0
    %1107 = vmatprep.mubr.f32.mxu0 0.0
    %1108 = vmatmul.mubr.f32.gmra.mxu0 %v1042
    %v1109 = vpop.f32.mrf.mxu0
    %v1110 = vadd.f32 %v516, %v1109
    %v1111 = vpop.f32.mrf.mxu0
    %v1112 = vadd.f32 %v520, %v1111
    %1113 = vdwg.mxu0
    %1114 = vmatprep.subr.mxu0 0.0
    %1115 = vmatpush1.msra.mxu0 %v502
    %1116 = vmatprep.subr.mxu0 0.0
    %1117 = vmatpush1.msra.mxu0 %v499
    %1118 = vmatprep.subr.mxu0 0.0
    %1119 = vmatpush1.msra.mxu0 %v496
    %1120 = vmatprep.subr.mxu0 0.0
    %1121 = vmatpush1.msra.mxu0 %v493
    %1122 = vmatprep.subr.mxu0 0.0
    %1123 = vmatpush1.msra.mxu0 %v490
    %1124 = vmatprep.subr.mxu0 0.0
    %1125 = vmatpush1.msra.mxu0 %v487
    %1126 = vmatprep.subr.mxu0 0.0
    %1127 = vmatpush1.msra.mxu0 %v484
    %1128 = vmatprep.subr.mxu0 0.0
    %1129 = vmatpush1.msra.mxu0 %v481
    %1130 = vmatprep.subr.mxu0 0.0
    %1131 = vmatpush1.msra.mxu0 %v478
    %1132 = vmatprep.subr.mxu0 0.0
    %1133 = vmatpush1.msra.mxu0 %v475
    %1134 = vmatprep.subr.mxu0 0.0
    %1135 = vmatpush1.msra.mxu0 %v472
    %1136 = vmatprep.subr.mxu0 0.0
    %1137 = vmatpush1.msra.mxu0 %v469
    %1138 = vmatprep.subr.mxu0 0.0
    %1139 = vmatpush1.msra.mxu0 %v466
    %1140 = vmatprep.subr.mxu0 0.0
    %1141 = vmatpush1.msra.mxu0 %v463
    %1142 = vmatprep.subr.mxu0 0.0
    %1143 = vmatpush1.msra.mxu0 %v460
    %1144 = vmatprep.subr.mxu0 0.0
    %1145 = vmatpush1.msra.mxu0 %v457
    %1146 = vmatprep.subr.mxu0 0.0
    %1147 = vmatpush2.msra.mxu0 0.0
    %1148 = vmatprep.subr.mxu0 0.0
    %1149 = vmatpush2.msra.mxu0 0.0
    %1150 = vmatprep.subr.mxu0 0.0
    %1151 = vmatpush2.msra.mxu0 0.0
    %1152 = vmatprep.subr.mxu0 0.0
    %1153 = vmatpush2.msra.mxu0 0.0
    %1154 = vmatprep.subr.mxu0 0.0
    %1155 = vmatpush2.msra.mxu0 0.0
    %1156 = vmatprep.subr.mxu0 0.0
    %1157 = vmatpush2.msra.mxu0 0.0
    %1158 = vmatprep.subr.mxu0 0.0
    %1159 = vmatpush2.msra.mxu0 0.0
    %1160 = vmatprep.subr.mxu0 0.0
    %1161 = vmatpush2.msra.mxu0 0.0
    %1162 = vmatprep.subr.mxu0 0.0
    %1163 = vmatpush2.msra.mxu0 0.0
    %1164 = vmatprep.subr.mxu0 0.0
    %1165 = vmatpush2.msra.mxu0 0.0
    %1166 = vmatprep.subr.mxu0 0.0
    %1167 = vmatpush2.msra.mxu0 0.0
    %1168 = vmatprep.subr.mxu0 0.0
    %1169 = vmatpush2.msra.mxu0 0.0
    %1170 = vmatprep.subr.mxu0 0.0
    %1171 = vmatpush2.msra.mxu0 0.0
    %1172 = vmatprep.subr.mxu0 0.0
    %1173 = vmatpush2.msra.mxu0 0.0
    %1174 = vmatprep.subr.mxu0 0.0
    %1175 = vmatpush2.msra.mxu0 0.0
    %1176 = vmatprep.subr.mxu0 0.0
    %1177 = vmatpush2.msra.mxu0 0.0
    %1178 = vmatprep.mubr.f32.mxu0 0.0
    %1179 = vmatmul.mubr.f32.gmra.mxu0 %v1042
    %v1180 = vpop.f32.mrf.mxu0
    %v1181 = vadd.f32 %v524, %v1180
    %v1182 = vpop.f32.mrf.mxu0
    %1183 = vdwg.mxu0
    %v1184 = vadd.f32 %v1039, %v1110
    %v1185 = vxor.u32 %v1184, 2147483648
    %v1186 = vmul.f32 %v1185, 1.442695
    %v1187 = vpow.pop %v1186
    %v1188 = vadd.f32 %v1187, 1.0
    %v1189 = vrcp.pop %v1188
    %v1190 = vmul.f32 1.0, %v1189
    %v1191 = vadd.f32 %v1040, %v1112
    %v1192 = vxor.u32 %v1191, 2147483648
    %v1193 = vmul.f32 %v1192, 1.442695
    %v1194 = vpow.pop %v1193
    %v1195 = vadd.f32 %v1194, 1.0
    %v1196 = vrcp.pop %v1195
    %v1197 = vmul.f32 1.0, %v1196
    %v1198 = vmul.f32 %v1190, %v1181
    %v1199 = vadd.f32 %v1041, %v1198
    %v1200 = vtanh.pop %v1199
    %v1201 = vsub.f32 1.0, %v1197
    %v1202 = vmul.f32 %v1201, %v1200
    %v1203 = vmul.f32 %v1197, %v1042
    %v1204 = vadd.f32 %v1202, %v1203
    %1205 = vst [vmem:[#allocation2] sm:$0xff] %v1204
    %s1206 = scalar_lea.vmem [#allocation3], 24
    %1207 = vst [vmem:[%s1206] sm:$0xff] %v1204
    %s1208 = smul.u32 4, 3
    %s1209 = smul.addr %s1208, 8
    %s1210 = scalar_lea.vmem [#allocation4], %s1209
    %v1211 = vld [vmem:[%s1210] sm:$0xff]
    %v1212 = vld [vmem:[%s1210 + $0x8] sm:$0xff]
    %v1213 = vld [vmem:[%s1210 + $0x10] sm:$0xff]
    %v1214 = vld [vmem:[#allocation2] sm:$0xff]
    %1215 = vmatprep.subr.mxu0 %v501
    %1216 = vmatpush1.msra.mxu0 %v500
    %1217 = vmatprep.subr.mxu0 %v498
    %1218 = vmatpush1.msra.mxu0 %v497
    %1219 = vmatprep.subr.mxu0 %v495
    %1220 = vmatpush1.msra.mxu0 %v494
    %1221 = vmatprep.subr.mxu0 %v492
    %1222 = vmatpush1.msra.mxu0 %v491
    %1223 = vmatprep.subr.mxu0 %v489
    %1224 = vmatpush1.msra.mxu0 %v488
    %1225 = vmatprep.subr.mxu0 %v486
    %1226 = vmatpush1.msra.mxu0 %v485
    %1227 = vmatprep.subr.mxu0 %v483
    %1228 = vmatpush1.msra.mxu0 %v482
    %1229 = vmatprep.subr.mxu0 %v480
    %1230 = vmatpush1.msra.mxu0 %v479
    %1231 = vmatprep.subr.mxu0 %v477
    %1232 = vmatpush1.msra.mxu0 %v476
    %1233 = vmatprep.subr.mxu0 %v474
    %1234 = vmatpush1.msra.mxu0 %v473
    %1235 = vmatprep.subr.mxu0 %v471
    %1236 = vmatpush1.msra.mxu0 %v470
    %1237 = vmatprep.subr.mxu0 %v468
    %1238 = vmatpush1.msra.mxu0 %v467
    %1239 = vmatprep.subr.mxu0 %v465
    %1240 = vmatpush1.msra.mxu0 %v464
    %1241 = vmatprep.subr.mxu0 %v462
    %1242 = vmatpush1.msra.mxu0 %v461
    %1243 = vmatprep.subr.mxu0 %v459
    %1244 = vmatpush1.msra.mxu0 %v458
    %1245 = vmatprep.subr.mxu0 %v456
    %1246 = vmatpush1.msra.mxu0 %v455
    %1247 = vmatprep.subr.mxu0 0.0
    %1248 = vmatpush2.msra.mxu0 0.0
    %1249 = vmatprep.subr.mxu0 0.0
    %1250 = vmatpush2.msra.mxu0 0.0
    %1251 = vmatprep.subr.mxu0 0.0
    %1252 = vmatpush2.msra.mxu0 0.0
    %1253 = vmatprep.subr.mxu0 0.0
    %1254 = vmatpush2.msra.mxu0 0.0
    %1255 = vmatprep.subr.mxu0 0.0
    %1256 = vmatpush2.msra.mxu0 0.0
    %1257 = vmatprep.subr.mxu0 0.0
    %1258 = vmatpush2.msra.mxu0 0.0
    %1259 = vmatprep.subr.mxu0 0.0
    %1260 = vmatpush2.msra.mxu0 0.0
    %1261 = vmatprep.subr.mxu0 0.0
    %1262 = vmatpush2.msra.mxu0 0.0
    %1263 = vmatprep.subr.mxu0 0.0
    %1264 = vmatpush2.msra.mxu0 0.0
    %1265 = vmatprep.subr.mxu0 0.0
    %1266 = vmatpush2.msra.mxu0 0.0
    %1267 = vmatprep.subr.mxu0 0.0
    %1268 = vmatpush2.msra.mxu0 0.0
    %1269 = vmatprep.subr.mxu0 0.0
    %1270 = vmatpush2.msra.mxu0 0.0
    %1271 = vmatprep.subr.mxu0 0.0
    %1272 = vmatpush2.msra.mxu0 0.0
    %1273 = vmatprep.subr.mxu0 0.0
    %1274 = vmatpush2.msra.mxu0 0.0
    %1275 = vmatprep.subr.mxu0 0.0
    %1276 = vmatpush2.msra.mxu0 0.0
    %1277 = vmatprep.subr.mxu0 0.0
    %1278 = vmatpush2.msra.mxu0 0.0
    %1279 = vmatprep.mubr.f32.mxu0 0.0
    %1280 = vmatmul.mubr.f32.gmra.mxu0 %v1214
    %v1281 = vpop.f32.mrf.mxu0
    %v1282 = vadd.f32 %v516, %v1281
    %v1283 = vpop.f32.mrf.mxu0
    %v1284 = vadd.f32 %v520, %v1283
    %1285 = vdwg.mxu0
    %1286 = vmatprep.subr.mxu0 0.0
    %1287 = vmatpush1.msra.mxu0 %v502
    %1288 = vmatprep.subr.mxu0 0.0
    %1289 = vmatpush1.msra.mxu0 %v499
    %1290 = vmatprep.subr.mxu0 0.0
    %1291 = vmatpush1.msra.mxu0 %v496
    %1292 = vmatprep.subr.mxu0 0.0
    %1293 = vmatpush1.msra.mxu0 %v493
    %1294 = vmatprep.subr.mxu0 0.0
    %1295 = vmatpush1.msra.mxu0 %v490
    %1296 = vmatprep.subr.mxu0 0.0
    %1297 = vmatpush1.msra.mxu0 %v487
    %1298 = vmatprep.subr.mxu0 0.0
    %1299 = vmatpush1.msra.mxu0 %v484
    %1300 = vmatprep.subr.mxu0 0.0
    %1301 = vmatpush1.msra.mxu0 %v481
    %1302 = vmatprep.subr.mxu0 0.0
    %1303 = vmatpush1.msra.mxu0 %v478
    %1304 = vmatprep.subr.mxu0 0.0
    %1305 = vmatpush1.msra.mxu0 %v475
    %1306 = vmatprep.subr.mxu0 0.0
    %1307 = vmatpush1.msra.mxu0 %v472
    %1308 = vmatprep.subr.mxu0 0.0
    %1309 = vmatpush1.msra.mxu0 %v469
    %1310 = vmatprep.subr.mxu0 0.0
    %1311 = vmatpush1.msra.mxu0 %v466
    %1312 = vmatprep.subr.mxu0 0.0
    %1313 = vmatpush1.msra.mxu0 %v463
    %1314 = vmatprep.subr.mxu0 0.0
    %1315 = vmatpush1.msra.mxu0 %v460
    %1316 = vmatprep.subr.mxu0 0.0
    %1317 = vmatpush1.msra.mxu0 %v457
    %1318 = vmatprep.subr.mxu0 0.0
    %1319 = vmatpush2.msra.mxu0 0.0
    %1320 = vmatprep.subr.mxu0 0.0
    %1321 = vmatpush2.msra.mxu0 0.0
    %1322 = vmatprep.subr.mxu0 0.0
    %1323 = vmatpush2.msra.mxu0 0.0
    %1324 = vmatprep.subr.mxu0 0.0
    %1325 = vmatpush2.msra.mxu0 0.0
    %1326 = vmatprep.subr.mxu0 0.0
    %1327 = vmatpush2.msra.mxu0 0.0
    %1328 = vmatprep.subr.mxu0 0.0
    %1329 = vmatpush2.msra.mxu0 0.0
    %1330 = vmatprep.subr.mxu0 0.0
    %1331 = vmatpush2.msra.mxu0 0.0
    %1332 = vmatprep.subr.mxu0 0.0
    %1333 = vmatpush2.msra.mxu0 0.0
    %1334 = vmatprep.subr.mxu0 0.0
    %1335 = vmatpush2.msra.mxu0 0.0
    %1336 = vmatprep.subr.mxu0 0.0
    %1337 = vmatpush2.msra.mxu0 0.0
    %1338 = vmatprep.subr.mxu0 0.0
    %1339 = vmatpush2.msra.mxu0 0.0
    %1340 = vmatprep.subr.mxu0 0.0
    %1341 = vmatpush2.msra.mxu0 0.0
    %1342 = vmatprep.subr.mxu0 0.0
    %1343 = vmatpush2.msra.mxu0 0.0
    %1344 = vmatprep.subr.mxu0 0.0
    %1345 = vmatpush2.msra.mxu0 0.0
    %1346 = vmatprep.subr.mxu0 0.0
    %1347 = vmatpush2.msra.mxu0 0.0
    %1348 = vmatprep.subr.mxu0 0.0
    %1349 = vmatpush2.msra.mxu0 0.0
    %1350 = vmatprep.mubr.f32.mxu0 0.0
    %1351 = vmatmul.mubr.f32.gmra.mxu0 %v1214
    %v1352 = vpop.f32.mrf.mxu0
    %v1353 = vadd.f32 %v524, %v1352
    %v1354 = vpop.f32.mrf.mxu0
    %1355 = vdwg.mxu0
    %v1356 = vadd.f32 %v1211, %v1282
    %v1357 = vxor.u32 %v1356, 2147483648
    %v1358 = vmul.f32 %v1357, 1.442695
    %v1359 = vpow.pop %v1358
    %v1360 = vadd.f32 %v1359, 1.0
    %v1361 = vrcp.pop %v1360
    %v1362 = vmul.f32 1.0, %v1361
    %v1363 = vadd.f32 %v1212, %v1284
    %v1364 = vxor.u32 %v1363, 2147483648
    %v1365 = vmul.f32 %v1364, 1.442695
    %v1366 = vpow.pop %v1365
    %v1367 = vadd.f32 %v1366, 1.0
    %v1368 = vrcp.pop %v1367
    %v1369 = vmul.f32 1.0, %v1368
    %v1370 = vmul.f32 %v1362, %v1353
    %v1371 = vadd.f32 %v1213, %v1370
    %v1372 = vtanh.pop %v1371
    %v1373 = vsub.f32 1.0, %v1369
    %v1374 = vmul.f32 %v1373, %v1372
    %v1375 = vmul.f32 %v1369, %v1214
    %v1376 = vadd.f32 %v1374, %v1375
    %1377 = vst [vmem:[#allocation2] sm:$0xff] %v1376
    %s1378 = scalar_lea.vmem [#allocation3], 32
    %1379 = vst [vmem:[%s1378] sm:$0xff] %v1376
    %s1380 = smul.u32 5, 3
    %s1381 = smul.addr %s1380, 8
    %s1382 = scalar_lea.vmem [#allocation4], %s1381
    %v1383 = vld [vmem:[%s1382] sm:$0xff]
    %v1384 = vld [vmem:[%s1382 + $0x8] sm:$0xff]
    %v1385 = vld [vmem:[%s1382 + $0x10] sm:$0xff]
    %v1386 = vld [vmem:[#allocation2] sm:$0xff]
    %1387 = vmatprep.subr.mxu0 %v501
    %1388 = vmatpush1.msra.mxu0 %v500
    %1389 = vmatprep.subr.mxu0 %v498
    %1390 = vmatpush1.msra.mxu0 %v497
    %1391 = vmatprep.subr.mxu0 %v495
    %1392 = vmatpush1.msra.mxu0 %v494
    %1393 = vmatprep.subr.mxu0 %v492
    %1394 = vmatpush1.msra.mxu0 %v491
    %1395 = vmatprep.subr.mxu0 %v489
    %1396 = vmatpush1.msra.mxu0 %v488
    %1397 = vmatprep.subr.mxu0 %v486
    %1398 = vmatpush1.msra.mxu0 %v485
    %1399 = vmatprep.subr.mxu0 %v483
    %1400 = vmatpush1.msra.mxu0 %v482
    %1401 = vmatprep.subr.mxu0 %v480
    %1402 = vmatpush1.msra.mxu0 %v479
    %1403 = vmatprep.subr.mxu0 %v477
    %1404 = vmatpush1.msra.mxu0 %v476
    %1405 = vmatprep.subr.mxu0 %v474
    %1406 = vmatpush1.msra.mxu0 %v473
    %1407 = vmatprep.subr.mxu0 %v471
    %1408 = vmatpush1.msra.mxu0 %v470
    %1409 = vmatprep.subr.mxu0 %v468
    %1410 = vmatpush1.msra.mxu0 %v467
    %1411 = vmatprep.subr.mxu0 %v465
    %1412 = vmatpush1.msra.mxu0 %v464
    %1413 = vmatprep.subr.mxu0 %v462
    %1414 = vmatpush1.msra.mxu0 %v461
    %1415 = vmatprep.subr.mxu0 %v459
    %1416 = vmatpush1.msra.mxu0 %v458
    %1417 = vmatprep.subr.mxu0 %v456
    %1418 = vmatpush1.msra.mxu0 %v455
    %1419 = vmatprep.subr.mxu0 0.0
    %1420 = vmatpush2.msra.mxu0 0.0
    %1421 = vmatprep.subr.mxu0 0.0
    %1422 = vmatpush2.msra.mxu0 0.0
    %1423 = vmatprep.subr.mxu0 0.0
    %1424 = vmatpush2.msra.mxu0 0.0
    %1425 = vmatprep.subr.mxu0 0.0
    %1426 = vmatpush2.msra.mxu0 0.0
    %1427 = vmatprep.subr.mxu0 0.0
    %1428 = vmatpush2.msra.mxu0 0.0
    %1429 = vmatprep.subr.mxu0 0.0
    %1430 = vmatpush2.msra.mxu0 0.0
    %1431 = vmatprep.subr.mxu0 0.0
    %1432 = vmatpush2.msra.mxu0 0.0
    %1433 = vmatprep.subr.mxu0 0.0
    %1434 = vmatpush2.msra.mxu0 0.0
    %1435 = vmatprep.subr.mxu0 0.0
    %1436 = vmatpush2.msra.mxu0 0.0
    %1437 = vmatprep.subr.mxu0 0.0
    %1438 = vmatpush2.msra.mxu0 0.0
    %1439 = vmatprep.subr.mxu0 0.0
    %1440 = vmatpush2.msra.mxu0 0.0
    %1441 = vmatprep.subr.mxu0 0.0
    %1442 = vmatpush2.msra.mxu0 0.0
    %1443 = vmatprep.subr.mxu0 0.0
    %1444 = vmatpush2.msra.mxu0 0.0
    %1445 = vmatprep.subr.mxu0 0.0
    %1446 = vmatpush2.msra.mxu0 0.0
    %1447 = vmatprep.subr.mxu0 0.0
    %1448 = vmatpush2.msra.mxu0 0.0
    %1449 = vmatprep.subr.mxu0 0.0
    %1450 = vmatpush2.msra.mxu0 0.0
    %1451 = vmatprep.mubr.f32.mxu0 0.0
    %1452 = vmatmul.mubr.f32.gmra.mxu0 %v1386
    %v1453 = vpop.f32.mrf.mxu0
    %v1454 = vadd.f32 %v516, %v1453
    %v1455 = vpop.f32.mrf.mxu0
    %v1456 = vadd.f32 %v520, %v1455
    %1457 = vdwg.mxu0
    %1458 = vmatprep.subr.mxu0 0.0
    %1459 = vmatpush1.msra.mxu0 %v502
    %1460 = vmatprep.subr.mxu0 0.0
    %1461 = vmatpush1.msra.mxu0 %v499
    %1462 = vmatprep.subr.mxu0 0.0
    %1463 = vmatpush1.msra.mxu0 %v496
    %1464 = vmatprep.subr.mxu0 0.0
    %1465 = vmatpush1.msra.mxu0 %v493
    %1466 = vmatprep.subr.mxu0 0.0
    %1467 = vmatpush1.msra.mxu0 %v490
    %1468 = vmatprep.subr.mxu0 0.0
    %1469 = vmatpush1.msra.mxu0 %v487
    %1470 = vmatprep.subr.mxu0 0.0
    %1471 = vmatpush1.msra.mxu0 %v484
    %1472 = vmatprep.subr.mxu0 0.0
    %1473 = vmatpush1.msra.mxu0 %v481
    %1474 = vmatprep.subr.mxu0 0.0
    %1475 = vmatpush1.msra.mxu0 %v478
    %1476 = vmatprep.subr.mxu0 0.0
    %1477 = vmatpush1.msra.mxu0 %v475
    %1478 = vmatprep.subr.mxu0 0.0
    %1479 = vmatpush1.msra.mxu0 %v472
    %1480 = vmatprep.subr.mxu0 0.0
    %1481 = vmatpush1.msra.mxu0 %v469
    %1482 = vmatprep.subr.mxu0 0.0
    %1483 = vmatpush1.msra.mxu0 %v466
    %1484 = vmatprep.subr.mxu0 0.0
    %1485 = vmatpush1.msra.mxu0 %v463
    %1486 = vmatprep.subr.mxu0 0.0
    %1487 = vmatpush1.msra.mxu0 %v460
    %1488 = vmatprep.subr.mxu0 0.0
    %1489 = vmatpush1.msra.mxu0 %v457
    %1490 = vmatprep.subr.mxu0 0.0
    %1491 = vmatpush2.msra.mxu0 0.0
    %1492 = vmatprep.subr.mxu0 0.0
    %1493 = vmatpush2.msra.mxu0 0.0
    %1494 = vmatprep.subr.mxu0 0.0
    %1495 = vmatpush2.msra.mxu0 0.0
    %1496 = vmatprep.subr.mxu0 0.0
    %1497 = vmatpush2.msra.mxu0 0.0
    %1498 = vmatprep.subr.mxu0 0.0
    %1499 = vmatpush2.msra.mxu0 0.0
    %1500 = vmatprep.subr.mxu0 0.0
    %1501 = vmatpush2.msra.mxu0 0.0
    %1502 = vmatprep.subr.mxu0 0.0
    %1503 = vmatpush2.msra.mxu0 0.0
    %1504 = vmatprep.subr.mxu0 0.0
    %1505 = vmatpush2.msra.mxu0 0.0
    %1506 = vmatprep.subr.mxu0 0.0
    %1507 = vmatpush2.msra.mxu0 0.0
    %1508 = vmatprep.subr.mxu0 0.0
    %1509 = vmatpush2.msra.mxu0 0.0
    %1510 = vmatprep.subr.mxu0 0.0
    %1511 = vmatpush2.msra.mxu0 0.0
    %1512 = vmatprep.subr.mxu0 0.0
    %1513 = vmatpush2.msra.mxu0 0.0
    %1514 = vmatprep.subr.mxu0 0.0
    %1515 = vmatpush2.msra.mxu0 0.0
    %1516 = vmatprep.subr.mxu0 0.0
    %1517 = vmatpush2.msra.mxu0 0.0
    %1518 = vmatprep.subr.mxu0 0.0
    %1519 = vmatpush2.msra.mxu0 0.0
    %1520 = vmatprep.subr.mxu0 0.0
    %1521 = vmatpush2.msra.mxu0 0.0
    %1522 = vmatprep.mubr.f32.mxu0 0.0
    %1523 = vmatmul.mubr.f32.gmra.mxu0 %v1386
    %v1524 = vpop.f32.mrf.mxu0
    %v1525 = vadd.f32 %v524, %v1524
    %v1526 = vpop.f32.mrf.mxu0
    %1527 = vdwg.mxu0
    %v1528 = vadd.f32 %v1383, %v1454
    %v1529 = vxor.u32 %v1528, 2147483648
    %v1530 = vmul.f32 %v1529, 1.442695
    %v1531 = vpow.pop %v1530
    %v1532 = vadd.f32 %v1531, 1.0
    %v1533 = vrcp.pop %v1532
    %v1534 = vmul.f32 1.0, %v1533
    %v1535 = vadd.f32 %v1384, %v1456
    %v1536 = vxor.u32 %v1535, 2147483648
    %v1537 = vmul.f32 %v1536, 1.442695
    %v1538 = vpow.pop %v1537
    %v1539 = vadd.f32 %v1538, 1.0
    %v1540 = vrcp.pop %v1539
    %v1541 = vmul.f32 1.0, %v1540
    %v1542 = vmul.f32 %v1534, %v1525
    %v1543 = vadd.f32 %v1385, %v1542
    %v1544 = vtanh.pop %v1543
    %v1545 = vsub.f32 1.0, %v1541
    %v1546 = vmul.f32 %v1545, %v1544
    %v1547 = vmul.f32 %v1541, %v1386
    %v1548 = vadd.f32 %v1546, %v1547
    %1549 = vst [vmem:[#allocation2] sm:$0xff] %v1548
    %s1550 = scalar_lea.vmem [#allocation3], 40
    %1551 = vst [vmem:[%s1550] sm:$0xff] %v1548
    %s1552 = smul.u32 6, 3
    %s1553 = smul.addr %s1552, 8
    %s1554 = scalar_lea.vmem [#allocation4], %s1553
    %v1555 = vld [vmem:[%s1554] sm:$0xff]
    %v1556 = vld [vmem:[%s1554 + $0x8] sm:$0xff]
    %v1557 = vld [vmem:[%s1554 + $0x10] sm:$0xff]
    %v1558 = vld [vmem:[#allocation2] sm:$0xff]
    %1559 = vmatprep.subr.mxu0 %v501
    %1560 = vmatpush1.msra.mxu0 %v500
    %1561 = vmatprep.subr.mxu0 %v498
    %1562 = vmatpush1.msra.mxu0 %v497
    %1563 = vmatprep.subr.mxu0 %v495
    %1564 = vmatpush1.msra.mxu0 %v494
    %1565 = vmatprep.subr.mxu0 %v492
    %1566 = vmatpush1.msra.mxu0 %v491
    %1567 = vmatprep.subr.mxu0 %v489
    %1568 = vmatpush1.msra.mxu0 %v488
    %1569 = vmatprep.subr.mxu0 %v486
    %1570 = vmatpush1.msra.mxu0 %v485
    %1571 = vmatprep.subr.mxu0 %v483
    %1572 = vmatpush1.msra.mxu0 %v482
    %1573 = vmatprep.subr.mxu0 %v480
    %1574 = vmatpush1.msra.mxu0 %v479
    %1575 = vmatprep.subr.mxu0 %v477
    %1576 = vmatpush1.msra.mxu0 %v476
    %1577 = vmatprep.subr.mxu0 %v474
    %1578 = vmatpush1.msra.mxu0 %v473
    %1579 = vmatprep.subr.mxu0 %v471
    %1580 = vmatpush1.msra.mxu0 %v470
    %1581 = vmatprep.subr.mxu0 %v468
    %1582 = vmatpush1.msra.mxu0 %v467
    %1583 = vmatprep.subr.mxu0 %v465
    %1584 = vmatpush1.msra.mxu0 %v464
    %1585 = vmatprep.subr.mxu0 %v462
    %1586 = vmatpush1.msra.mxu0 %v461
    %1587 = vmatprep.subr.mxu0 %v459
    %1588 = vmatpush1.msra.mxu0 %v458
    %1589 = vmatprep.subr.mxu0 %v456
    %1590 = vmatpush1.msra.mxu0 %v455
    %1591 = vmatprep.subr.mxu0 0.0
    %1592 = vmatpush2.msra.mxu0 0.0
    %1593 = vmatprep.subr.mxu0 0.0
    %1594 = vmatpush2.msra.mxu0 0.0
    %1595 = vmatprep.subr.mxu0 0.0
    %1596 = vmatpush2.msra.mxu0 0.0
    %1597 = vmatprep.subr.mxu0 0.0
    %1598 = vmatpush2.msra.mxu0 0.0
    %1599 = vmatprep.subr.mxu0 0.0
    %1600 = vmatpush2.msra.mxu0 0.0
    %1601 = vmatprep.subr.mxu0 0.0
    %1602 = vmatpush2.msra.mxu0 0.0
    %1603 = vmatprep.subr.mxu0 0.0
    %1604 = vmatpush2.msra.mxu0 0.0
    %1605 = vmatprep.subr.mxu0 0.0
    %1606 = vmatpush2.msra.mxu0 0.0
    %1607 = vmatprep.subr.mxu0 0.0
    %1608 = vmatpush2.msra.mxu0 0.0
    %1609 = vmatprep.subr.mxu0 0.0
    %1610 = vmatpush2.msra.mxu0 0.0
    %1611 = vmatprep.subr.mxu0 0.0
    %1612 = vmatpush2.msra.mxu0 0.0
    %1613 = vmatprep.subr.mxu0 0.0
    %1614 = vmatpush2.msra.mxu0 0.0
    %1615 = vmatprep.subr.mxu0 0.0
    %1616 = vmatpush2.msra.mxu0 0.0
    %1617 = vmatprep.subr.mxu0 0.0
    %1618 = vmatpush2.msra.mxu0 0.0
    %1619 = vmatprep.subr.mxu0 0.0
    %1620 = vmatpush2.msra.mxu0 0.0
    %1621 = vmatprep.subr.mxu0 0.0
    %1622 = vmatpush2.msra.mxu0 0.0
    %1623 = vmatprep.mubr.f32.mxu0 0.0
    %1624 = vmatmul.mubr.f32.gmra.mxu0 %v1558
    %v1625 = vpop.f32.mrf.mxu0
    %v1626 = vadd.f32 %v516, %v1625
    %v1627 = vpop.f32.mrf.mxu0
    %v1628 = vadd.f32 %v520, %v1627
    %1629 = vdwg.mxu0
    %1630 = vmatprep.subr.mxu0 0.0
    %1631 = vmatpush1.msra.mxu0 %v502
    %1632 = vmatprep.subr.mxu0 0.0
    %1633 = vmatpush1.msra.mxu0 %v499
    %1634 = vmatprep.subr.mxu0 0.0
    %1635 = vmatpush1.msra.mxu0 %v496
    %1636 = vmatprep.subr.mxu0 0.0
    %1637 = vmatpush1.msra.mxu0 %v493
    %1638 = vmatprep.subr.mxu0 0.0
    %1639 = vmatpush1.msra.mxu0 %v490
    %1640 = vmatprep.subr.mxu0 0.0
    %1641 = vmatpush1.msra.mxu0 %v487
    %1642 = vmatprep.subr.mxu0 0.0
    %1643 = vmatpush1.msra.mxu0 %v484
    %1644 = vmatprep.subr.mxu0 0.0
    %1645 = vmatpush1.msra.mxu0 %v481
    %1646 = vmatprep.subr.mxu0 0.0
    %1647 = vmatpush1.msra.mxu0 %v478
    %1648 = vmatprep.subr.mxu0 0.0
    %1649 = vmatpush1.msra.mxu0 %v475
    %1650 = vmatprep.subr.mxu0 0.0
    %1651 = vmatpush1.msra.mxu0 %v472
    %1652 = vmatprep.subr.mxu0 0.0
    %1653 = vmatpush1.msra.mxu0 %v469
    %1654 = vmatprep.subr.mxu0 0.0
    %1655 = vmatpush1.msra.mxu0 %v466
    %1656 = vmatprep.subr.mxu0 0.0
    %1657 = vmatpush1.msra.mxu0 %v463
    %1658 = vmatprep.subr.mxu0 0.0
    %1659 = vmatpush1.msra.mxu0 %v460
    %1660 = vmatprep.subr.mxu0 0.0
    %1661 = vmatpush1.msra.mxu0 %v457
    %1662 = vmatprep.subr.mxu0 0.0
    %1663 = vmatpush2.msra.mxu0 0.0
    %1664 = vmatprep.subr.mxu0 0.0
    %1665 = vmatpush2.msra.mxu0 0.0
    %1666 = vmatprep.subr.mxu0 0.0
    %1667 = vmatpush2.msra.mxu0 0.0
    %1668 = vmatprep.subr.mxu0 0.0
    %1669 = vmatpush2.msra.mxu0 0.0
    %1670 = vmatprep.subr.mxu0 0.0
    %1671 = vmatpush2.msra.mxu0 0.0
    %1672 = vmatprep.subr.mxu0 0.0
    %1673 = vmatpush2.msra.mxu0 0.0
    %1674 = vmatprep.subr.mxu0 0.0
    %1675 = vmatpush2.msra.mxu0 0.0
    %1676 = vmatprep.subr.mxu0 0.0
    %1677 = vmatpush2.msra.mxu0 0.0
    %1678 = vmatprep.subr.mxu0 0.0
    %1679 = vmatpush2.msra.mxu0 0.0
    %1680 = vmatprep.subr.mxu0 0.0
    %1681 = vmatpush2.msra.mxu0 0.0
    %1682 = vmatprep.subr.mxu0 0.0
    %1683 = vmatpush2.msra.mxu0 0.0
    %1684 = vmatprep.subr.mxu0 0.0
    %1685 = vmatpush2.msra.mxu0 0.0
    %1686 = vmatprep.subr.mxu0 0.0
    %1687 = vmatpush2.msra.mxu0 0.0
    %1688 = vmatprep.subr.mxu0 0.0
    %1689 = vmatpush2.msra.mxu0 0.0
    %1690 = vmatprep.subr.mxu0 0.0
    %1691 = vmatpush2.msra.mxu0 0.0
    %1692 = vmatprep.subr.mxu0 0.0
    %1693 = vmatpush2.msra.mxu0 0.0
    %1694 = vmatprep.mubr.f32.mxu0 0.0
    %1695 = vmatmul.mubr.f32.gmra.mxu0 %v1558
    %v1696 = vpop.f32.mrf.mxu0
    %v1697 = vadd.f32 %v524, %v1696
    %v1698 = vpop.f32.mrf.mxu0
    %1699 = vdwg.mxu0
    %v1700 = vadd.f32 %v1555, %v1626
    %v1701 = vxor.u32 %v1700, 2147483648
    %v1702 = vmul.f32 %v1701, 1.442695
    %v1703 = vpow.pop %v1702
    %v1704 = vadd.f32 %v1703, 1.0
    %v1705 = vrcp.pop %v1704
    %v1706 = vmul.f32 1.0, %v1705
    %v1707 = vadd.f32 %v1556, %v1628
    %v1708 = vxor.u32 %v1707, 2147483648
    %v1709 = vmul.f32 %v1708, 1.442695
    %v1710 = vpow.pop %v1709
    %v1711 = vadd.f32 %v1710, 1.0
    %v1712 = vrcp.pop %v1711
    %v1713 = vmul.f32 1.0, %v1712
    %v1714 = vmul.f32 %v1706, %v1697
    %v1715 = vadd.f32 %v1557, %v1714
    %v1716 = vtanh.pop %v1715
    %v1717 = vsub.f32 1.0, %v1713
    %v1718 = vmul.f32 %v1717, %v1716
    %v1719 = vmul.f32 %v1713, %v1558
    %v1720 = vadd.f32 %v1718, %v1719
    %1721 = vst [vmem:[#allocation2] sm:$0xff] %v1720
    %s1722 = scalar_lea.vmem [#allocation3], 48
    %1723 = vst [vmem:[%s1722] sm:$0xff] %v1720
    %s1724 = smul.u32 7, 3
    %s1725 = smul.addr %s1724, 8
    %s1726 = scalar_lea.vmem [#allocation4], %s1725
    %v1727 = vld [vmem:[%s1726] sm:$0xff]
    %v1728 = vld [vmem:[%s1726 + $0x8] sm:$0xff]
    %v1729 = vld [vmem:[%s1726 + $0x10] sm:$0xff]
    %v1730 = vld [vmem:[#allocation2] sm:$0xff]
    %1731 = vmatprep.subr.mxu0 %v501
    %1732 = vmatpush1.msra.mxu0 %v500
    %1733 = vmatprep.subr.mxu0 %v498
    %1734 = vmatpush1.msra.mxu0 %v497
    %1735 = vmatprep.subr.mxu0 %v495
    %1736 = vmatpush1.msra.mxu0 %v494
    %1737 = vmatprep.subr.mxu0 %v492
    %1738 = vmatpush1.msra.mxu0 %v491
    %1739 = vmatprep.subr.mxu0 %v489
    %1740 = vmatpush1.msra.mxu0 %v488
    %1741 = vmatprep.subr.mxu0 %v486
    %1742 = vmatpush1.msra.mxu0 %v485
    %1743 = vmatprep.subr.mxu0 %v483
    %1744 = vmatpush1.msra.mxu0 %v482
    %1745 = vmatprep.subr.mxu0 %v480
    %1746 = vmatpush1.msra.mxu0 %v479
    %1747 = vmatprep.subr.mxu0 %v477
    %1748 = vmatpush1.msra.mxu0 %v476
    %1749 = vmatprep.subr.mxu0 %v474
    %1750 = vmatpush1.msra.mxu0 %v473
    %1751 = vmatprep.subr.mxu0 %v471
    %1752 = vmatpush1.msra.mxu0 %v470
    %1753 = vmatprep.subr.mxu0 %v468
    %1754 = vmatpush1.msra.mxu0 %v467
    %1755 = vmatprep.subr.mxu0 %v465
    %1756 = vmatpush1.msra.mxu0 %v464
    %1757 = vmatprep.subr.mxu0 %v462
    %1758 = vmatpush1.msra.mxu0 %v461
    %1759 = vmatprep.subr.mxu0 %v459
    %1760 = vmatpush1.msra.mxu0 %v458
    %1761 = vmatprep.subr.mxu0 %v456
    %1762 = vmatpush1.msra.mxu0 %v455
    %1763 = vmatprep.subr.mxu0 0.0
    %1764 = vmatpush2.msra.mxu0 0.0
    %1765 = vmatprep.subr.mxu0 0.0
    %1766 = vmatpush2.msra.mxu0 0.0
    %1767 = vmatprep.subr.mxu0 0.0
    %1768 = vmatpush2.msra.mxu0 0.0
    %1769 = vmatprep.subr.mxu0 0.0
    %1770 = vmatpush2.msra.mxu0 0.0
    %1771 = vmatprep.subr.mxu0 0.0
    %1772 = vmatpush2.msra.mxu0 0.0
    %1773 = vmatprep.subr.mxu0 0.0
    %1774 = vmatpush2.msra.mxu0 0.0
    %1775 = vmatprep.subr.mxu0 0.0
    %1776 = vmatpush2.msra.mxu0 0.0
    %1777 = vmatprep.subr.mxu0 0.0
    %1778 = vmatpush2.msra.mxu0 0.0
    %1779 = vmatprep.subr.mxu0 0.0
    %1780 = vmatpush2.msra.mxu0 0.0
    %1781 = vmatprep.subr.mxu0 0.0
    %1782 = vmatpush2.msra.mxu0 0.0
    %1783 = vmatprep.subr.mxu0 0.0
    %1784 = vmatpush2.msra.mxu0 0.0
    %1785 = vmatprep.subr.mxu0 0.0
    %1786 = vmatpush2.msra.mxu0 0.0
    %1787 = vmatprep.subr.mxu0 0.0
    %1788 = vmatpush2.msra.mxu0 0.0
    %1789 = vmatprep.subr.mxu0 0.0
    %1790 = vmatpush2.msra.mxu0 0.0
    %1791 = vmatprep.subr.mxu0 0.0
    %1792 = vmatpush2.msra.mxu0 0.0
    %1793 = vmatprep.subr.mxu0 0.0
    %1794 = vmatpush2.msra.mxu0 0.0
    %1795 = vmatprep.mubr.f32.mxu0 0.0
    %1796 = vmatmul.mubr.f32.gmra.mxu0 %v1730
    %v1797 = vpop.f32.mrf.mxu0
    %v1798 = vadd.f32 %v516, %v1797
    %v1799 = vpop.f32.mrf.mxu0
    %v1800 = vadd.f32 %v520, %v1799
    %1801 = vdwg.mxu0
    %1802 = vmatprep.subr.mxu0 0.0
    %1803 = vmatpush1.msra.mxu0 %v502
    %1804 = vmatprep.subr.mxu0 0.0
    %1805 = vmatpush1.msra.mxu0 %v499
    %1806 = vmatprep.subr.mxu0 0.0
    %1807 = vmatpush1.msra.mxu0 %v496
    %1808 = vmatprep.subr.mxu0 0.0
    %1809 = vmatpush1.msra.mxu0 %v493
    %1810 = vmatprep.subr.mxu0 0.0
    %1811 = vmatpush1.msra.mxu0 %v490
    %1812 = vmatprep.subr.mxu0 0.0
    %1813 = vmatpush1.msra.mxu0 %v487
    %1814 = vmatprep.subr.mxu0 0.0
    %1815 = vmatpush1.msra.mxu0 %v484
    %1816 = vmatprep.subr.mxu0 0.0
    %1817 = vmatpush1.msra.mxu0 %v481
    %1818 = vmatprep.subr.mxu0 0.0
    %1819 = vmatpush1.msra.mxu0 %v478
    %1820 = vmatprep.subr.mxu0 0.0
    %1821 = vmatpush1.msra.mxu0 %v475
    %1822 = vmatprep.subr.mxu0 0.0
    %1823 = vmatpush1.msra.mxu0 %v472
    %1824 = vmatprep.subr.mxu0 0.0
    %1825 = vmatpush1.msra.mxu0 %v469
    %1826 = vmatprep.subr.mxu0 0.0
    %1827 = vmatpush1.msra.mxu0 %v466
    %1828 = vmatprep.subr.mxu0 0.0
    %1829 = vmatpush1.msra.mxu0 %v463
    %1830 = vmatprep.subr.mxu0 0.0
    %1831 = vmatpush1.msra.mxu0 %v460
    %1832 = vmatprep.subr.mxu0 0.0
    %1833 = vmatpush1.msra.mxu0 %v457
    %1834 = vmatprep.subr.mxu0 0.0
    %1835 = vmatpush2.msra.mxu0 0.0
    %1836 = vmatprep.subr.mxu0 0.0
    %1837 = vmatpush2.msra.mxu0 0.0
    %1838 = vmatprep.subr.mxu0 0.0
    %1839 = vmatpush2.msra.mxu0 0.0
    %1840 = vmatprep.subr.mxu0 0.0
    %1841 = vmatpush2.msra.mxu0 0.0
    %1842 = vmatprep.subr.mxu0 0.0
    %1843 = vmatpush2.msra.mxu0 0.0
    %1844 = vmatprep.subr.mxu0 0.0
    %1845 = vmatpush2.msra.mxu0 0.0
    %1846 = vmatprep.subr.mxu0 0.0
    %1847 = vmatpush2.msra.mxu0 0.0
    %1848 = vmatprep.subr.mxu0 0.0
    %1849 = vmatpush2.msra.mxu0 0.0
    %1850 = vmatprep.subr.mxu0 0.0
    %1851 = vmatpush2.msra.mxu0 0.0
    %1852 = vmatprep.subr.mxu0 0.0
    %1853 = vmatpush2.msra.mxu0 0.0
    %1854 = vmatprep.subr.mxu0 0.0
    %1855 = vmatpush2.msra.mxu0 0.0
    %1856 = vmatprep.subr.mxu0 0.0
    %1857 = vmatpush2.msra.mxu0 0.0
    %1858 = vmatprep.subr.mxu0 0.0
    %1859 = vmatpush2.msra.mxu0 0.0
    %1860 = vmatprep.subr.mxu0 0.0
    %1861 = vmatpush2.msra.mxu0 0.0
    %1862 = vmatprep.subr.mxu0 0.0
    %1863 = vmatpush2.msra.mxu0 0.0
    %1864 = vmatprep.subr.mxu0 0.0
    %1865 = vmatpush2.msra.mxu0 0.0
    %1866 = vmatprep.mubr.f32.mxu0 0.0
    %1867 = vmatmul.mubr.f32.gmra.mxu0 %v1730
    %v1868 = vpop.f32.mrf.mxu0
    %v1869 = vadd.f32 %v524, %v1868
    %v1870 = vpop.f32.mrf.mxu0
    %1871 = vdwg.mxu0
    %v1872 = vadd.f32 %v1727, %v1798
    %v1873 = vxor.u32 %v1872, 2147483648
    %v1874 = vmul.f32 %v1873, 1.442695
    %v1875 = vpow.pop %v1874
    %v1876 = vadd.f32 %v1875, 1.0
    %v1877 = vrcp.pop %v1876
    %v1878 = vmul.f32 1.0, %v1877
    %v1879 = vadd.f32 %v1728, %v1800
    %v1880 = vxor.u32 %v1879, 2147483648
    %v1881 = vmul.f32 %v1880, 1.442695
    %v1882 = vpow.pop %v1881
    %v1883 = vadd.f32 %v1882, 1.0
    %v1884 = vrcp.pop %v1883
    %v1885 = vmul.f32 1.0, %v1884
    %v1886 = vmul.f32 %v1878, %v1869
    %v1887 = vadd.f32 %v1729, %v1886
    %v1888 = vtanh.pop %v1887
    %v1889 = vsub.f32 1.0, %v1885
    %v1890 = vmul.f32 %v1889, %v1888
    %v1891 = vmul.f32 %v1885, %v1730
    %v1892 = vadd.f32 %v1890, %v1891
    %1893 = vst [vmem:[#allocation2] sm:$0xff] %v1892
    %s1894 = scalar_lea.vmem [#allocation3], 56
    %1895 = vst [vmem:[%s1894] sm:$0xff] %v1892
    %v1896 = vld [vmem:[#allocation3] sm:$0xff]
    %v1897 = vld [vmem:[#allocation3 + $0x8] sm:$0xff]
    %v1898 = vld [vmem:[#allocation3 + $0x10] sm:$0xff]
    %v1899 = vld [vmem:[#allocation3 + $0x18] sm:$0xff]
    %v1900 = vld [vmem:[#allocation3 + $0x20] sm:$0xff]
    %v1901 = vld [vmem:[#allocation3 + $0x28] sm:$0xff]
    %v1902 = vld [vmem:[#allocation3 + $0x30] sm:$0xff]
    %v1903 = vld [vmem:[#allocation3 + $0x38] sm:$0xff]
    %v1904 = vld [vmem:[#allocation11] sm:$0xff]
    %v1905 = vld [vmem:[#allocation11 + $0x8] sm:$0xff]
    %v1906 = vld [vmem:[#allocation11 + $0x10] sm:$0xff]
    %v1907 = vld [vmem:[#allocation11 + $0x18] sm:$0xff]
    %v1908 = vld [vmem:[#allocation11 + $0x20] sm:$0xff]
    %v1909 = vld [vmem:[#allocation11 + $0x28] sm:$0xff]
    %v1910 = vld [vmem:[#allocation11 + $0x30] sm:$0xff]
    %v1911 = vld [vmem:[#allocation11 + $0x38] sm:$0xff]
    %v1912 = vld [vmem:[#allocation11 + $0x40] sm:$0xff]
    %v1913 = vld [vmem:[#allocation11 + $0x48] sm:$0xff]
    %v1914 = vld [vmem:[#allocation11 + $0x50] sm:$0xff]
    %v1915 = vld [vmem:[#allocation11 + $0x58] sm:$0xff]
    %v1916 = vld [vmem:[#allocation11 + $0x60] sm:$0xff]
    %v1917 = vld [vmem:[#allocation11 + $0x68] sm:$0xff]
    %v1918 = vld [vmem:[#allocation11 + $0x70] sm:$0xff]
    %v1919 = vld [vmem:[#allocation11 + $0x78] sm:$0xff]
    %v1920 = vld [vmem:[#allocation11 + $0x80] sm:$0xff]
    %v1921 = vld [vmem:[#allocation11 + $0x88] sm:$0xff]
    %v1922 = vld [vmem:[#allocation11 + $0x90] sm:$0xff]
    %v1923 = vld [vmem:[#allocation11 + $0x98] sm:$0xff]
    %v1924 = vld [vmem:[#allocation11 + $0xa0] sm:$0xff]
    %v1925 = vld [vmem:[#allocation11 + $0xa8] sm:$0xff]
    %v1926 = vld [vmem:[#allocation11 + $0xb0] sm:$0xff]
    %v1927 = vld [vmem:[#allocation11 + $0xb8] sm:$0xff]
    %v1928 = vld [vmem:[#allocation11 + $0xc0] sm:$0xff]
    %v1929 = vld [vmem:[#allocation11 + $0xc8] sm:$0xff]
    %v1930 = vld [vmem:[#allocation11 + $0xd0] sm:$0xff]
    %v1931 = vld [vmem:[#allocation11 + $0xd8] sm:$0xff]
    %v1932 = vld [vmem:[#allocation11 + $0xe0] sm:$0xff]
    %v1933 = vld [vmem:[#allocation11 + $0xe8] sm:$0xff]
    %v1934 = vld [vmem:[#allocation11 + $0xf0] sm:$0xff]
    %v1935 = vld [vmem:[#allocation11 + $0xf8] sm:$0xff]
    %v1936 = vld [vmem:[#allocation11 + $0x100] sm:$0xff]
    %v1937 = vld [vmem:[#allocation11 + $0x108] sm:$0xff]
    %v1938 = vld [vmem:[#allocation11 + $0x110] sm:$0xff]
    %v1939 = vld [vmem:[#allocation11 + $0x118] sm:$0xff]
    %v1940 = vld [vmem:[#allocation11 + $0x120] sm:$0xff]
    %v1941 = vld [vmem:[#allocation11 + $0x128] sm:$0xff]
    %v1942 = vld [vmem:[#allocation11 + $0x130] sm:$0xff]
    %v1943 = vld [vmem:[#allocation11 + $0x138] sm:$0xff]
    %v1944 = vld [vmem:[#allocation11 + $0x140] sm:$0xff]
    %v1945 = vld [vmem:[#allocation11 + $0x148] sm:$0xff]
    %v1946 = vld [vmem:[#allocation11 + $0x150] sm:$0xff]
    %v1947 = vld [vmem:[#allocation11 + $0x158] sm:$0xff]
    %v1948 = vld [vmem:[#allocation11 + $0x160] sm:$0xff]
    %v1949 = vld [vmem:[#allocation11 + $0x168] sm:$0xff]
    %v1950 = vld [vmem:[#allocation11 + $0x170] sm:$0xff]
    %v1951 = vld [vmem:[#allocation11 + $0x178] sm:$0xff]
    %v1952 = vld [vmem:[%s7] sm:$0x7]
    %v1954 = vlaneseq
    %v1955 = vshrl.u32 %v1954, 7
    %v1956 = vsub.s32 0, %v1955
    %v1957 = vrot.slane %v1952, %v1956
    %v1958 = vlaneseq
    %v1959 = vshrl.u32 %v1958, 7
    %v1960 = vsub.s32 1, %v1959
    %v1961 = vrot.slane %v1952, %v1960
    %v1962 = vlaneseq
    %v1963 = vshrl.u32 %v1962, 7
    %v1964 = vsub.s32 2, %v1963
    %v1965 = vrot.slane %v1952, %v1964
    %1969 = vmatprep.subr.mxu0 %v1950
    %1970 = vmatpush1.msra.mxu0 %v1949
    %1971 = vmatprep.subr.mxu0 %v1947
    %1972 = vmatpush1.msra.mxu0 %v1946
    %1973 = vmatprep.subr.mxu0 %v1944
    %1974 = vmatpush1.msra.mxu0 %v1943
    %1975 = vmatprep.subr.mxu0 %v1941
    %1976 = vmatpush1.msra.mxu0 %v1940
    %1977 = vmatprep.subr.mxu0 %v1938
    %1978 = vmatpush1.msra.mxu0 %v1937
    %1979 = vmatprep.subr.mxu0 %v1935
    %1980 = vmatpush1.msra.mxu0 %v1934
    %1981 = vmatprep.subr.mxu0 %v1932
    %1982 = vmatpush1.msra.mxu0 %v1931
    %1983 = vmatprep.subr.mxu0 %v1929
    %1984 = vmatpush1.msra.mxu0 %v1928
    %1985 = vmatprep.subr.mxu0 %v1926
    %1986 = vmatpush1.msra.mxu0 %v1925
    %1987 = vmatprep.subr.mxu0 %v1923
    %1988 = vmatpush1.msra.mxu0 %v1922
    %1989 = vmatprep.subr.mxu0 %v1920
    %1990 = vmatpush1.msra.mxu0 %v1919
    %1991 = vmatprep.subr.mxu0 %v1917
    %1992 = vmatpush1.msra.mxu0 %v1916
    %1993 = vmatprep.subr.mxu0 %v1914
    %1994 = vmatpush1.msra.mxu0 %v1913
    %1995 = vmatprep.subr.mxu0 %v1911
    %1996 = vmatpush1.msra.mxu0 %v1910
    %1997 = vmatprep.subr.mxu0 %v1908
    %1998 = vmatpush1.msra.mxu0 %v1907
    %1999 = vmatprep.subr.mxu0 %v1905
    %2000 = vmatpush1.msra.mxu0 %v1904
    %2001 = vmatprep.subr.mxu0 0.0
    %2002 = vmatpush2.msra.mxu0 0.0
    %2003 = vmatprep.subr.mxu0 0.0
    %2004 = vmatpush2.msra.mxu0 0.0
    %2005 = vmatprep.subr.mxu0 0.0
    %2006 = vmatpush2.msra.mxu0 0.0
    %2007 = vmatprep.subr.mxu0 0.0
    %2008 = vmatpush2.msra.mxu0 0.0
    %2009 = vmatprep.subr.mxu0 0.0
    %2010 = vmatpush2.msra.mxu0 0.0
    %2011 = vmatprep.subr.mxu0 0.0
    %2012 = vmatpush2.msra.mxu0 0.0
    %2013 = vmatprep.subr.mxu0 0.0
    %2014 = vmatpush2.msra.mxu0 0.0
    %2015 = vmatprep.subr.mxu0 0.0
    %2016 = vmatpush2.msra.mxu0 0.0
    %2017 = vmatprep.subr.mxu0 0.0
    %2018 = vmatpush2.msra.mxu0 0.0
    %2019 = vmatprep.subr.mxu0 0.0
    %2020 = vmatpush2.msra.mxu0 0.0
    %2021 = vmatprep.subr.mxu0 0.0
    %2022 = vmatpush2.msra.mxu0 0.0
    %2023 = vmatprep.subr.mxu0 0.0
    %2024 = vmatpush2.msra.mxu0 0.0
    %2025 = vmatprep.subr.mxu0 0.0
    %2026 = vmatpush2.msra.mxu0 0.0
    %2027 = vmatprep.subr.mxu0 0.0
    %2028 = vmatpush2.msra.mxu0 0.0
    %2029 = vmatprep.subr.mxu0 0.0
    %2030 = vmatpush2.msra.mxu0 0.0
    %2031 = vmatprep.subr.mxu0 0.0
    %2032 = vmatpush2.msra.mxu0 0.0
    %2033 = vmatprep.mubr.f32.mxu0 0.0
    %2034 = vmatmul.mubr.f32.gmra.mxu0 %v1896
    %v2035 = vpop.f32.mrf.mxu0
    %v2036 = vadd.f32 %v1957, %v2035
    %v2037 = vpop.f32.mrf.mxu0
    %v2038 = vadd.f32 %v1961, %v2037
    %2039 = vmatprep.mubr.f32.mxu0 0.0
    %2040 = vmatmul.mubr.f32.gmra.mxu0 %v1897
    %v2041 = vpop.f32.mrf.mxu0
    %v2042 = vadd.f32 %v1957, %v2041
    %v2043 = vpop.f32.mrf.mxu0
    %v2044 = vadd.f32 %v1961, %v2043
    %2045 = vmatprep.mubr.f32.mxu0 0.0
    %2046 = vmatmul.mubr.f32.gmra.mxu0 %v1898
    %v2047 = vpop.f32.mrf.mxu0
    %v2048 = vadd.f32 %v1957, %v2047
    %v2049 = vpop.f32.mrf.mxu0
    %v2050 = vadd.f32 %v1961, %v2049
    %2051 = vmatprep.mubr.f32.mxu0 0.0
    %2052 = vmatmul.mubr.f32.gmra.mxu0 %v1899
    %v2053 = vpop.f32.mrf.mxu0
    %v2054 = vadd.f32 %v1957, %v2053
    %v2055 = vpop.f32.mrf.mxu0
    %v2056 = vadd.f32 %v1961, %v2055
    %2057 = vmatprep.mubr.f32.mxu0 0.0
    %2058 = vmatmul.mubr.f32.gmra.mxu0 %v1900
    %v2059 = vpop.f32.mrf.mxu0
    %v2060 = vadd.f32 %v1957, %v2059
    %v2061 = vpop.f32.mrf.mxu0
    %v2062 = vadd.f32 %v1961, %v2061
    %2063 = vmatprep.mubr.f32.mxu0 0.0
    %2064 = vmatmul.mubr.f32.gmra.mxu0 %v1901
    %v2065 = vpop.f32.mrf.mxu0
    %v2066 = vadd.f32 %v1957, %v2065
    %v2067 = vpop.f32.mrf.mxu0
    %v2068 = vadd.f32 %v1961, %v2067
    %2069 = vmatprep.mubr.f32.mxu0 0.0
    %2070 = vmatmul.mubr.f32.gmra.mxu0 %v1902
    %v2071 = vpop.f32.mrf.mxu0
    %v2072 = vadd.f32 %v1957, %v2071
    %v2073 = vpop.f32.mrf.mxu0
    %v2074 = vadd.f32 %v1961, %v2073
    %2075 = vmatprep.mubr.f32.mxu0 0.0
    %2076 = vmatmul.mubr.f32.gmra.mxu0 %v1903
    %v2077 = vpop.f32.mrf.mxu0
    %v2078 = vadd.f32 %v1957, %v2077
    %v2079 = vpop.f32.mrf.mxu0
    %v2080 = vadd.f32 %v1961, %v2079
    %2081 = vdwg.mxu0
    %2082 = vmatprep.subr.mxu0 0.0
    %2083 = vmatpush1.msra.mxu0 %v1951
    %2084 = vmatprep.subr.mxu0 0.0
    %2085 = vmatpush1.msra.mxu0 %v1948
    %2086 = vmatprep.subr.mxu0 0.0
    %2087 = vmatpush1.msra.mxu0 %v1945
    %2088 = vmatprep.subr.mxu0 0.0
    %2089 = vmatpush1.msra.mxu0 %v1942
    %2090 = vmatprep.subr.mxu0 0.0
    %2091 = vmatpush1.msra.mxu0 %v1939
    %2092 = vmatprep.subr.mxu0 0.0
    %2093 = vmatpush1.msra.mxu0 %v1936
    %2094 = vmatprep.subr.mxu0 0.0
    %2095 = vmatpush1.msra.mxu0 %v1933
    %2096 = vmatprep.subr.mxu0 0.0
    %2097 = vmatpush1.msra.mxu0 %v1930
    %2098 = vmatprep.subr.mxu0 0.0
    %2099 = vmatpush1.msra.mxu0 %v1927
    %2100 = vmatprep.subr.mxu0 0.0
    %2101 = vmatpush1.msra.mxu0 %v1924
    %2102 = vmatprep.subr.mxu0 0.0
    %2103 = vmatpush1.msra.mxu0 %v1921
    %2104 = vmatprep.subr.mxu0 0.0
    %2105 = vmatpush1.msra.mxu0 %v1918
    %2106 = vmatprep.subr.mxu0 0.0
    %2107 = vmatpush1.msra.mxu0 %v1915
    %2108 = vmatprep.subr.mxu0 0.0
    %2109 = vmatpush1.msra.mxu0 %v1912
    %2110 = vmatprep.subr.mxu0 0.0
    %2111 = vmatpush1.msra.mxu0 %v1909
    %2112 = vmatprep.subr.mxu0 0.0
    %2113 = vmatpush1.msra.mxu0 %v1906
    %2114 = vmatprep.subr.mxu0 0.0
    %2115 = vmatpush2.msra.mxu0 0.0
    %2116 = vmatprep.subr.mxu0 0.0
    %2117 = vmatpush2.msra.mxu0 0.0
    %2118 = vmatprep.subr.mxu0 0.0
    %2119 = vmatpush2.msra.mxu0 0.0
    %2120 = vmatprep.subr.mxu0 0.0
    %2121 = vmatpush2.msra.mxu0 0.0
    %2122 = vmatprep.subr.mxu0 0.0
    %2123 = vmatpush2.msra.mxu0 0.0
    %2124 = vmatprep.subr.mxu0 0.0
    %2125 = vmatpush2.msra.mxu0 0.0
    %2126 = vmatprep.subr.mxu0 0.0
    %2127 = vmatpush2.msra.mxu0 0.0
    %2128 = vmatprep.subr.mxu0 0.0
    %2129 = vmatpush2.msra.mxu0 0.0
    %2130 = vmatprep.subr.mxu0 0.0
    %2131 = vmatpush2.msra.mxu0 0.0
    %2132 = vmatprep.subr.mxu0 0.0
    %2133 = vmatpush2.msra.mxu0 0.0
    %2134 = vmatprep.subr.mxu0 0.0
    %2135 = vmatpush2.msra.mxu0 0.0
    %2136 = vmatprep.subr.mxu0 0.0
    %2137 = vmatpush2.msra.mxu0 0.0
    %2138 = vmatprep.subr.mxu0 0.0
    %2139 = vmatpush2.msra.mxu0 0.0
    %2140 = vmatprep.subr.mxu0 0.0
    %2141 = vmatpush2.msra.mxu0 0.0
    %2142 = vmatprep.subr.mxu0 0.0
    %2143 = vmatpush2.msra.mxu0 0.0
    %2144 = vmatprep.subr.mxu0 0.0
    %2145 = vmatpush2.msra.mxu0 0.0
    %2146 = vmatprep.mubr.f32.mxu0 0.0
    %2147 = vmatmul.mubr.f32.gmra.mxu0 %v1896
    %v2148 = vpop.f32.mrf.mxu0
    %v2149 = vadd.f32 %v1965, %v2148
    %v2150 = vpop.f32.mrf.mxu0
    %2151 = vmatprep.mubr.f32.mxu0 0.0
    %2152 = vmatmul.mubr.f32.gmra.mxu0 %v1897
    %v2153 = vpop.f32.mrf.mxu0
    %v2154 = vadd.f32 %v1965, %v2153
    %v2155 = vpop.f32.mrf.mxu0
    %2156 = vmatprep.mubr.f32.mxu0 0.0
    %2157 = vmatmul.mubr.f32.gmra.mxu0 %v1898
    %v2158 = vpop.f32.mrf.mxu0
    %v2159 = vadd.f32 %v1965, %v2158
    %v2160 = vpop.f32.mrf.mxu0
    %2161 = vmatprep.mubr.f32.mxu0 0.0
    %2162 = vmatmul.mubr.f32.gmra.mxu0 %v1899
    %v2163 = vpop.f32.mrf.mxu0
    %v2164 = vadd.f32 %v1965, %v2163
    %v2165 = vpop.f32.mrf.mxu0
    %2166 = vmatprep.mubr.f32.mxu0 0.0
    %2167 = vmatmul.mubr.f32.gmra.mxu0 %v1900
    %v2168 = vpop.f32.mrf.mxu0
    %v2169 = vadd.f32 %v1965, %v2168
    %v2170 = vpop.f32.mrf.mxu0
    %2171 = vmatprep.mubr.f32.mxu0 0.0
    %2172 = vmatmul.mubr.f32.gmra.mxu0 %v1901
    %v2173 = vpop.f32.mrf.mxu0
    %v2174 = vadd.f32 %v1965, %v2173
    %v2175 = vpop.f32.mrf.mxu0
    %2176 = vmatprep.mubr.f32.mxu0 0.0
    %2177 = vmatmul.mubr.f32.gmra.mxu0 %v1902
    %v2178 = vpop.f32.mrf.mxu0
    %v2179 = vadd.f32 %v1965, %v2178
    %v2180 = vpop.f32.mrf.mxu0
    %2181 = vmatprep.mubr.f32.mxu0 0.0
    %2182 = vmatmul.mubr.f32.gmra.mxu0 %v1903
    %v2183 = vpop.f32.mrf.mxu0
    %v2184 = vadd.f32 %v1965, %v2183
    %v2185 = vpop.f32.mrf.mxu0
    %2186 = vdwg.mxu0
    %2187 = vst [vmem:[#allocation4] sm:$0xff] %v2036
    %2188 = vst [vmem:[#allocation4 + $0x8] sm:$0xff] %v2038
    %2189 = vst [vmem:[#allocation4 + $0x10] sm:$0xff] %v2149
    %2190 = vst [vmem:[#allocation4 + $0x18] sm:$0xff] %v2042
    %2191 = vst [vmem:[#allocation4 + $0x20] sm:$0xff] %v2044
    %2192 = vst [vmem:[#allocation4 + $0x28] sm:$0xff] %v2154
    %2193 = vst [vmem:[#allocation4 + $0x30] sm:$0xff] %v2048
    %2194 = vst [vmem:[#allocation4 + $0x38] sm:$0xff] %v2050
    %2195 = vst [vmem:[#allocation4 + $0x40] sm:$0xff] %v2159
    %2196 = vst [vmem:[#allocation4 + $0x48] sm:$0xff] %v2054
    %2197 = vst [vmem:[#allocation4 + $0x50] sm:$0xff] %v2056
    %2198 = vst [vmem:[#allocation4 + $0x58] sm:$0xff] %v2164
    %2199 = vst [vmem:[#allocation4 + $0x60] sm:$0xff] %v2060
    %2200 = vst [vmem:[#allocation4 + $0x68] sm:$0xff] %v2062
    %2201 = vst [vmem:[#allocation4 + $0x70] sm:$0xff] %v2169
    %2202 = vst [vmem:[#allocation4 + $0x78] sm:$0xff] %v2066
    %2203 = vst [vmem:[#allocation4 + $0x80] sm:$0xff] %v2068
    %2204 = vst [vmem:[#allocation4 + $0x88] sm:$0xff] %v2174
    %2205 = vst [vmem:[#allocation4 + $0x90] sm:$0xff] %v2072
    %2206 = vst [vmem:[#allocation4 + $0x98] sm:$0xff] %v2074
    %2207 = vst [vmem:[#allocation4 + $0xa0] sm:$0xff] %v2179
    %2208 = vst [vmem:[#allocation4 + $0xa8] sm:$0xff] %v2078
    %2209 = vst [vmem:[#allocation4 + $0xb0] sm:$0xff] %v2080
    %2210 = vst [vmem:[#allocation4 + $0xb8] sm:$0xff] %v2184
    %v2211 = vld [vmem:[#allocation13] sm:$0xff]
    %v2212 = vld [vmem:[#allocation13 + $0x8] sm:$0xff]
    %v2213 = vld [vmem:[#allocation13 + $0x10] sm:$0xff]
    %v2214 = vld [vmem:[#allocation13 + $0x18] sm:$0xff]
    %v2215 = vld [vmem:[#allocation13 + $0x20] sm:$0xff]
    %v2216 = vld [vmem:[#allocation13 + $0x28] sm:$0xff]
    %v2217 = vld [vmem:[#allocation13 + $0x30] sm:$0xff]
    %v2218 = vld [vmem:[#allocation13 + $0x38] sm:$0xff]
    %v2219 = vld [vmem:[#allocation13 + $0x40] sm:$0xff]
    %v2220 = vld [vmem:[#allocation13 + $0x48] sm:$0xff]
    %v2221 = vld [vmem:[#allocation13 + $0x50] sm:$0xff]
    %v2222 = vld [vmem:[#allocation13 + $0x58] sm:$0xff]
    %v2223 = vld [vmem:[#allocation13 + $0x60] sm:$0xff]
    %v2224 = vld [vmem:[#allocation13 + $0x68] sm:$0xff]
    %v2225 = vld [vmem:[#allocation13 + $0x70] sm:$0xff]
    %v2226 = vld [vmem:[#allocation13 + $0x78] sm:$0xff]
    %v2227 = vld [vmem:[#allocation13 + $0x80] sm:$0xff]
    %v2228 = vld [vmem:[#allocation13 + $0x88] sm:$0xff]
    %v2229 = vld [vmem:[#allocation13 + $0x90] sm:$0xff]
    %v2230 = vld [vmem:[#allocation13 + $0x98] sm:$0xff]
    %v2231 = vld [vmem:[#allocation13 + $0xa0] sm:$0xff]
    %v2232 = vld [vmem:[#allocation13 + $0xa8] sm:$0xff]
    %v2233 = vld [vmem:[#allocation13 + $0xb0] sm:$0xff]
    %v2234 = vld [vmem:[#allocation13 + $0xb8] sm:$0xff]
    %v2235 = vld [vmem:[#allocation13 + $0xc0] sm:$0xff]
    %v2236 = vld [vmem:[#allocation13 + $0xc8] sm:$0xff]
    %v2237 = vld [vmem:[#allocation13 + $0xd0] sm:$0xff]
    %v2238 = vld [vmem:[#allocation13 + $0xd8] sm:$0xff]
    %v2239 = vld [vmem:[#allocation13 + $0xe0] sm:$0xff]
    %v2240 = vld [vmem:[#allocation13 + $0xe8] sm:$0xff]
    %v2241 = vld [vmem:[#allocation13 + $0xf0] sm:$0xff]
    %v2242 = vld [vmem:[#allocation13 + $0xf8] sm:$0xff]
    %v2243 = vld [vmem:[#allocation13 + $0x100] sm:$0xff]
    %v2244 = vld [vmem:[#allocation13 + $0x108] sm:$0xff]
    %v2245 = vld [vmem:[#allocation13 + $0x110] sm:$0xff]
    %v2246 = vld [vmem:[#allocation13 + $0x118] sm:$0xff]
    %v2247 = vld [vmem:[#allocation13 + $0x120] sm:$0xff]
    %v2248 = vld [vmem:[#allocation13 + $0x128] sm:$0xff]
    %v2249 = vld [vmem:[#allocation13 + $0x130] sm:$0xff]
    %v2250 = vld [vmem:[#allocation13 + $0x138] sm:$0xff]
    %v2251 = vld [vmem:[#allocation13 + $0x140] sm:$0xff]
    %v2252 = vld [vmem:[#allocation13 + $0x148] sm:$0xff]
    %v2253 = vld [vmem:[#allocation13 + $0x150] sm:$0xff]
    %v2254 = vld [vmem:[#allocation13 + $0x158] sm:$0xff]
    %v2255 = vld [vmem:[#allocation13 + $0x160] sm:$0xff]
    %v2256 = vld [vmem:[#allocation13 + $0x168] sm:$0xff]
    %v2257 = vld [vmem:[#allocation13 + $0x170] sm:$0xff]
    %v2258 = vld [vmem:[#allocation13 + $0x178] sm:$0xff]
    %v2259 = vld [vmem:[%s8] sm:$0x7]
    %2260 = vst [vmem:[#allocation2] sm:$0xff] 0.0
    %v2261 = vld [vmem:[%s507] sm:$0xff]
    %v2262 = vld [vmem:[%s507 + $0x8] sm:$0xff]
    %v2263 = vld [vmem:[%s507 + $0x10] sm:$0xff]
    %v2264 = vld [vmem:[#allocation2] sm:$0xff]
    %v2266 = vlaneseq
    %v2267 = vshrl.u32 %v2266, 7
    %v2268 = vsub.s32 0, %v2267
    %v2269 = vrot.slane %v2259, %v2268
    %v2270 = vlaneseq
    %v2271 = vshrl.u32 %v2270, 7
    %v2272 = vsub.s32 1, %v2271
    %v2273 = vrot.slane %v2259, %v2272
    %v2274 = vlaneseq
    %v2275 = vshrl.u32 %v2274, 7
    %v2276 = vsub.s32 2, %v2275
    %v2277 = vrot.slane %v2259, %v2276
    %2281 = vmatprep.subr.mxu0 %v2257
    %2282 = vmatpush1.msra.mxu0 %v2256
    %2283 = vmatprep.subr.mxu0 %v2254
    %2284 = vmatpush1.msra.mxu0 %v2253
    %2285 = vmatprep.subr.mxu0 %v2251
    %2286 = vmatpush1.msra.mxu0 %v2250
    %2287 = vmatprep.subr.mxu0 %v2248
    %2288 = vmatpush1.msra.mxu0 %v2247
    %2289 = vmatprep.subr.mxu0 %v2245
    %2290 = vmatpush1.msra.mxu0 %v2244
    %2291 = vmatprep.subr.mxu0 %v2242
    %2292 = vmatpush1.msra.mxu0 %v2241
    %2293 = vmatprep.subr.mxu0 %v2239
    %2294 = vmatpush1.msra.mxu0 %v2238
    %2295 = vmatprep.subr.mxu0 %v2236
    %2296 = vmatpush1.msra.mxu0 %v2235
    %2297 = vmatprep.subr.mxu0 %v2233
    %2298 = vmatpush1.msra.mxu0 %v2232
    %2299 = vmatprep.subr.mxu0 %v2230
    %2300 = vmatpush1.msra.mxu0 %v2229
    %2301 = vmatprep.subr.mxu0 %v2227
    %2302 = vmatpush1.msra.mxu0 %v2226
    %2303 = vmatprep.subr.mxu0 %v2224
    %2304 = vmatpush1.msra.mxu0 %v2223
    %2305 = vmatprep.subr.mxu0 %v2221
    %2306 = vmatpush1.msra.mxu0 %v2220
    %2307 = vmatprep.subr.mxu0 %v2218
    %2308 = vmatpush1.msra.mxu0 %v2217
    %2309 = vmatprep.subr.mxu0 %v2215
    %2310 = vmatpush1.msra.mxu0 %v2214
    %2311 = vmatprep.subr.mxu0 %v2212
    %2312 = vmatpush1.msra.mxu0 %v2211
    %2313 = vmatprep.subr.mxu0 0.0
    %2314 = vmatpush2.msra.mxu0 0.0
    %2315 = vmatprep.subr.mxu0 0.0
    %2316 = vmatpush2.msra.mxu0 0.0
    %2317 = vmatprep.subr.mxu0 0.0
    %2318 = vmatpush2.msra.mxu0 0.0
    %2319 = vmatprep.subr.mxu0 0.0
    %2320 = vmatpush2.msra.mxu0 0.0
    %2321 = vmatprep.subr.mxu0 0.0
    %2322 = vmatpush2.msra.mxu0 0.0
    %2323 = vmatprep.subr.mxu0 0.0
    %2324 = vmatpush2.msra.mxu0 0.0
    %2325 = vmatprep.subr.mxu0 0.0
    %2326 = vmatpush2.msra.mxu0 0.0
    %2327 = vmatprep.subr.mxu0 0.0
    %2328 = vmatpush2.msra.mxu0 0.0
    %2329 = vmatprep.subr.mxu0 0.0
    %2330 = vmatpush2.msra.mxu0 0.0
    %2331 = vmatprep.subr.mxu0 0.0
    %2332 = vmatpush2.msra.mxu0 0.0
    %2333 = vmatprep.subr.mxu0 0.0
    %2334 = vmatpush2.msra.mxu0 0.0
    %2335 = vmatprep.subr.mxu0 0.0
    %2336 = vmatpush2.msra.mxu0 0.0
    %2337 = vmatprep.subr.mxu0 0.0
    %2338 = vmatpush2.msra.mxu0 0.0
    %2339 = vmatprep.subr.mxu0 0.0
    %2340 = vmatpush2.msra.mxu0 0.0
    %2341 = vmatprep.subr.mxu0 0.0
    %2342 = vmatpush2.msra.mxu0 0.0
    %2343 = vmatprep.subr.mxu0 0.0
    %2344 = vmatpush2.msra.mxu0 0.0
    %2345 = vmatprep.mubr.f32.mxu0 0.0
    %2346 = vmatmul.mubr.f32.gmra.mxu0 %v2264
    %v2347 = vpop.f32.mrf.mxu0
    %v2348 = vadd.f32 %v2269, %v2347
    %v2349 = vpop.f32.mrf.mxu0
    %v2350 = vadd.f32 %v2273, %v2349
    %2351 = vdwg.mxu0
    %2352 = vmatprep.subr.mxu0 0.0
    %2353 = vmatpush1.msra.mxu0 %v2258
    %2354 = vmatprep.subr.mxu0 0.0
    %2355 = vmatpush1.msra.mxu0 %v2255
    %2356 = vmatprep.subr.mxu0 0.0
    %2357 = vmatpush1.msra.mxu0 %v2252
    %2358 = vmatprep.subr.mxu0 0.0
    %2359 = vmatpush1.msra.mxu0 %v2249
    %2360 = vmatprep.subr.mxu0 0.0
    %2361 = vmatpush1.msra.mxu0 %v2246
    %2362 = vmatprep.subr.mxu0 0.0
    %2363 = vmatpush1.msra.mxu0 %v2243
    %2364 = vmatprep.subr.mxu0 0.0
    %2365 = vmatpush1.msra.mxu0 %v2240
    %2366 = vmatprep.subr.mxu0 0.0
    %2367 = vmatpush1.msra.mxu0 %v2237
    %2368 = vmatprep.subr.mxu0 0.0
    %2369 = vmatpush1.msra.mxu0 %v2234
    %2370 = vmatprep.subr.mxu0 0.0
    %2371 = vmatpush1.msra.mxu0 %v2231
    %2372 = vmatprep.subr.mxu0 0.0
    %2373 = vmatpush1.msra.mxu0 %v2228
    %2374 = vmatprep.subr.mxu0 0.0
    %2375 = vmatpush1.msra.mxu0 %v2225
    %2376 = vmatprep.subr.mxu0 0.0
    %2377 = vmatpush1.msra.mxu0 %v2222
    %2378 = vmatprep.subr.mxu0 0.0
    %2379 = vmatpush1.msra.mxu0 %v2219
    %2380 = vmatprep.subr.mxu0 0.0
    %2381 = vmatpush1.msra.mxu0 %v2216
    %2382 = vmatprep.subr.mxu0 0.0
    %2383 = vmatpush1.msra.mxu0 %v2213
    %2384 = vmatprep.subr.mxu0 0.0
    %2385 = vmatpush2.msra.mxu0 0.0
    %2386 = vmatprep.subr.mxu0 0.0
    %2387 = vmatpush2.msra.mxu0 0.0
    %2388 = vmatprep.subr.mxu0 0.0
    %2389 = vmatpush2.msra.mxu0 0.0
    %2390 = vmatprep.subr.mxu0 0.0
    %2391 = vmatpush2.msra.mxu0 0.0
    %2392 = vmatprep.subr.mxu0 0.0
    %2393 = vmatpush2.msra.mxu0 0.0
    %2394 = vmatprep.subr.mxu0 0.0
    %2395 = vmatpush2.msra.mxu0 0.0
    %2396 = vmatprep.subr.mxu0 0.0
    %2397 = vmatpush2.msra.mxu0 0.0
    %2398 = vmatprep.subr.mxu0 0.0
    %2399 = vmatpush2.msra.mxu0 0.0
    %2400 = vmatprep.subr.mxu0 0.0
    %2401 = vmatpush2.msra.mxu0 0.0
    %2402 = vmatprep.subr.mxu0 0.0
    %2403 = vmatpush2.msra.mxu0 0.0
    %2404 = vmatprep.subr.mxu0 0.0
    %2405 = vmatpush2.msra.mxu0 0.0
    %2406 = vmatprep.subr.mxu0 0.0
    %2407 = vmatpush2.msra.mxu0 0.0
    %2408 = vmatprep.subr.mxu0 0.0
    %2409 = vmatpush2.msra.mxu0 0.0
    %2410 = vmatprep.subr.mxu0 0.0
    %2411 = vmatpush2.msra.mxu0 0.0
    %2412 = vmatprep.subr.mxu0 0.0
    %2413 = vmatpush2.msra.mxu0 0.0
    %2414 = vmatprep.subr.mxu0 0.0
    %2415 = vmatpush2.msra.mxu0 0.0
    %2416 = vmatprep.mubr.f32.mxu0 0.0
    %2417 = vmatmul.mubr.f32.gmra.mxu0 %v2264
    %v2418 = vpop.f32.mrf.mxu0
    %v2419 = vadd.f32 %v2277, %v2418
    %v2420 = vpop.f32.mrf.mxu0
    %2421 = vdwg.mxu0
    %v2422 = vadd.f32 %v2261, %v2348
    %v2423 = vxor.u32 %v2422, 2147483648
    %v2424 = vmul.f32 %v2423, 1.442695
    %v2425 = vpow.pop %v2424
    %v2426 = vadd.f32 %v2425, 1.0
    %v2427 = vrcp.pop %v2426
    %v2428 = vmul.f32 1.0, %v2427
    %v2429 = vadd.f32 %v2262, %v2350
    %v2430 = vxor.u32 %v2429, 2147483648
    %v2431 = vmul.f32 %v2430, 1.442695
    %v2432 = vpow.pop %v2431
    %v2433 = vadd.f32 %v2432, 1.0
    %v2434 = vrcp.pop %v2433
    %v2435 = vmul.f32 1.0, %v2434
    %v2436 = vmul.f32 %v2428, %v2419
    %v2437 = vadd.f32 %v2263, %v2436
    %v2438 = vtanh.pop %v2437
    %v2439 = vsub.f32 1.0, %v2435
    %v2440 = vmul.f32 %v2439, %v2438
    %v2441 = vmul.f32 %v2435, %v2264
    %v2442 = vadd.f32 %v2440, %v2441
    %2443 = vst [vmem:[#allocation2] sm:$0xff] %v2442
    %2444 = vst [vmem:[#allocation3] sm:$0xff] %v2442
    %v2445 = vld [vmem:[%s694] sm:$0xff]
    %v2446 = vld [vmem:[%s694 + $0x8] sm:$0xff]
    %v2447 = vld [vmem:[%s694 + $0x10] sm:$0xff]
    %v2448 = vld [vmem:[#allocation2] sm:$0xff]
    %2449 = vmatprep.subr.mxu0 %v2257
    %2450 = vmatpush1.msra.mxu0 %v2256
    %2451 = vmatprep.subr.mxu0 %v2254
    %2452 = vmatpush1.msra.mxu0 %v2253
    %2453 = vmatprep.subr.mxu0 %v2251
    %2454 = vmatpush1.msra.mxu0 %v2250
    %2455 = vmatprep.subr.mxu0 %v2248
    %2456 = vmatpush1.msra.mxu0 %v2247
    %2457 = vmatprep.subr.mxu0 %v2245
    %2458 = vmatpush1.msra.mxu0 %v2244
    %2459 = vmatprep.subr.mxu0 %v2242
    %2460 = vmatpush1.msra.mxu0 %v2241
    %2461 = vmatprep.subr.mxu0 %v2239
    %2462 = vmatpush1.msra.mxu0 %v2238
    %2463 = vmatprep.subr.mxu0 %v2236
    %2464 = vmatpush1.msra.mxu0 %v2235
    %2465 = vmatprep.subr.mxu0 %v2233
    %2466 = vmatpush1.msra.mxu0 %v2232
    %2467 = vmatprep.subr.mxu0 %v2230
    %2468 = vmatpush1.msra.mxu0 %v2229
    %2469 = vmatprep.subr.mxu0 %v2227
    %2470 = vmatpush1.msra.mxu0 %v2226
    %2471 = vmatprep.subr.mxu0 %v2224
    %2472 = vmatpush1.msra.mxu0 %v2223
    %2473 = vmatprep.subr.mxu0 %v2221
    %2474 = vmatpush1.msra.mxu0 %v2220
    %2475 = vmatprep.subr.mxu0 %v2218
    %2476 = vmatpush1.msra.mxu0 %v2217
    %2477 = vmatprep.subr.mxu0 %v2215
    %2478 = vmatpush1.msra.mxu0 %v2214
    %2479 = vmatprep.subr.mxu0 %v2212
    %2480 = vmatpush1.msra.mxu0 %v2211
    %2481 = vmatprep.subr.mxu0 0.0
    %2482 = vmatpush2.msra.mxu0 0.0
    %2483 = vmatprep.subr.mxu0 0.0
    %2484 = vmatpush2.msra.mxu0 0.0
    %2485 = vmatprep.subr.mxu0 0.0
    %2486 = vmatpush2.msra.mxu0 0.0
    %2487 = vmatprep.subr.mxu0 0.0
    %2488 = vmatpush2.msra.mxu0 0.0
    %2489 = vmatprep.subr.mxu0 0.0
    %2490 = vmatpush2.msra.mxu0 0.0
    %2491 = vmatprep.subr.mxu0 0.0
    %2492 = vmatpush2.msra.mxu0 0.0
    %2493 = vmatprep.subr.mxu0 0.0
    %2494 = vmatpush2.msra.mxu0 0.0
    %2495 = vmatprep.subr.mxu0 0.0
    %2496 = vmatpush2.msra.mxu0 0.0
    %2497 = vmatprep.subr.mxu0 0.0
    %2498 = vmatpush2.msra.mxu0 0.0
    %2499 = vmatprep.subr.mxu0 0.0
    %2500 = vmatpush2.msra.mxu0 0.0
    %2501 = vmatprep.subr.mxu0 0.0
    %2502 = vmatpush2.msra.mxu0 0.0
    %2503 = vmatprep.subr.mxu0 0.0
    %2504 = vmatpush2.msra.mxu0 0.0
    %2505 = vmatprep.subr.mxu0 0.0
    %2506 = vmatpush2.msra.mxu0 0.0
    %2507 = vmatprep.subr.mxu0 0.0
    %2508 = vmatpush2.msra.mxu0 0.0
    %2509 = vmatprep.subr.mxu0 0.0
    %2510 = vmatpush2.msra.mxu0 0.0
    %2511 = vmatprep.subr.mxu0 0.0
    %2512 = vmatpush2.msra.mxu0 0.0
    %2513 = vmatprep.mubr.f32.mxu0 0.0
    %2514 = vmatmul.mubr.f32.gmra.mxu0 %v2448
    %v2515 = vpop.f32.mrf.mxu0
    %v2516 = vadd.f32 %v2269, %v2515
    %v2517 = vpop.f32.mrf.mxu0
    %v2518 = vadd.f32 %v2273, %v2517
    %2519 = vdwg.mxu0
    %2520 = vmatprep.subr.mxu0 0.0
    %2521 = vmatpush1.msra.mxu0 %v2258
    %2522 = vmatprep.subr.mxu0 0.0
    %2523 = vmatpush1.msra.mxu0 %v2255
    %2524 = vmatprep.subr.mxu0 0.0
    %2525 = vmatpush1.msra.mxu0 %v2252
    %2526 = vmatprep.subr.mxu0 0.0
    %2527 = vmatpush1.msra.mxu0 %v2249
    %2528 = vmatprep.subr.mxu0 0.0
    %2529 = vmatpush1.msra.mxu0 %v2246
    %2530 = vmatprep.subr.mxu0 0.0
    %2531 = vmatpush1.msra.mxu0 %v2243
    %2532 = vmatprep.subr.mxu0 0.0
    %2533 = vmatpush1.msra.mxu0 %v2240
    %2534 = vmatprep.subr.mxu0 0.0
    %2535 = vmatpush1.msra.mxu0 %v2237
    %2536 = vmatprep.subr.mxu0 0.0
    %2537 = vmatpush1.msra.mxu0 %v2234
    %2538 = vmatprep.subr.mxu0 0.0
    %2539 = vmatpush1.msra.mxu0 %v2231
    %2540 = vmatprep.subr.mxu0 0.0
    %2541 = vmatpush1.msra.mxu0 %v2228
    %2542 = vmatprep.subr.mxu0 0.0
    %2543 = vmatpush1.msra.mxu0 %v2225
    %2544 = vmatprep.subr.mxu0 0.0
    %2545 = vmatpush1.msra.mxu0 %v2222
    %2546 = vmatprep.subr.mxu0 0.0
    %2547 = vmatpush1.msra.mxu0 %v2219
    %2548 = vmatprep.subr.mxu0 0.0
    %2549 = vmatpush1.msra.mxu0 %v2216
    %2550 = vmatprep.subr.mxu0 0.0
    %2551 = vmatpush1.msra.mxu0 %v2213
    %2552 = vmatprep.subr.mxu0 0.0
    %2553 = vmatpush2.msra.mxu0 0.0
    %2554 = vmatprep.subr.mxu0 0.0
    %2555 = vmatpush2.msra.mxu0 0.0
    %2556 = vmatprep.subr.mxu0 0.0
    %2557 = vmatpush2.msra.mxu0 0.0
    %2558 = vmatprep.subr.mxu0 0.0
    %2559 = vmatpush2.msra.mxu0 0.0
    %2560 = vmatprep.subr.mxu0 0.0
    %2561 = vmatpush2.msra.mxu0 0.0
    %2562 = vmatprep.subr.mxu0 0.0
    %2563 = vmatpush2.msra.mxu0 0.0
    %2564 = vmatprep.subr.mxu0 0.0
    %2565 = vmatpush2.msra.mxu0 0.0
    %2566 = vmatprep.subr.mxu0 0.0
    %2567 = vmatpush2.msra.mxu0 0.0
    %2568 = vmatprep.subr.mxu0 0.0
    %2569 = vmatpush2.msra.mxu0 0.0
    %2570 = vmatprep.subr.mxu0 0.0
    %2571 = vmatpush2.msra.mxu0 0.0
    %2572 = vmatprep.subr.mxu0 0.0
    %2573 = vmatpush2.msra.mxu0 0.0
    %2574 = vmatprep.subr.mxu0 0.0
    %2575 = vmatpush2.msra.mxu0 0.0
    %2576 = vmatprep.subr.mxu0 0.0
    %2577 = vmatpush2.msra.mxu0 0.0
    %2578 = vmatprep.subr.mxu0 0.0
    %2579 = vmatpush2.msra.mxu0 0.0
    %2580 = vmatprep.subr.mxu0 0.0
    %2581 = vmatpush2.msra.mxu0 0.0
    %2582 = vmatprep.subr.mxu0 0.0
    %2583 = vmatpush2.msra.mxu0 0.0
    %2584 = vmatprep.mubr.f32.mxu0 0.0
    %2585 = vmatmul.mubr.f32.gmra.mxu0 %v2448
    %v2586 = vpop.f32.mrf.mxu0
    %v2587 = vadd.f32 %v2277, %v2586
    %v2588 = vpop.f32.mrf.mxu0
    %2589 = vdwg.mxu0
    %v2590 = vadd.f32 %v2445, %v2516
    %v2591 = vxor.u32 %v2590, 2147483648
    %v2592 = vmul.f32 %v2591, 1.442695
    %v2593 = vpow.pop %v2592
    %v2594 = vadd.f32 %v2593, 1.0
    %v2595 = vrcp.pop %v2594
    %v2596 = vmul.f32 1.0, %v2595
    %v2597 = vadd.f32 %v2446, %v2518
    %v2598 = vxor.u32 %v2597, 2147483648
    %v2599 = vmul.f32 %v2598, 1.442695
    %v2600 = vpow.pop %v2599
    %v2601 = vadd.f32 %v2600, 1.0
    %v2602 = vrcp.pop %v2601
    %v2603 = vmul.f32 1.0, %v2602
    %v2604 = vmul.f32 %v2596, %v2587
    %v2605 = vadd.f32 %v2447, %v2604
    %v2606 = vtanh.pop %v2605
    %v2607 = vsub.f32 1.0, %v2603
    %v2608 = vmul.f32 %v2607, %v2606
    %v2609 = vmul.f32 %v2603, %v2448
    %v2610 = vadd.f32 %v2608, %v2609
    %2611 = vst [vmem:[#allocation2] sm:$0xff] %v2610
    %2612 = vst [vmem:[%s862] sm:$0xff] %v2610
    %v2613 = vld [vmem:[%s866] sm:$0xff]
    %v2614 = vld [vmem:[%s866 + $0x8] sm:$0xff]
    %v2615 = vld [vmem:[%s866 + $0x10] sm:$0xff]
    %v2616 = vld [vmem:[#allocation2] sm:$0xff]
    %2617 = vmatprep.subr.mxu0 %v2257
    %2618 = vmatpush1.msra.mxu0 %v2256
    %2619 = vmatprep.subr.mxu0 %v2254
    %2620 = vmatpush1.msra.mxu0 %v2253
    %2621 = vmatprep.subr.mxu0 %v2251
    %2622 = vmatpush1.msra.mxu0 %v2250
    %2623 = vmatprep.subr.mxu0 %v2248
    %2624 = vmatpush1.msra.mxu0 %v2247
    %2625 = vmatprep.subr.mxu0 %v2245
    %2626 = vmatpush1.msra.mxu0 %v2244
    %2627 = vmatprep.subr.mxu0 %v2242
    %2628 = vmatpush1.msra.mxu0 %v2241
    %2629 = vmatprep.subr.mxu0 %v2239
    %2630 = vmatpush1.msra.mxu0 %v2238
    %2631 = vmatprep.subr.mxu0 %v2236
    %2632 = vmatpush1.msra.mxu0 %v2235
    %2633 = vmatprep.subr.mxu0 %v2233
    %2634 = vmatpush1.msra.mxu0 %v2232
    %2635 = vmatprep.subr.mxu0 %v2230
    %2636 = vmatpush1.msra.mxu0 %v2229
    %2637 = vmatprep.subr.mxu0 %v2227
    %2638 = vmatpush1.msra.mxu0 %v2226
    %2639 = vmatprep.subr.mxu0 %v2224
    %2640 = vmatpush1.msra.mxu0 %v2223
    %2641 = vmatprep.subr.mxu0 %v2221
    %2642 = vmatpush1.msra.mxu0 %v2220
    %2643 = vmatprep.subr.mxu0 %v2218
    %2644 = vmatpush1.msra.mxu0 %v2217
    %2645 = vmatprep.subr.mxu0 %v2215
    %2646 = vmatpush1.msra.mxu0 %v2214
    %2647 = vmatprep.subr.mxu0 %v2212
    %2648 = vmatpush1.msra.mxu0 %v2211
    %2649 = vmatprep.subr.mxu0 0.0
    %2650 = vmatpush2.msra.mxu0 0.0
    %2651 = vmatprep.subr.mxu0 0.0
    %2652 = vmatpush2.msra.mxu0 0.0
    %2653 = vmatprep.subr.mxu0 0.0
    %2654 = vmatpush2.msra.mxu0 0.0
    %2655 = vmatprep.subr.mxu0 0.0
    %2656 = vmatpush2.msra.mxu0 0.0
    %2657 = vmatprep.subr.mxu0 0.0
    %2658 = vmatpush2.msra.mxu0 0.0
    %2659 = vmatprep.subr.mxu0 0.0
    %2660 = vmatpush2.msra.mxu0 0.0
    %2661 = vmatprep.subr.mxu0 0.0
    %2662 = vmatpush2.msra.mxu0 0.0
    %2663 = vmatprep.subr.mxu0 0.0
    %2664 = vmatpush2.msra.mxu0 0.0
    %2665 = vmatprep.subr.mxu0 0.0
    %2666 = vmatpush2.msra.mxu0 0.0
    %2667 = vmatprep.subr.mxu0 0.0
    %2668 = vmatpush2.msra.mxu0 0.0
    %2669 = vmatprep.subr.mxu0 0.0
    %2670 = vmatpush2.msra.mxu0 0.0
    %2671 = vmatprep.subr.mxu0 0.0
    %2672 = vmatpush2.msra.mxu0 0.0
    %2673 = vmatprep.subr.mxu0 0.0
    %2674 = vmatpush2.msra.mxu0 0.0
    %2675 = vmatprep.subr.mxu0 0.0
    %2676 = vmatpush2.msra.mxu0 0.0
    %2677 = vmatprep.subr.mxu0 0.0
    %2678 = vmatpush2.msra.mxu0 0.0
    %2679 = vmatprep.subr.mxu0 0.0
    %2680 = vmatpush2.msra.mxu0 0.0
    %2681 = vmatprep.mubr.f32.mxu0 0.0
    %2682 = vmatmul.mubr.f32.gmra.mxu0 %v2616
    %v2683 = vpop.f32.mrf.mxu0
    %v2684 = vadd.f32 %v2269, %v2683
    %v2685 = vpop.f32.mrf.mxu0
    %v2686 = vadd.f32 %v2273, %v2685
    %2687 = vdwg.mxu0
    %2688 = vmatprep.subr.mxu0 0.0
    %2689 = vmatpush1.msra.mxu0 %v2258
    %2690 = vmatprep.subr.mxu0 0.0
    %2691 = vmatpush1.msra.mxu0 %v2255
    %2692 = vmatprep.subr.mxu0 0.0
    %2693 = vmatpush1.msra.mxu0 %v2252
    %2694 = vmatprep.subr.mxu0 0.0
    %2695 = vmatpush1.msra.mxu0 %v2249
    %2696 = vmatprep.subr.mxu0 0.0
    %2697 = vmatpush1.msra.mxu0 %v2246
    %2698 = vmatprep.subr.mxu0 0.0
    %2699 = vmatpush1.msra.mxu0 %v2243
    %2700 = vmatprep.subr.mxu0 0.0
    %2701 = vmatpush1.msra.mxu0 %v2240
    %2702 = vmatprep.subr.mxu0 0.0
    %2703 = vmatpush1.msra.mxu0 %v2237
    %2704 = vmatprep.subr.mxu0 0.0
    %2705 = vmatpush1.msra.mxu0 %v2234
    %2706 = vmatprep.subr.mxu0 0.0
    %2707 = vmatpush1.msra.mxu0 %v2231
    %2708 = vmatprep.subr.mxu0 0.0
    %2709 = vmatpush1.msra.mxu0 %v2228
    %2710 = vmatprep.subr.mxu0 0.0
    %2711 = vmatpush1.msra.mxu0 %v2225
    %2712 = vmatprep.subr.mxu0 0.0
    %2713 = vmatpush1.msra.mxu0 %v2222
    %2714 = vmatprep.subr.mxu0 0.0
    %2715 = vmatpush1.msra.mxu0 %v2219
    %2716 = vmatprep.subr.mxu0 0.0
    %2717 = vmatpush1.msra.mxu0 %v2216
    %2718 = vmatprep.subr.mxu0 0.0
    %2719 = vmatpush1.msra.mxu0 %v2213
    %2720 = vmatprep.subr.mxu0 0.0
    %2721 = vmatpush2.msra.mxu0 0.0
    %2722 = vmatprep.subr.mxu0 0.0
    %2723 = vmatpush2.msra.mxu0 0.0
    %2724 = vmatprep.subr.mxu0 0.0
    %2725 = vmatpush2.msra.mxu0 0.0
    %2726 = vmatprep.subr.mxu0 0.0
    %2727 = vmatpush2.msra.mxu0 0.0
    %2728 = vmatprep.subr.mxu0 0.0
    %2729 = vmatpush2.msra.mxu0 0.0
    %2730 = vmatprep.subr.mxu0 0.0
    %2731 = vmatpush2.msra.mxu0 0.0
    %2732 = vmatprep.subr.mxu0 0.0
    %2733 = vmatpush2.msra.mxu0 0.0
    %2734 = vmatprep.subr.mxu0 0.0
    %2735 = vmatpush2.msra.mxu0 0.0
    %2736 = vmatprep.subr.mxu0 0.0
    %2737 = vmatpush2.msra.mxu0 0.0
    %2738 = vmatprep.subr.mxu0 0.0
    %2739 = vmatpush2.msra.mxu0 0.0
    %2740 = vmatprep.subr.mxu0 0.0
    %2741 = vmatpush2.msra.mxu0 0.0
    %2742 = vmatprep.subr.mxu0 0.0
    %2743 = vmatpush2.msra.mxu0 0.0
    %2744 = vmatprep.subr.mxu0 0.0
    %2745 = vmatpush2.msra.mxu0 0.0
    %2746 = vmatprep.subr.mxu0 0.0
    %2747 = vmatpush2.msra.mxu0 0.0
    %2748 = vmatprep.subr.mxu0 0.0
    %2749 = vmatpush2.msra.mxu0 0.0
    %2750 = vmatprep.subr.mxu0 0.0
    %2751 = vmatpush2.msra.mxu0 0.0
    %2752 = vmatprep.mubr.f32.mxu0 0.0
    %2753 = vmatmul.mubr.f32.gmra.mxu0 %v2616
    %v2754 = vpop.f32.mrf.mxu0
    %v2755 = vadd.f32 %v2277, %v2754
    %v2756 = vpop.f32.mrf.mxu0
    %2757 = vdwg.mxu0
    %v2758 = vadd.f32 %v2613, %v2684
    %v2759 = vxor.u32 %v2758, 2147483648
    %v2760 = vmul.f32 %v2759, 1.442695
    %v2761 = vpow.pop %v2760
    %v2762 = vadd.f32 %v2761, 1.0
    %v2763 = vrcp.pop %v2762
    %v2764 = vmul.f32 1.0, %v2763
    %v2765 = vadd.f32 %v2614, %v2686
    %v2766 = vxor.u32 %v2765, 2147483648
    %v2767 = vmul.f32 %v2766, 1.442695
    %v2768 = vpow.pop %v2767
    %v2769 = vadd.f32 %v2768, 1.0
    %v2770 = vrcp.pop %v2769
    %v2771 = vmul.f32 1.0, %v2770
    %v2772 = vmul.f32 %v2764, %v2755
    %v2773 = vadd.f32 %v2615, %v2772
    %v2774 = vtanh.pop %v2773
    %v2775 = vsub.f32 1.0, %v2771
    %v2776 = vmul.f32 %v2775, %v2774
    %v2777 = vmul.f32 %v2771, %v2616
    %v2778 = vadd.f32 %v2776, %v2777
    %2779 = vst [vmem:[#allocation2] sm:$0xff] %v2778
    %2780 = vst [vmem:[%s1034] sm:$0xff] %v2778
    %v2781 = vld [vmem:[%s1038] sm:$0xff]
    %v2782 = vld [vmem:[%s1038 + $0x8] sm:$0xff]
    %v2783 = vld [vmem:[%s1038 + $0x10] sm:$0xff]
    %v2784 = vld [vmem:[#allocation2] sm:$0xff]
    %2785 = vmatprep.subr.mxu0 %v2257
    %2786 = vmatpush1.msra.mxu0 %v2256
    %2787 = vmatprep.subr.mxu0 %v2254
    %2788 = vmatpush1.msra.mxu0 %v2253
    %2789 = vmatprep.subr.mxu0 %v2251
    %2790 = vmatpush1.msra.mxu0 %v2250
    %2791 = vmatprep.subr.mxu0 %v2248
    %2792 = vmatpush1.msra.mxu0 %v2247
    %2793 = vmatprep.subr.mxu0 %v2245
    %2794 = vmatpush1.msra.mxu0 %v2244
    %2795 = vmatprep.subr.mxu0 %v2242
    %2796 = vmatpush1.msra.mxu0 %v2241
    %2797 = vmatprep.subr.mxu0 %v2239
    %2798 = vmatpush1.msra.mxu0 %v2238
    %2799 = vmatprep.subr.mxu0 %v2236
    %2800 = vmatpush1.msra.mxu0 %v2235
    %2801 = vmatprep.subr.mxu0 %v2233
    %2802 = vmatpush1.msra.mxu0 %v2232
    %2803 = vmatprep.subr.mxu0 %v2230
    %2804 = vmatpush1.msra.mxu0 %v2229
    %2805 = vmatprep.subr.mxu0 %v2227
    %2806 = vmatpush1.msra.mxu0 %v2226
    %2807 = vmatprep.subr.mxu0 %v2224
    %2808 = vmatpush1.msra.mxu0 %v2223
    %2809 = vmatprep.subr.mxu0 %v2221
    %2810 = vmatpush1.msra.mxu0 %v2220
    %2811 = vmatprep.subr.mxu0 %v2218
    %2812 = vmatpush1.msra.mxu0 %v2217
    %2813 = vmatprep.subr.mxu0 %v2215
    %2814 = vmatpush1.msra.mxu0 %v2214
    %2815 = vmatprep.subr.mxu0 %v2212
    %2816 = vmatpush1.msra.mxu0 %v2211
    %2817 = vmatprep.subr.mxu0 0.0
    %2818 = vmatpush2.msra.mxu0 0.0
    %2819 = vmatprep.subr.mxu0 0.0
    %2820 = vmatpush2.msra.mxu0 0.0
    %2821 = vmatprep.subr.mxu0 0.0
    %2822 = vmatpush2.msra.mxu0 0.0
    %2823 = vmatprep.subr.mxu0 0.0
    %2824 = vmatpush2.msra.mxu0 0.0
    %2825 = vmatprep.subr.mxu0 0.0
    %2826 = vmatpush2.msra.mxu0 0.0
    %2827 = vmatprep.subr.mxu0 0.0
    %2828 = vmatpush2.msra.mxu0 0.0
    %2829 = vmatprep.subr.mxu0 0.0
    %2830 = vmatpush2.msra.mxu0 0.0
    %2831 = vmatprep.subr.mxu0 0.0
    %2832 = vmatpush2.msra.mxu0 0.0
    %2833 = vmatprep.subr.mxu0 0.0
    %2834 = vmatpush2.msra.mxu0 0.0
    %2835 = vmatprep.subr.mxu0 0.0
    %2836 = vmatpush2.msra.mxu0 0.0
    %2837 = vmatprep.subr.mxu0 0.0
    %2838 = vmatpush2.msra.mxu0 0.0
    %2839 = vmatprep.subr.mxu0 0.0
    %2840 = vmatpush2.msra.mxu0 0.0
    %2841 = vmatprep.subr.mxu0 0.0
    %2842 = vmatpush2.msra.mxu0 0.0
    %2843 = vmatprep.subr.mxu0 0.0
    %2844 = vmatpush2.msra.mxu0 0.0
    %2845 = vmatprep.subr.mxu0 0.0
    %2846 = vmatpush2.msra.mxu0 0.0
    %2847 = vmatprep.subr.mxu0 0.0
    %2848 = vmatpush2.msra.mxu0 0.0
    %2849 = vmatprep.mubr.f32.mxu0 0.0
    %2850 = vmatmul.mubr.f32.gmra.mxu0 %v2784
    %v2851 = vpop.f32.mrf.mxu0
    %v2852 = vadd.f32 %v2269, %v2851
    %v2853 = vpop.f32.mrf.mxu0
    %v2854 = vadd.f32 %v2273, %v2853
    %2855 = vdwg.mxu0
    %2856 = vmatprep.subr.mxu0 0.0
    %2857 = vmatpush1.msra.mxu0 %v2258
    %2858 = vmatprep.subr.mxu0 0.0
    %2859 = vmatpush1.msra.mxu0 %v2255
    %2860 = vmatprep.subr.mxu0 0.0
    %2861 = vmatpush1.msra.mxu0 %v2252
    %2862 = vmatprep.subr.mxu0 0.0
    %2863 = vmatpush1.msra.mxu0 %v2249
    %2864 = vmatprep.subr.mxu0 0.0
    %2865 = vmatpush1.msra.mxu0 %v2246
    %2866 = vmatprep.subr.mxu0 0.0
    %2867 = vmatpush1.msra.mxu0 %v2243
    %2868 = vmatprep.subr.mxu0 0.0
    %2869 = vmatpush1.msra.mxu0 %v2240
    %2870 = vmatprep.subr.mxu0 0.0
    %2871 = vmatpush1.msra.mxu0 %v2237
    %2872 = vmatprep.subr.mxu0 0.0
    %2873 = vmatpush1.msra.mxu0 %v2234
    %2874 = vmatprep.subr.mxu0 0.0
    %2875 = vmatpush1.msra.mxu0 %v2231
    %2876 = vmatprep.subr.mxu0 0.0
    %2877 = vmatpush1.msra.mxu0 %v2228
    %2878 = vmatprep.subr.mxu0 0.0
    %2879 = vmatpush1.msra.mxu0 %v2225
    %2880 = vmatprep.subr.mxu0 0.0
    %2881 = vmatpush1.msra.mxu0 %v2222
    %2882 = vmatprep.subr.mxu0 0.0
    %2883 = vmatpush1.msra.mxu0 %v2219
    %2884 = vmatprep.subr.mxu0 0.0
    %2885 = vmatpush1.msra.mxu0 %v2216
    %2886 = vmatprep.subr.mxu0 0.0
    %2887 = vmatpush1.msra.mxu0 %v2213
    %2888 = vmatprep.subr.mxu0 0.0
    %2889 = vmatpush2.msra.mxu0 0.0
    %2890 = vmatprep.subr.mxu0 0.0
    %2891 = vmatpush2.msra.mxu0 0.0
    %2892 = vmatprep.subr.mxu0 0.0
    %2893 = vmatpush2.msra.mxu0 0.0
    %2894 = vmatprep.subr.mxu0 0.0
    %2895 = vmatpush2.msra.mxu0 0.0
    %2896 = vmatprep.subr.mxu0 0.0
    %2897 = vmatpush2.msra.mxu0 0.0
    %2898 = vmatprep.subr.mxu0 0.0
    %2899 = vmatpush2.msra.mxu0 0.0
    %2900 = vmatprep.subr.mxu0 0.0
    %2901 = vmatpush2.msra.mxu0 0.0
    %2902 = vmatprep.subr.mxu0 0.0
    %2903 = vmatpush2.msra.mxu0 0.0
    %2904 = vmatprep.subr.mxu0 0.0
    %2905 = vmatpush2.msra.mxu0 0.0
    %2906 = vmatprep.subr.mxu0 0.0
    %2907 = vmatpush2.msra.mxu0 0.0
    %2908 = vmatprep.subr.mxu0 0.0
    %2909 = vmatpush2.msra.mxu0 0.0
    %2910 = vmatprep.subr.mxu0 0.0
    %2911 = vmatpush2.msra.mxu0 0.0
    %2912 = vmatprep.subr.mxu0 0.0
    %2913 = vmatpush2.msra.mxu0 0.0
    %2914 = vmatprep.subr.mxu0 0.0
    %2915 = vmatpush2.msra.mxu0 0.0
    %2916 = vmatprep.subr.mxu0 0.0
    %2917 = vmatpush2.msra.mxu0 0.0
    %2918 = vmatprep.subr.mxu0 0.0
    %2919 = vmatpush2.msra.mxu0 0.0
    %2920 = vmatprep.mubr.f32.mxu0 0.0
    %2921 = vmatmul.mubr.f32.gmra.mxu0 %v2784
    %v2922 = vpop.f32.mrf.mxu0
    %v2923 = vadd.f32 %v2277, %v2922
    %v2924 = vpop.f32.mrf.mxu0
    %2925 = vdwg.mxu0
    %v2926 = vadd.f32 %v2781, %v2852
    %v2927 = vxor.u32 %v2926, 2147483648
    %v2928 = vmul.f32 %v2927, 1.442695
    %v2929 = vpow.pop %v2928
    %v2930 = vadd.f32 %v2929, 1.0
    %v2931 = vrcp.pop %v2930
    %v2932 = vmul.f32 1.0, %v2931
    %v2933 = vadd.f32 %v2782, %v2854
    %v2934 = vxor.u32 %v2933, 2147483648
    %v2935 = vmul.f32 %v2934, 1.442695
    %v2936 = vpow.pop %v2935
    %v2937 = vadd.f32 %v2936, 1.0
    %v2938 = vrcp.pop %v2937
    %v2939 = vmul.f32 1.0, %v2938
    %v2940 = vmul.f32 %v2932, %v2923
    %v2941 = vadd.f32 %v2783, %v2940
    %v2942 = vtanh.pop %v2941
    %v2943 = vsub.f32 1.0, %v2939
    %v2944 = vmul.f32 %v2943, %v2942
    %v2945 = vmul.f32 %v2939, %v2784
    %v2946 = vadd.f32 %v2944, %v2945
    %2947 = vst [vmem:[#allocation2] sm:$0xff] %v2946
    %2948 = vst [vmem:[%s1206] sm:$0xff] %v2946
    %v2949 = vld [vmem:[%s1210] sm:$0xff]
    %v2950 = vld [vmem:[%s1210 + $0x8] sm:$0xff]
    %v2951 = vld [vmem:[%s1210 + $0x10] sm:$0xff]
    %v2952 = vld [vmem:[#allocation2] sm:$0xff]
    %2953 = vmatprep.subr.mxu0 %v2257
    %2954 = vmatpush1.msra.mxu0 %v2256
    %2955 = vmatprep.subr.mxu0 %v2254
    %2956 = vmatpush1.msra.mxu0 %v2253
    %2957 = vmatprep.subr.mxu0 %v2251
    %2958 = vmatpush1.msra.mxu0 %v2250
    %2959 = vmatprep.subr.mxu0 %v2248
    %2960 = vmatpush1.msra.mxu0 %v2247
    %2961 = vmatprep.subr.mxu0 %v2245
    %2962 = vmatpush1.msra.mxu0 %v2244
    %2963 = vmatprep.subr.mxu0 %v2242
    %2964 = vmatpush1.msra.mxu0 %v2241
    %2965 = vmatprep.subr.mxu0 %v2239
    %2966 = vmatpush1.msra.mxu0 %v2238
    %2967 = vmatprep.subr.mxu0 %v2236
    %2968 = vmatpush1.msra.mxu0 %v2235
    %2969 = vmatprep.subr.mxu0 %v2233
    %2970 = vmatpush1.msra.mxu0 %v2232
    %2971 = vmatprep.subr.mxu0 %v2230
    %2972 = vmatpush1.msra.mxu0 %v2229
    %2973 = vmatprep.subr.mxu0 %v2227
    %2974 = vmatpush1.msra.mxu0 %v2226
    %2975 = vmatprep.subr.mxu0 %v2224
    %2976 = vmatpush1.msra.mxu0 %v2223
    %2977 = vmatprep.subr.mxu0 %v2221
    %2978 = vmatpush1.msra.mxu0 %v2220
    %2979 = vmatprep.subr.mxu0 %v2218
    %2980 = vmatpush1.msra.mxu0 %v2217
    %2981 = vmatprep.subr.mxu0 %v2215
    %2982 = vmatpush1.msra.mxu0 %v2214
    %2983 = vmatprep.subr.mxu0 %v2212
    %2984 = vmatpush1.msra.mxu0 %v2211
    %2985 = vmatprep.subr.mxu0 0.0
    %2986 = vmatpush2.msra.mxu0 0.0
    %2987 = vmatprep.subr.mxu0 0.0
    %2988 = vmatpush2.msra.mxu0 0.0
    %2989 = vmatprep.subr.mxu0 0.0
    %2990 = vmatpush2.msra.mxu0 0.0
    %2991 = vmatprep.subr.mxu0 0.0
    %2992 = vmatpush2.msra.mxu0 0.0
    %2993 = vmatprep.subr.mxu0 0.0
    %2994 = vmatpush2.msra.mxu0 0.0
    %2995 = vmatprep.subr.mxu0 0.0
    %2996 = vmatpush2.msra.mxu0 0.0
    %2997 = vmatprep.subr.mxu0 0.0
    %2998 = vmatpush2.msra.mxu0 0.0
    %2999 = vmatprep.subr.mxu0 0.0
    %3000 = vmatpush2.msra.mxu0 0.0
    %3001 = vmatprep.subr.mxu0 0.0
    %3002 = vmatpush2.msra.mxu0 0.0
    %3003 = vmatprep.subr.mxu0 0.0
    %3004 = vmatpush2.msra.mxu0 0.0
    %3005 = vmatprep.subr.mxu0 0.0
    %3006 = vmatpush2.msra.mxu0 0.0
    %3007 = vmatprep.subr.mxu0 0.0
    %3008 = vmatpush2.msra.mxu0 0.0
    %3009 = vmatprep.subr.mxu0 0.0
    %3010 = vmatpush2.msra.mxu0 0.0
    %3011 = vmatprep.subr.mxu0 0.0
    %3012 = vmatpush2.msra.mxu0 0.0
    %3013 = vmatprep.subr.mxu0 0.0
    %3014 = vmatpush2.msra.mxu0 0.0
    %3015 = vmatprep.subr.mxu0 0.0
    %3016 = vmatpush2.msra.mxu0 0.0
    %3017 = vmatprep.mubr.f32.mxu0 0.0
    %3018 = vmatmul.mubr.f32.gmra.mxu0 %v2952
    %v3019 = vpop.f32.mrf.mxu0
    %v3020 = vadd.f32 %v2269, %v3019
    %v3021 = vpop.f32.mrf.mxu0
    %v3022 = vadd.f32 %v2273, %v3021
    %3023 = vdwg.mxu0
    %3024 = vmatprep.subr.mxu0 0.0
    %3025 = vmatpush1.msra.mxu0 %v2258
    %3026 = vmatprep.subr.mxu0 0.0
    %3027 = vmatpush1.msra.mxu0 %v2255
    %3028 = vmatprep.subr.mxu0 0.0
    %3029 = vmatpush1.msra.mxu0 %v2252
    %3030 = vmatprep.subr.mxu0 0.0
    %3031 = vmatpush1.msra.mxu0 %v2249
    %3032 = vmatprep.subr.mxu0 0.0
    %3033 = vmatpush1.msra.mxu0 %v2246
    %3034 = vmatprep.subr.mxu0 0.0
    %3035 = vmatpush1.msra.mxu0 %v2243
    %3036 = vmatprep.subr.mxu0 0.0
    %3037 = vmatpush1.msra.mxu0 %v2240
    %3038 = vmatprep.subr.mxu0 0.0
    %3039 = vmatpush1.msra.mxu0 %v2237
    %3040 = vmatprep.subr.mxu0 0.0
    %3041 = vmatpush1.msra.mxu0 %v2234
    %3042 = vmatprep.subr.mxu0 0.0
    %3043 = vmatpush1.msra.mxu0 %v2231
    %3044 = vmatprep.subr.mxu0 0.0
    %3045 = vmatpush1.msra.mxu0 %v2228
    %3046 = vmatprep.subr.mxu0 0.0
    %3047 = vmatpush1.msra.mxu0 %v2225
    %3048 = vmatprep.subr.mxu0 0.0
    %3049 = vmatpush1.msra.mxu0 %v2222
    %3050 = vmatprep.subr.mxu0 0.0
    %3051 = vmatpush1.msra.mxu0 %v2219
    %3052 = vmatprep.subr.mxu0 0.0
    %3053 = vmatpush1.msra.mxu0 %v2216
    %3054 = vmatprep.subr.mxu0 0.0
    %3055 = vmatpush1.msra.mxu0 %v2213
    %3056 = vmatprep.subr.mxu0 0.0
    %3057 = vmatpush2.msra.mxu0 0.0
    %3058 = vmatprep.subr.mxu0 0.0
    %3059 = vmatpush2.msra.mxu0 0.0
    %3060 = vmatprep.subr.mxu0 0.0
    %3061 = vmatpush2.msra.mxu0 0.0
    %3062 = vmatprep.subr.mxu0 0.0
    %3063 = vmatpush2.msra.mxu0 0.0
    %3064 = vmatprep.subr.mxu0 0.0
    %3065 = vmatpush2.msra.mxu0 0.0
    %3066 = vmatprep.subr.mxu0 0.0
    %3067 = vmatpush2.msra.mxu0 0.0
    %3068 = vmatprep.subr.mxu0 0.0
    %3069 = vmatpush2.msra.mxu0 0.0
    %3070 = vmatprep.subr.mxu0 0.0
    %3071 = vmatpush2.msra.mxu0 0.0
    %3072 = vmatprep.subr.mxu0 0.0
    %3073 = vmatpush2.msra.mxu0 0.0
    %3074 = vmatprep.subr.mxu0 0.0
    %3075 = vmatpush2.msra.mxu0 0.0
    %3076 = vmatprep.subr.mxu0 0.0
    %3077 = vmatpush2.msra.mxu0 0.0
    %3078 = vmatprep.subr.mxu0 0.0
    %3079 = vmatpush2.msra.mxu0 0.0
    %3080 = vmatprep.subr.mxu0 0.0
    %3081 = vmatpush2.msra.mxu0 0.0
    %3082 = vmatprep.subr.mxu0 0.0
    %3083 = vmatpush2.msra.mxu0 0.0
    %3084 = vmatprep.subr.mxu0 0.0
    %3085 = vmatpush2.msra.mxu0 0.0
    %3086 = vmatprep.subr.mxu0 0.0
    %3087 = vmatpush2.msra.mxu0 0.0
    %3088 = vmatprep.mubr.f32.mxu0 0.0
    %3089 = vmatmul.mubr.f32.gmra.mxu0 %v2952
    %v3090 = vpop.f32.mrf.mxu0
    %v3091 = vadd.f32 %v2277, %v3090
    %v3092 = vpop.f32.mrf.mxu0
    %3093 = vdwg.mxu0
    %v3094 = vadd.f32 %v2949, %v3020
    %v3095 = vxor.u32 %v3094, 2147483648
    %v3096 = vmul.f32 %v3095, 1.442695
    %v3097 = vpow.pop %v3096
    %v3098 = vadd.f32 %v3097, 1.0
    %v3099 = vrcp.pop %v3098
    %v3100 = vmul.f32 1.0, %v3099
    %v3101 = vadd.f32 %v2950, %v3022
    %v3102 = vxor.u32 %v3101, 2147483648
    %v3103 = vmul.f32 %v3102, 1.442695
    %v3104 = vpow.pop %v3103
    %v3105 = vadd.f32 %v3104, 1.0
    %v3106 = vrcp.pop %v3105
    %v3107 = vmul.f32 1.0, %v3106
    %v3108 = vmul.f32 %v3100, %v3091
    %v3109 = vadd.f32 %v2951, %v3108
    %v3110 = vtanh.pop %v3109
    %v3111 = vsub.f32 1.0, %v3107
    %v3112 = vmul.f32 %v3111, %v3110
    %v3113 = vmul.f32 %v3107, %v2952
    %v3114 = vadd.f32 %v3112, %v3113
    %3115 = vst [vmem:[#allocation2] sm:$0xff] %v3114
    %3116 = vst [vmem:[%s1378] sm:$0xff] %v3114
    %v3117 = vld [vmem:[%s1382] sm:$0xff]
    %v3118 = vld [vmem:[%s1382 + $0x8] sm:$0xff]
    %v3119 = vld [vmem:[%s1382 + $0x10] sm:$0xff]
    %v3120 = vld [vmem:[#allocation2] sm:$0xff]
    %3121 = vmatprep.subr.mxu0 %v2257
    %3122 = vmatpush1.msra.mxu0 %v2256
    %3123 = vmatprep.subr.mxu0 %v2254
    %3124 = vmatpush1.msra.mxu0 %v2253
    %3125 = vmatprep.subr.mxu0 %v2251
    %3126 = vmatpush1.msra.mxu0 %v2250
    %3127 = vmatprep.subr.mxu0 %v2248
    %3128 = vmatpush1.msra.mxu0 %v2247
    %3129 = vmatprep.subr.mxu0 %v2245
    %3130 = vmatpush1.msra.mxu0 %v2244
    %3131 = vmatprep.subr.mxu0 %v2242
    %3132 = vmatpush1.msra.mxu0 %v2241
    %3133 = vmatprep.subr.mxu0 %v2239
    %3134 = vmatpush1.msra.mxu0 %v2238
    %3135 = vmatprep.subr.mxu0 %v2236
    %3136 = vmatpush1.msra.mxu0 %v2235
    %3137 = vmatprep.subr.mxu0 %v2233
    %3138 = vmatpush1.msra.mxu0 %v2232
    %3139 = vmatprep.subr.mxu0 %v2230
    %3140 = vmatpush1.msra.mxu0 %v2229
    %3141 = vmatprep.subr.mxu0 %v2227
    %3142 = vmatpush1.msra.mxu0 %v2226
    %3143 = vmatprep.subr.mxu0 %v2224
    %3144 = vmatpush1.msra.mxu0 %v2223
    %3145 = vmatprep.subr.mxu0 %v2221
    %3146 = vmatpush1.msra.mxu0 %v2220
    %3147 = vmatprep.subr.mxu0 %v2218
    %3148 = vmatpush1.msra.mxu0 %v2217
    %3149 = vmatprep.subr.mxu0 %v2215
    %3150 = vmatpush1.msra.mxu0 %v2214
    %3151 = vmatprep.subr.mxu0 %v2212
    %3152 = vmatpush1.msra.mxu0 %v2211
    %3153 = vmatprep.subr.mxu0 0.0
    %3154 = vmatpush2.msra.mxu0 0.0
    %3155 = vmatprep.subr.mxu0 0.0
    %3156 = vmatpush2.msra.mxu0 0.0
    %3157 = vmatprep.subr.mxu0 0.0
    %3158 = vmatpush2.msra.mxu0 0.0
    %3159 = vmatprep.subr.mxu0 0.0
    %3160 = vmatpush2.msra.mxu0 0.0
    %3161 = vmatprep.subr.mxu0 0.0
    %3162 = vmatpush2.msra.mxu0 0.0
    %3163 = vmatprep.subr.mxu0 0.0
    %3164 = vmatpush2.msra.mxu0 0.0
    %3165 = vmatprep.subr.mxu0 0.0
    %3166 = vmatpush2.msra.mxu0 0.0
    %3167 = vmatprep.subr.mxu0 0.0
    %3168 = vmatpush2.msra.mxu0 0.0
    %3169 = vmatprep.subr.mxu0 0.0
    %3170 = vmatpush2.msra.mxu0 0.0
    %3171 = vmatprep.subr.mxu0 0.0
    %3172 = vmatpush2.msra.mxu0 0.0
    %3173 = vmatprep.subr.mxu0 0.0
    %3174 = vmatpush2.msra.mxu0 0.0
    %3175 = vmatprep.subr.mxu0 0.0
    %3176 = vmatpush2.msra.mxu0 0.0
    %3177 = vmatprep.subr.mxu0 0.0
    %3178 = vmatpush2.msra.mxu0 0.0
    %3179 = vmatprep.subr.mxu0 0.0
    %3180 = vmatpush2.msra.mxu0 0.0
    %3181 = vmatprep.subr.mxu0 0.0
    %3182 = vmatpush2.msra.mxu0 0.0
    %3183 = vmatprep.subr.mxu0 0.0
    %3184 = vmatpush2.msra.mxu0 0.0
    %3185 = vmatprep.mubr.f32.mxu0 0.0
    %3186 = vmatmul.mubr.f32.gmra.mxu0 %v3120
    %v3187 = vpop.f32.mrf.mxu0
    %v3188 = vadd.f32 %v2269, %v3187
    %v3189 = vpop.f32.mrf.mxu0
    %v3190 = vadd.f32 %v2273, %v3189
    %3191 = vdwg.mxu0
    %3192 = vmatprep.subr.mxu0 0.0
    %3193 = vmatpush1.msra.mxu0 %v2258
    %3194 = vmatprep.subr.mxu0 0.0
    %3195 = vmatpush1.msra.mxu0 %v2255
    %3196 = vmatprep.subr.mxu0 0.0
    %3197 = vmatpush1.msra.mxu0 %v2252
    %3198 = vmatprep.subr.mxu0 0.0
    %3199 = vmatpush1.msra.mxu0 %v2249
    %3200 = vmatprep.subr.mxu0 0.0
    %3201 = vmatpush1.msra.mxu0 %v2246
    %3202 = vmatprep.subr.mxu0 0.0
    %3203 = vmatpush1.msra.mxu0 %v2243
    %3204 = vmatprep.subr.mxu0 0.0
    %3205 = vmatpush1.msra.mxu0 %v2240
    %3206 = vmatprep.subr.mxu0 0.0
    %3207 = vmatpush1.msra.mxu0 %v2237
    %3208 = vmatprep.subr.mxu0 0.0
    %3209 = vmatpush1.msra.mxu0 %v2234
    %3210 = vmatprep.subr.mxu0 0.0
    %3211 = vmatpush1.msra.mxu0 %v2231
    %3212 = vmatprep.subr.mxu0 0.0
    %3213 = vmatpush1.msra.mxu0 %v2228
    %3214 = vmatprep.subr.mxu0 0.0
    %3215 = vmatpush1.msra.mxu0 %v2225
    %3216 = vmatprep.subr.mxu0 0.0
    %3217 = vmatpush1.msra.mxu0 %v2222
    %3218 = vmatprep.subr.mxu0 0.0
    %3219 = vmatpush1.msra.mxu0 %v2219
    %3220 = vmatprep.subr.mxu0 0.0
    %3221 = vmatpush1.msra.mxu0 %v2216
    %3222 = vmatprep.subr.mxu0 0.0
    %3223 = vmatpush1.msra.mxu0 %v2213
    %3224 = vmatprep.subr.mxu0 0.0
    %3225 = vmatpush2.msra.mxu0 0.0
    %3226 = vmatprep.subr.mxu0 0.0
    %3227 = vmatpush2.msra.mxu0 0.0
    %3228 = vmatprep.subr.mxu0 0.0
    %3229 = vmatpush2.msra.mxu0 0.0
    %3230 = vmatprep.subr.mxu0 0.0
    %3231 = vmatpush2.msra.mxu0 0.0
    %3232 = vmatprep.subr.mxu0 0.0
    %3233 = vmatpush2.msra.mxu0 0.0
    %3234 = vmatprep.subr.mxu0 0.0
    %3235 = vmatpush2.msra.mxu0 0.0
    %3236 = vmatprep.subr.mxu0 0.0
    %3237 = vmatpush2.msra.mxu0 0.0
    %3238 = vmatprep.subr.mxu0 0.0
    %3239 = vmatpush2.msra.mxu0 0.0
    %3240 = vmatprep.subr.mxu0 0.0
    %3241 = vmatpush2.msra.mxu0 0.0
    %3242 = vmatprep.subr.mxu0 0.0
    %3243 = vmatpush2.msra.mxu0 0.0
    %3244 = vmatprep.subr.mxu0 0.0
    %3245 = vmatpush2.msra.mxu0 0.0
    %3246 = vmatprep.subr.mxu0 0.0
    %3247 = vmatpush2.msra.mxu0 0.0
    %3248 = vmatprep.subr.mxu0 0.0
    %3249 = vmatpush2.msra.mxu0 0.0
    %3250 = vmatprep.subr.mxu0 0.0
    %3251 = vmatpush2.msra.mxu0 0.0
    %3252 = vmatprep.subr.mxu0 0.0
    %3253 = vmatpush2.msra.mxu0 0.0
    %3254 = vmatprep.subr.mxu0 0.0
    %3255 = vmatpush2.msra.mxu0 0.0
    %3256 = vmatprep.mubr.f32.mxu0 0.0
    %3257 = vmatmul.mubr.f32.gmra.mxu0 %v3120
    %v3258 = vpop.f32.mrf.mxu0
    %v3259 = vadd.f32 %v2277, %v3258
    %v3260 = vpop.f32.mrf.mxu0
    %3261 = vdwg.mxu0
    %v3262 = vadd.f32 %v3117, %v3188
    %v3263 = vxor.u32 %v3262, 2147483648
    %v3264 = vmul.f32 %v3263, 1.442695
    %v3265 = vpow.pop %v3264
    %v3266 = vadd.f32 %v3265, 1.0
    %v3267 = vrcp.pop %v3266
    %v3268 = vmul.f32 1.0, %v3267
    %v3269 = vadd.f32 %v3118, %v3190
    %v3270 = vxor.u32 %v3269, 2147483648
    %v3271 = vmul.f32 %v3270, 1.442695
    %v3272 = vpow.pop %v3271
    %v3273 = vadd.f32 %v3272, 1.0
    %v3274 = vrcp.pop %v3273
    %v3275 = vmul.f32 1.0, %v3274
    %v3276 = vmul.f32 %v3268, %v3259
    %v3277 = vadd.f32 %v3119, %v3276
    %v3278 = vtanh.pop %v3277
    %v3279 = vsub.f32 1.0, %v3275
    %v3280 = vmul.f32 %v3279, %v3278
    %v3281 = vmul.f32 %v3275, %v3120
    %v3282 = vadd.f32 %v3280, %v3281
    %3283 = vst [vmem:[#allocation2] sm:$0xff] %v3282
    %3284 = vst [vmem:[%s1550] sm:$0xff] %v3282
    %v3285 = vld [vmem:[%s1554] sm:$0xff]
    %v3286 = vld [vmem:[%s1554 + $0x8] sm:$0xff]
    %v3287 = vld [vmem:[%s1554 + $0x10] sm:$0xff]
    %v3288 = vld [vmem:[#allocation2] sm:$0xff]
    %3289 = vmatprep.subr.mxu0 %v2257
    %3290 = vmatpush1.msra.mxu0 %v2256
    %3291 = vmatprep.subr.mxu0 %v2254
    %3292 = vmatpush1.msra.mxu0 %v2253
    %3293 = vmatprep.subr.mxu0 %v2251
    %3294 = vmatpush1.msra.mxu0 %v2250
    %3295 = vmatprep.subr.mxu0 %v2248
    %3296 = vmatpush1.msra.mxu0 %v2247
    %3297 = vmatprep.subr.mxu0 %v2245
    %3298 = vmatpush1.msra.mxu0 %v2244
    %3299 = vmatprep.subr.mxu0 %v2242
    %3300 = vmatpush1.msra.mxu0 %v2241
    %3301 = vmatprep.subr.mxu0 %v2239
    %3302 = vmatpush1.msra.mxu0 %v2238
    %3303 = vmatprep.subr.mxu0 %v2236
    %3304 = vmatpush1.msra.mxu0 %v2235
    %3305 = vmatprep.subr.mxu0 %v2233
    %3306 = vmatpush1.msra.mxu0 %v2232
    %3307 = vmatprep.subr.mxu0 %v2230
    %3308 = vmatpush1.msra.mxu0 %v2229
    %3309 = vmatprep.subr.mxu0 %v2227
    %3310 = vmatpush1.msra.mxu0 %v2226
    %3311 = vmatprep.subr.mxu0 %v2224
    %3312 = vmatpush1.msra.mxu0 %v2223
    %3313 = vmatprep.subr.mxu0 %v2221
    %3314 = vmatpush1.msra.mxu0 %v2220
    %3315 = vmatprep.subr.mxu0 %v2218
    %3316 = vmatpush1.msra.mxu0 %v2217
    %3317 = vmatprep.subr.mxu0 %v2215
    %3318 = vmatpush1.msra.mxu0 %v2214
    %3319 = vmatprep.subr.mxu0 %v2212
    %3320 = vmatpush1.msra.mxu0 %v2211
    %3321 = vmatprep.subr.mxu0 0.0
    %3322 = vmatpush2.msra.mxu0 0.0
    %3323 = vmatprep.subr.mxu0 0.0
    %3324 = vmatpush2.msra.mxu0 0.0
    %3325 = vmatprep.subr.mxu0 0.0
    %3326 = vmatpush2.msra.mxu0 0.0
    %3327 = vmatprep.subr.mxu0 0.0
    %3328 = vmatpush2.msra.mxu0 0.0
    %3329 = vmatprep.subr.mxu0 0.0
    %3330 = vmatpush2.msra.mxu0 0.0
    %3331 = vmatprep.subr.mxu0 0.0
    %3332 = vmatpush2.msra.mxu0 0.0
    %3333 = vmatprep.subr.mxu0 0.0
    %3334 = vmatpush2.msra.mxu0 0.0
    %3335 = vmatprep.subr.mxu0 0.0
    %3336 = vmatpush2.msra.mxu0 0.0
    %3337 = vmatprep.subr.mxu0 0.0
    %3338 = vmatpush2.msra.mxu0 0.0
    %3339 = vmatprep.subr.mxu0 0.0
    %3340 = vmatpush2.msra.mxu0 0.0
    %3341 = vmatprep.subr.mxu0 0.0
    %3342 = vmatpush2.msra.mxu0 0.0
    %3343 = vmatprep.subr.mxu0 0.0
    %3344 = vmatpush2.msra.mxu0 0.0
    %3345 = vmatprep.subr.mxu0 0.0
    %3346 = vmatpush2.msra.mxu0 0.0
    %3347 = vmatprep.subr.mxu0 0.0
    %3348 = vmatpush2.msra.mxu0 0.0
    %3349 = vmatprep.subr.mxu0 0.0
    %3350 = vmatpush2.msra.mxu0 0.0
    %3351 = vmatprep.subr.mxu0 0.0
    %3352 = vmatpush2.msra.mxu0 0.0
    %3353 = vmatprep.mubr.f32.mxu0 0.0
    %3354 = vmatmul.mubr.f32.gmra.mxu0 %v3288
    %v3355 = vpop.f32.mrf.mxu0
    %v3356 = vadd.f32 %v2269, %v3355
    %v3357 = vpop.f32.mrf.mxu0
    %v3358 = vadd.f32 %v2273, %v3357
    %3359 = vdwg.mxu0
    %3360 = vmatprep.subr.mxu0 0.0
    %3361 = vmatpush1.msra.mxu0 %v2258
    %3362 = vmatprep.subr.mxu0 0.0
    %3363 = vmatpush1.msra.mxu0 %v2255
    %3364 = vmatprep.subr.mxu0 0.0
    %3365 = vmatpush1.msra.mxu0 %v2252
    %3366 = vmatprep.subr.mxu0 0.0
    %3367 = vmatpush1.msra.mxu0 %v2249
    %3368 = vmatprep.subr.mxu0 0.0
    %3369 = vmatpush1.msra.mxu0 %v2246
    %3370 = vmatprep.subr.mxu0 0.0
    %3371 = vmatpush1.msra.mxu0 %v2243
    %3372 = vmatprep.subr.mxu0 0.0
    %3373 = vmatpush1.msra.mxu0 %v2240
    %3374 = vmatprep.subr.mxu0 0.0
    %3375 = vmatpush1.msra.mxu0 %v2237
    %3376 = vmatprep.subr.mxu0 0.0
    %3377 = vmatpush1.msra.mxu0 %v2234
    %3378 = vmatprep.subr.mxu0 0.0
    %3379 = vmatpush1.msra.mxu0 %v2231
    %3380 = vmatprep.subr.mxu0 0.0
    %3381 = vmatpush1.msra.mxu0 %v2228
    %3382 = vmatprep.subr.mxu0 0.0
    %3383 = vmatpush1.msra.mxu0 %v2225
    %3384 = vmatprep.subr.mxu0 0.0
    %3385 = vmatpush1.msra.mxu0 %v2222
    %3386 = vmatprep.subr.mxu0 0.0
    %3387 = vmatpush1.msra.mxu0 %v2219
    %3388 = vmatprep.subr.mxu0 0.0
    %3389 = vmatpush1.msra.mxu0 %v2216
    %3390 = vmatprep.subr.mxu0 0.0
    %3391 = vmatpush1.msra.mxu0 %v2213
    %3392 = vmatprep.subr.mxu0 0.0
    %3393 = vmatpush2.msra.mxu0 0.0
    %3394 = vmatprep.subr.mxu0 0.0
    %3395 = vmatpush2.msra.mxu0 0.0
    %3396 = vmatprep.subr.mxu0 0.0
    %3397 = vmatpush2.msra.mxu0 0.0
    %3398 = vmatprep.subr.mxu0 0.0
    %3399 = vmatpush2.msra.mxu0 0.0
    %3400 = vmatprep.subr.mxu0 0.0
    %3401 = vmatpush2.msra.mxu0 0.0
    %3402 = vmatprep.subr.mxu0 0.0
    %3403 = vmatpush2.msra.mxu0 0.0
    %3404 = vmatprep.subr.mxu0 0.0
    %3405 = vmatpush2.msra.mxu0 0.0
    %3406 = vmatprep.subr.mxu0 0.0
    %3407 = vmatpush2.msra.mxu0 0.0
    %3408 = vmatprep.subr.mxu0 0.0
    %3409 = vmatpush2.msra.mxu0 0.0
    %3410 = vmatprep.subr.mxu0 0.0
    %3411 = vmatpush2.msra.mxu0 0.0
    %3412 = vmatprep.subr.mxu0 0.0
    %3413 = vmatpush2.msra.mxu0 0.0
    %3414 = vmatprep.subr.mxu0 0.0
    %3415 = vmatpush2.msra.mxu0 0.0
    %3416 = vmatprep.subr.mxu0 0.0
    %3417 = vmatpush2.msra.mxu0 0.0
    %3418 = vmatprep.subr.mxu0 0.0
    %3419 = vmatpush2.msra.mxu0 0.0
    %3420 = vmatprep.subr.mxu0 0.0
    %3421 = vmatpush2.msra.mxu0 0.0
    %3422 = vmatprep.subr.mxu0 0.0
    %3423 = vmatpush2.msra.mxu0 0.0
    %3424 = vmatprep.mubr.f32.mxu0 0.0
    %3425 = vmatmul.mubr.f32.gmra.mxu0 %v3288
    %v3426 = vpop.f32.mrf.mxu0
    %v3427 = vadd.f32 %v2277, %v3426
    %v3428 = vpop.f32.mrf.mxu0
    %3429 = vdwg.mxu0
    %v3430 = vadd.f32 %v3285, %v3356
    %v3431 = vxor.u32 %v3430, 2147483648
    %v3432 = vmul.f32 %v3431, 1.442695
    %v3433 = vpow.pop %v3432
    %v3434 = vadd.f32 %v3433, 1.0
    %v3435 = vrcp.pop %v3434
    %v3436 = vmul.f32 1.0, %v3435
    %v3437 = vadd.f32 %v3286, %v3358
    %v3438 = vxor.u32 %v3437, 2147483648
    %v3439 = vmul.f32 %v3438, 1.442695
    %v3440 = vpow.pop %v3439
    %v3441 = vadd.f32 %v3440, 1.0
    %v3442 = vrcp.pop %v3441
    %v3443 = vmul.f32 1.0, %v3442
    %v3444 = vmul.f32 %v3436, %v3427
    %v3445 = vadd.f32 %v3287, %v3444
    %v3446 = vtanh.pop %v3445
    %v3447 = vsub.f32 1.0, %v3443
    %v3448 = vmul.f32 %v3447, %v3446
    %v3449 = vmul.f32 %v3443, %v3288
    %v3450 = vadd.f32 %v3448, %v3449
    %3451 = vst [vmem:[#allocation2] sm:$0xff] %v3450
    %3452 = vst [vmem:[%s1722] sm:$0xff] %v3450
    %v3453 = vld [vmem:[%s1726] sm:$0xff]
    %v3454 = vld [vmem:[%s1726 + $0x8] sm:$0xff]
    %v3455 = vld [vmem:[%s1726 + $0x10] sm:$0xff]
    %v3456 = vld [vmem:[#allocation2] sm:$0xff]
    %3457 = vmatprep.subr.mxu0 %v2257
    %3458 = vmatpush1.msra.mxu0 %v2256
    %3459 = vmatprep.subr.mxu0 %v2254
    %3460 = vmatpush1.msra.mxu0 %v2253
    %3461 = vmatprep.subr.mxu0 %v2251
    %3462 = vmatpush1.msra.mxu0 %v2250
    %3463 = vmatprep.subr.mxu0 %v2248
    %3464 = vmatpush1.msra.mxu0 %v2247
    %3465 = vmatprep.subr.mxu0 %v2245
    %3466 = vmatpush1.msra.mxu0 %v2244
    %3467 = vmatprep.subr.mxu0 %v2242
    %3468 = vmatpush1.msra.mxu0 %v2241
    %3469 = vmatprep.subr.mxu0 %v2239
    %3470 = vmatpush1.msra.mxu0 %v2238
    %3471 = vmatprep.subr.mxu0 %v2236
    %3472 = vmatpush1.msra.mxu0 %v2235
    %3473 = vmatprep.subr.mxu0 %v2233
    %3474 = vmatpush1.msra.mxu0 %v2232
    %3475 = vmatprep.subr.mxu0 %v2230
    %3476 = vmatpush1.msra.mxu0 %v2229
    %3477 = vmatprep.subr.mxu0 %v2227
    %3478 = vmatpush1.msra.mxu0 %v2226
    %3479 = vmatprep.subr.mxu0 %v2224
    %3480 = vmatpush1.msra.mxu0 %v2223
    %3481 = vmatprep.subr.mxu0 %v2221
    %3482 = vmatpush1.msra.mxu0 %v2220
    %3483 = vmatprep.subr.mxu0 %v2218
    %3484 = vmatpush1.msra.mxu0 %v2217
    %3485 = vmatprep.subr.mxu0 %v2215
    %3486 = vmatpush1.msra.mxu0 %v2214
    %3487 = vmatprep.subr.mxu0 %v2212
    %3488 = vmatpush1.msra.mxu0 %v2211
    %3489 = vmatprep.subr.mxu0 0.0
    %3490 = vmatpush2.msra.mxu0 0.0
    %3491 = vmatprep.subr.mxu0 0.0
    %3492 = vmatpush2.msra.mxu0 0.0
    %3493 = vmatprep.subr.mxu0 0.0
    %3494 = vmatpush2.msra.mxu0 0.0
    %3495 = vmatprep.subr.mxu0 0.0
    %3496 = vmatpush2.msra.mxu0 0.0
    %3497 = vmatprep.subr.mxu0 0.0
    %3498 = vmatpush2.msra.mxu0 0.0
    %3499 = vmatprep.subr.mxu0 0.0
    %3500 = vmatpush2.msra.mxu0 0.0
    %3501 = vmatprep.subr.mxu0 0.0
    %3502 = vmatpush2.msra.mxu0 0.0
    %3503 = vmatprep.subr.mxu0 0.0
    %3504 = vmatpush2.msra.mxu0 0.0
    %3505 = vmatprep.subr.mxu0 0.0
    %3506 = vmatpush2.msra.mxu0 0.0
    %3507 = vmatprep.subr.mxu0 0.0
    %3508 = vmatpush2.msra.mxu0 0.0
    %3509 = vmatprep.subr.mxu0 0.0
    %3510 = vmatpush2.msra.mxu0 0.0
    %3511 = vmatprep.subr.mxu0 0.0
    %3512 = vmatpush2.msra.mxu0 0.0
    %3513 = vmatprep.subr.mxu0 0.0
    %3514 = vmatpush2.msra.mxu0 0.0
    %3515 = vmatprep.subr.mxu0 0.0
    %3516 = vmatpush2.msra.mxu0 0.0
    %3517 = vmatprep.subr.mxu0 0.0
    %3518 = vmatpush2.msra.mxu0 0.0
    %3519 = vmatprep.subr.mxu0 0.0
    %3520 = vmatpush2.msra.mxu0 0.0
    %3521 = vmatprep.mubr.f32.mxu0 0.0
    %3522 = vmatmul.mubr.f32.gmra.mxu0 %v3456
    %v3523 = vpop.f32.mrf.mxu0
    %v3524 = vadd.f32 %v2269, %v3523
    %v3525 = vpop.f32.mrf.mxu0
    %v3526 = vadd.f32 %v2273, %v3525
    %3527 = vdwg.mxu0
    %3528 = vmatprep.subr.mxu0 0.0
    %3529 = vmatpush1.msra.mxu0 %v2258
    %3530 = vmatprep.subr.mxu0 0.0
    %3531 = vmatpush1.msra.mxu0 %v2255
    %3532 = vmatprep.subr.mxu0 0.0
    %3533 = vmatpush1.msra.mxu0 %v2252
    %3534 = vmatprep.subr.mxu0 0.0
    %3535 = vmatpush1.msra.mxu0 %v2249
    %3536 = vmatprep.subr.mxu0 0.0
    %3537 = vmatpush1.msra.mxu0 %v2246
    %3538 = vmatprep.subr.mxu0 0.0
    %3539 = vmatpush1.msra.mxu0 %v2243
    %3540 = vmatprep.subr.mxu0 0.0
    %3541 = vmatpush1.msra.mxu0 %v2240
    %3542 = vmatprep.subr.mxu0 0.0
    %3543 = vmatpush1.msra.mxu0 %v2237
    %3544 = vmatprep.subr.mxu0 0.0
    %3545 = vmatpush1.msra.mxu0 %v2234
    %3546 = vmatprep.subr.mxu0 0.0
    %3547 = vmatpush1.msra.mxu0 %v2231
    %3548 = vmatprep.subr.mxu0 0.0
    %3549 = vmatpush1.msra.mxu0 %v2228
    %3550 = vmatprep.subr.mxu0 0.0
    %3551 = vmatpush1.msra.mxu0 %v2225
    %3552 = vmatprep.subr.mxu0 0.0
    %3553 = vmatpush1.msra.mxu0 %v2222
    %3554 = vmatprep.subr.mxu0 0.0
    %3555 = vmatpush1.msra.mxu0 %v2219
    %3556 = vmatprep.subr.mxu0 0.0
    %3557 = vmatpush1.msra.mxu0 %v2216
    %3558 = vmatprep.subr.mxu0 0.0
    %3559 = vmatpush1.msra.mxu0 %v2213
    %3560 = vmatprep.subr.mxu0 0.0
    %3561 = vmatpush2.msra.mxu0 0.0
    %3562 = vmatprep.subr.mxu0 0.0
    %3563 = vmatpush2.msra.mxu0 0.0
    %3564 = vmatprep.subr.mxu0 0.0
    %3565 = vmatpush2.msra.mxu0 0.0
    %3566 = vmatprep.subr.mxu0 0.0
    %3567 = vmatpush2.msra.mxu0 0.0
    %3568 = vmatprep.subr.mxu0 0.0
    %3569 = vmatpush2.msra.mxu0 0.0
    %3570 = vmatprep.subr.mxu0 0.0
    %3571 = vmatpush2.msra.mxu0 0.0
    %3572 = vmatprep.subr.mxu0 0.0
    %3573 = vmatpush2.msra.mxu0 0.0
    %3574 = vmatprep.subr.mxu0 0.0
    %3575 = vmatpush2.msra.mxu0 0.0
    %3576 = vmatprep.subr.mxu0 0.0
    %3577 = vmatpush2.msra.mxu0 0.0
    %3578 = vmatprep.subr.mxu0 0.0
    %3579 = vmatpush2.msra.mxu0 0.0
    %3580 = vmatprep.subr.mxu0 0.0
    %3581 = vmatpush2.msra.mxu0 0.0
    %3582 = vmatprep.subr.mxu0 0.0
    %3583 = vmatpush2.msra.mxu0 0.0
    %3584 = vmatprep.subr.mxu0 0.0
    %3585 = vmatpush2.msra.mxu0 0.0
    %3586 = vmatprep.subr.mxu0 0.0
    %3587 = vmatpush2.msra.mxu0 0.0
    %3588 = vmatprep.subr.mxu0 0.0
    %3589 = vmatpush2.msra.mxu0 0.0
    %3590 = vmatprep.subr.mxu0 0.0
    %3591 = vmatpush2.msra.mxu0 0.0
    %3592 = vmatprep.mubr.f32.mxu0 0.0
    %3593 = vmatmul.mubr.f32.gmra.mxu0 %v3456
    %v3594 = vpop.f32.mrf.mxu0
    %v3595 = vadd.f32 %v2277, %v3594
    %v3596 = vpop.f32.mrf.mxu0
    %3597 = vdwg.mxu0
    %v3598 = vadd.f32 %v3453, %v3524
    %v3599 = vxor.u32 %v3598, 2147483648
    %v3600 = vmul.f32 %v3599, 1.442695
    %v3601 = vpow.pop %v3600
    %v3602 = vadd.f32 %v3601, 1.0
    %v3603 = vrcp.pop %v3602
    %v3604 = vmul.f32 1.0, %v3603
    %v3605 = vadd.f32 %v3454, %v3526
    %v3606 = vxor.u32 %v3605, 2147483648
    %v3607 = vmul.f32 %v3606, 1.442695
    %v3608 = vpow.pop %v3607
    %v3609 = vadd.f32 %v3608, 1.0
    %v3610 = vrcp.pop %v3609
    %v3611 = vmul.f32 1.0, %v3610
    %v3612 = vmul.f32 %v3604, %v3595
    %v3613 = vadd.f32 %v3455, %v3612
    %v3614 = vtanh.pop %v3613
    %v3615 = vsub.f32 1.0, %v3611
    %v3616 = vmul.f32 %v3615, %v3614
    %v3617 = vmul.f32 %v3611, %v3456
    %v3618 = vadd.f32 %v3616, %v3617
    %3619 = vst [vmem:[#allocation2] sm:$0xff] %v3618
    %3620 = vst [vmem:[%s1894] sm:$0xff] %v3618
    %v3621 = vld [vmem:[#allocation3] sm:$0xff]
    %v3622 = vld [vmem:[#allocation3 + $0x8] sm:$0xff]
    %v3623 = vld [vmem:[#allocation3 + $0x10] sm:$0xff]
    %v3624 = vld [vmem:[#allocation3 + $0x18] sm:$0xff]
    %v3625 = vld [vmem:[#allocation3 + $0x20] sm:$0xff]
    %v3626 = vld [vmem:[#allocation3 + $0x28] sm:$0xff]
    %v3627 = vld [vmem:[#allocation3 + $0x30] sm:$0xff]
    %v3628 = vld [vmem:[#allocation3 + $0x38] sm:$0xff]
    %v3629 = vld [vmem:[#allocation14] sm:$0xff]
    %v3630 = vld [vmem:[#allocation14 + $0x8] sm:$0xff]
    %v3631 = vld [vmem:[#allocation14 + $0x10] sm:$0xff]
    %v3632 = vld [vmem:[#allocation14 + $0x18] sm:$0xff]
    %v3633 = vld [vmem:[#allocation14 + $0x20] sm:$0xff]
    %v3634 = vld [vmem:[#allocation14 + $0x28] sm:$0xff]
    %v3635 = vld [vmem:[#allocation14 + $0x30] sm:$0xff]
    %v3636 = vld [vmem:[#allocation14 + $0x38] sm:$0xff]
    %v3637 = vld [vmem:[#allocation14 + $0x40] sm:$0xff]
    %v3638 = vld [vmem:[#allocation14 + $0x48] sm:$0xff]
    %v3639 = vld [vmem:[#allocation14 + $0x50] sm:$0xff]
    %v3640 = vld [vmem:[#allocation14 + $0x58] sm:$0xff]
    %v3641 = vld [vmem:[#allocation14 + $0x60] sm:$0xff]
    %v3642 = vld [vmem:[#allocation14 + $0x68] sm:$0xff]
    %v3643 = vld [vmem:[#allocation14 + $0x70] sm:$0xff]
    %v3644 = vld [vmem:[#allocation14 + $0x78] sm:$0xff]
    %v3645 = vld [vmem:[%s10] sm:$0x1]
    %v3647 = vlaneseq
    %v3648 = vshrl.u32 %v3647, 7
    %v3649 = vsub.s32 0, %v3648
    %v3650 = vrot.slane %v3645, %v3649
    %3652 = vmatprep.subr.mxu0 0.0
    %3653 = vmatpush1.msra.mxu0 %v3644
    %3654 = vmatprep.subr.mxu0 0.0
    %3655 = vmatpush1.msra.mxu0 %v3643
    %3656 = vmatprep.subr.mxu0 0.0
    %3657 = vmatpush1.msra.mxu0 %v3642
    %3658 = vmatprep.subr.mxu0 0.0
    %3659 = vmatpush1.msra.mxu0 %v3641
    %3660 = vmatprep.subr.mxu0 0.0
    %3661 = vmatpush1.msra.mxu0 %v3640
    %3662 = vmatprep.subr.mxu0 0.0
    %3663 = vmatpush1.msra.mxu0 %v3639
    %3664 = vmatprep.subr.mxu0 0.0
    %3665 = vmatpush1.msra.mxu0 %v3638
    %3666 = vmatprep.subr.mxu0 0.0
    %3667 = vmatpush1.msra.mxu0 %v3637
    %3668 = vmatprep.subr.mxu0 0.0
    %3669 = vmatpush1.msra.mxu0 %v3636
    %3670 = vmatprep.subr.mxu0 0.0
    %3671 = vmatpush1.msra.mxu0 %v3635
    %3672 = vmatprep.subr.mxu0 0.0
    %3673 = vmatpush1.msra.mxu0 %v3634
    %3674 = vmatprep.subr.mxu0 0.0
    %3675 = vmatpush1.msra.mxu0 %v3633
    %3676 = vmatprep.subr.mxu0 0.0
    %3677 = vmatpush1.msra.mxu0 %v3632
    %3678 = vmatprep.subr.mxu0 0.0
    %3679 = vmatpush1.msra.mxu0 %v3631
    %3680 = vmatprep.subr.mxu0 0.0
    %3681 = vmatpush1.msra.mxu0 %v3630
    %3682 = vmatprep.subr.mxu0 0.0
    %3683 = vmatpush1.msra.mxu0 %v3629
    %3684 = vmatprep.subr.mxu0 0.0
    %3685 = vmatpush2.msra.mxu0 0.0
    %3686 = vmatprep.subr.mxu0 0.0
    %3687 = vmatpush2.msra.mxu0 0.0
    %3688 = vmatprep.subr.mxu0 0.0
    %3689 = vmatpush2.msra.mxu0 0.0
    %3690 = vmatprep.subr.mxu0 0.0
    %3691 = vmatpush2.msra.mxu0 0.0
    %3692 = vmatprep.subr.mxu0 0.0
    %3693 = vmatpush2.msra.mxu0 0.0
    %3694 = vmatprep.subr.mxu0 0.0
    %3695 = vmatpush2.msra.mxu0 0.0
    %3696 = vmatprep.subr.mxu0 0.0
    %3697 = vmatpush2.msra.mxu0 0.0
    %3698 = vmatprep.subr.mxu0 0.0
    %3699 = vmatpush2.msra.mxu0 0.0
    %3700 = vmatprep.subr.mxu0 0.0
    %3701 = vmatpush2.msra.mxu0 0.0
    %3702 = vmatprep.subr.mxu0 0.0
    %3703 = vmatpush2.msra.mxu0 0.0
    %3704 = vmatprep.subr.mxu0 0.0
    %3705 = vmatpush2.msra.mxu0 0.0
    %3706 = vmatprep.subr.mxu0 0.0
    %3707 = vmatpush2.msra.mxu0 0.0
    %3708 = vmatprep.subr.mxu0 0.0
    %3709 = vmatpush2.msra.mxu0 0.0
    %3710 = vmatprep.subr.mxu0 0.0
    %3711 = vmatpush2.msra.mxu0 0.0
    %3712 = vmatprep.subr.mxu0 0.0
    %3713 = vmatpush2.msra.mxu0 0.0
    %3714 = vmatprep.subr.mxu0 0.0
    %3715 = vmatpush2.msra.mxu0 0.0
    %3716 = vmatprep.mubr.f32.mxu0 0.0
    %3717 = vmatmul.mubr.f32.gmra.mxu0 %v3621
    %v3718 = vpop.f32.mrf.mxu0
    %v3719 = vadd.f32 %v3650, %v3718
    %v3720 = vpop.f32.mrf.mxu0
    %3721 = vmatprep.mubr.f32.mxu0 0.0
    %3722 = vmatmul.mubr.f32.gmra.mxu0 %v3622
    %v3723 = vpop.f32.mrf.mxu0
    %v3724 = vadd.f32 %v3650, %v3723
    %v3725 = vpop.f32.mrf.mxu0
    %3726 = vmatprep.mubr.f32.mxu0 0.0
    %3727 = vmatmul.mubr.f32.gmra.mxu0 %v3623
    %v3728 = vpop.f32.mrf.mxu0
    %v3729 = vadd.f32 %v3650, %v3728
    %v3730 = vpop.f32.mrf.mxu0
    %3731 = vmatprep.mubr.f32.mxu0 0.0
    %3732 = vmatmul.mubr.f32.gmra.mxu0 %v3624
    %v3733 = vpop.f32.mrf.mxu0
    %v3734 = vadd.f32 %v3650, %v3733
    %v3735 = vpop.f32.mrf.mxu0
    %3736 = vmatprep.mubr.f32.mxu0 0.0
    %3737 = vmatmul.mubr.f32.gmra.mxu0 %v3625
    %v3738 = vpop.f32.mrf.mxu0
    %v3739 = vadd.f32 %v3650, %v3738
    %v3740 = vpop.f32.mrf.mxu0
    %3741 = vmatprep.mubr.f32.mxu0 0.0
    %3742 = vmatmul.mubr.f32.gmra.mxu0 %v3626
    %v3743 = vpop.f32.mrf.mxu0
    %v3744 = vadd.f32 %v3650, %v3743
    %v3745 = vpop.f32.mrf.mxu0
    %3746 = vmatprep.mubr.f32.mxu0 0.0
    %3747 = vmatmul.mubr.f32.gmra.mxu0 %v3627
    %v3748 = vpop.f32.mrf.mxu0
    %v3749 = vadd.f32 %v3650, %v3748
    %v3750 = vpop.f32.mrf.mxu0
    %3751 = vmatprep.mubr.f32.mxu0 0.0
    %3752 = vmatmul.mubr.f32.gmra.mxu0 %v3628
    %v3753 = vpop.f32.mrf.mxu0
    %v3754 = vadd.f32 %v3650, %v3753
    %v3755 = vpop.f32.mrf.mxu0
    %3756 = vdwg.mxu0
    %v3757 = vmax.f32 %v3719, 0.0
    %v3758 = vmax.f32 %v3724, 0.0
    %v3759 = vmax.f32 %v3729, 0.0
    %v3760 = vmax.f32 %v3734, 0.0
    %v3761 = vmax.f32 %v3739, 0.0
    %v3762 = vmax.f32 %v3744, 0.0
    %v3763 = vmax.f32 %v3749, 0.0
    %v3764 = vmax.f32 %v3754, 0.0
    %v3765 = vld [vmem:[#allocation16] sm:$0xff]
    %v3766 = vld [vmem:[#allocation16 + $0x8] sm:$0xff]
    %v3767 = vld [vmem:[#allocation16 + $0x10] sm:$0xff]
    %v3768 = vld [vmem:[#allocation16 + $0x18] sm:$0xff]
    %v3769 = vld [vmem:[#allocation16 + $0x20] sm:$0xff]
    %v3770 = vld [vmem:[#allocation16 + $0x28] sm:$0xff]
    %v3771 = vld [vmem:[#allocation16 + $0x30] sm:$0xff]
    %v3772 = vld [vmem:[#allocation16 + $0x38] sm:$0xff]
    %v3773 = vld [vmem:[#allocation16 + $0x40] sm:$0xff]
    %v3774 = vld [vmem:[#allocation16 + $0x48] sm:$0xff]
    %v3775 = vld [vmem:[#allocation16 + $0x50] sm:$0xff]
    %v3776 = vld [vmem:[#allocation16 + $0x58] sm:$0xff]
    %v3777 = vld [vmem:[#allocation16 + $0x60] sm:$0xff]
    %v3778 = vld [vmem:[#allocation16 + $0x68] sm:$0xff]
    %v3779 = vld [vmem:[#allocation16 + $0x70] sm:$0xff]
    %v3780 = vld [vmem:[#allocation16 + $0x78] sm:$0xff]
    %v3781 = vld [vmem:[%s12] sm:$0x1]
    %v3783 = vlaneseq
    %v3784 = vshrl.u32 %v3783, 7
    %v3785 = vsub.s32 0, %v3784
    %v3786 = vrot.slane %v3781, %v3785
    %3788 = vmatprep.subr.mxu0 0.0
    %3789 = vmatpush1.msra.mxu0 %v3780
    %3790 = vmatprep.subr.mxu0 0.0
    %3791 = vmatpush1.msra.mxu0 %v3779
    %3792 = vmatprep.subr.mxu0 0.0
    %3793 = vmatpush1.msra.mxu0 %v3778
    %3794 = vmatprep.subr.mxu0 0.0
    %3795 = vmatpush1.msra.mxu0 %v3777
    %3796 = vmatprep.subr.mxu0 0.0
    %3797 = vmatpush1.msra.mxu0 %v3776
    %3798 = vmatprep.subr.mxu0 0.0
    %3799 = vmatpush1.msra.mxu0 %v3775
    %3800 = vmatprep.subr.mxu0 0.0
    %3801 = vmatpush1.msra.mxu0 %v3774
    %3802 = vmatprep.subr.mxu0 0.0
    %3803 = vmatpush1.msra.mxu0 %v3773
    %3804 = vmatprep.subr.mxu0 0.0
    %3805 = vmatpush1.msra.mxu0 %v3772
    %3806 = vmatprep.subr.mxu0 0.0
    %3807 = vmatpush1.msra.mxu0 %v3771
    %3808 = vmatprep.subr.mxu0 0.0
    %3809 = vmatpush1.msra.mxu0 %v3770
    %3810 = vmatprep.subr.mxu0 0.0
    %3811 = vmatpush1.msra.mxu0 %v3769
    %3812 = vmatprep.subr.mxu0 0.0
    %3813 = vmatpush1.msra.mxu0 %v3768
    %3814 = vmatprep.subr.mxu0 0.0
    %3815 = vmatpush1.msra.mxu0 %v3767
    %3816 = vmatprep.subr.mxu0 0.0
    %3817 = vmatpush1.msra.mxu0 %v3766
    %3818 = vmatprep.subr.mxu0 0.0
    %3819 = vmatpush1.msra.mxu0 %v3765
    %3820 = vmatprep.subr.mxu0 0.0
    %3821 = vmatpush2.msra.mxu0 0.0
    %3822 = vmatprep.subr.mxu0 0.0
    %3823 = vmatpush2.msra.mxu0 0.0
    %3824 = vmatprep.subr.mxu0 0.0
    %3825 = vmatpush2.msra.mxu0 0.0
    %3826 = vmatprep.subr.mxu0 0.0
    %3827 = vmatpush2.msra.mxu0 0.0
    %3828 = vmatprep.subr.mxu0 0.0
    %3829 = vmatpush2.msra.mxu0 0.0
    %3830 = vmatprep.subr.mxu0 0.0
    %3831 = vmatpush2.msra.mxu0 0.0
    %3832 = vmatprep.subr.mxu0 0.0
    %3833 = vmatpush2.msra.mxu0 0.0
    %3834 = vmatprep.subr.mxu0 0.0
    %3835 = vmatpush2.msra.mxu0 0.0
    %3836 = vmatprep.subr.mxu0 0.0
    %3837 = vmatpush2.msra.mxu0 0.0
    %3838 = vmatprep.subr.mxu0 0.0
    %3839 = vmatpush2.msra.mxu0 0.0
    %3840 = vmatprep.subr.mxu0 0.0
    %3841 = vmatpush2.msra.mxu0 0.0
    %3842 = vmatprep.subr.mxu0 0.0
    %3843 = vmatpush2.msra.mxu0 0.0
    %3844 = vmatprep.subr.mxu0 0.0
    %3845 = vmatpush2.msra.mxu0 0.0
    %3846 = vmatprep.subr.mxu0 0.0
    %3847 = vmatpush2.msra.mxu0 0.0
    %3848 = vmatprep.subr.mxu0 0.0
    %3849 = vmatpush2.msra.mxu0 0.0
    %3850 = vmatprep.subr.mxu0 0.0
    %3851 = vmatpush2.msra.mxu0 0.0
    %3852 = vmatprep.mubr.f32.mxu0 0.0
    %3853 = vmatmul.mubr.f32.gmra.mxu0 %v3757
    %v3854 = vpop.f32.mrf.mxu0
    %v3855 = vadd.f32 %v3786, %v3854
    %v3856 = vpop.f32.mrf.mxu0
    %3857 = vmatprep.mubr.f32.mxu0 0.0
    %3858 = vmatmul.mubr.f32.gmra.mxu0 %v3758
    %v3859 = vpop.f32.mrf.mxu0
    %v3860 = vadd.f32 %v3786, %v3859
    %v3861 = vpop.f32.mrf.mxu0
    %3862 = vmatprep.mubr.f32.mxu0 0.0
    %3863 = vmatmul.mubr.f32.gmra.mxu0 %v3759
    %v3864 = vpop.f32.mrf.mxu0
    %v3865 = vadd.f32 %v3786, %v3864
    %v3866 = vpop.f32.mrf.mxu0
    %3867 = vmatprep.mubr.f32.mxu0 0.0
    %3868 = vmatmul.mubr.f32.gmra.mxu0 %v3760
    %v3869 = vpop.f32.mrf.mxu0
    %v3870 = vadd.f32 %v3786, %v3869
    %v3871 = vpop.f32.mrf.mxu0
    %3872 = vmatprep.mubr.f32.mxu0 0.0
    %3873 = vmatmul.mubr.f32.gmra.mxu0 %v3761
    %v3874 = vpop.f32.mrf.mxu0
    %v3875 = vadd.f32 %v3786, %v3874
    %v3876 = vpop.f32.mrf.mxu0
    %3877 = vmatprep.mubr.f32.mxu0 0.0
    %3878 = vmatmul.mubr.f32.gmra.mxu0 %v3762
    %v3879 = vpop.f32.mrf.mxu0
    %v3880 = vadd.f32 %v3786, %v3879
    %v3881 = vpop.f32.mrf.mxu0
    %3882 = vmatprep.mubr.f32.mxu0 0.0
    %3883 = vmatmul.mubr.f32.gmra.mxu0 %v3763
    %v3884 = vpop.f32.mrf.mxu0
    %v3885 = vadd.f32 %v3786, %v3884
    %v3886 = vpop.f32.mrf.mxu0
    %3887 = vmatprep.mubr.f32.mxu0 0.0
    %3888 = vmatmul.mubr.f32.gmra.mxu0 %v3764
    %v3889 = vpop.f32.mrf.mxu0
    %v3890 = vadd.f32 %v3786, %v3889
    %v3891 = vpop.f32.mrf.mxu0
    %3892 = vdwg.mxu0
    %3893 = vst [vmem:[#allocation17] sm:$0xff] %v3855
    %3894 = vst [vmem:[#allocation17 + $0x8] sm:$0xff] %v3860
    %3895 = vst [vmem:[#allocation17 + $0x10] sm:$0xff] %v3865
    %3896 = vst [vmem:[#allocation17 + $0x18] sm:$0xff] %v3870
    %3897 = vst [vmem:[#allocation17 + $0x20] sm:$0xff] %v3875
    %3898 = vst [vmem:[#allocation17 + $0x28] sm:$0xff] %v3880
    %3899 = vst [vmem:[#allocation17 + $0x30] sm:$0xff] %v3885
    %3900 = vst [vmem:[#allocation17 + $0x38] sm:$0xff] %v3890
    // Predicated region
    $region82: #{tpu_custom_call.1} parent=1 // pred_check
      _
    $region83: #{tpu_custom_call.1} parent=1 // pred_check_branch
      %3902 = sbr.rel (0) target = $region85
    $region84: #{tpu_custom_call.1} parent=1 // pred_region
      %s3904 = ssub.s32 1024, 1024
      %3905 = vsyncadd [#allocation7], %s3904
      %s3906 = sshll.u32 [#allocation17], 4
      %s3907 = int_to_ptr.vmem [resolvable:$true] %s3906
      %3912 = dma.vmem_to_hbm [thread:$0]  %s3907, 1024, %s13, [#allocation7], 128, 128, 8
    $region85: #{tpu_custom_call.1} parent=1 // pred_fallthru
      _
    // Predicated region
    $region86: #{tpu_custom_call.1} parent=1 // pred_check
      _
    $region87: #{tpu_custom_call.1} parent=1 // pred_check_branch
      %3914 = sbr.rel (0) target = $region89
    $region88: #{tpu_custom_call.1} parent=1 // pred_region
      %3915 = dma.done [#allocation7], 1024
    $region89: #{tpu_custom_call.1} parent=1 // pred_fallthru
      _
    %3916 = vsyncpa [#allocation6], 1
    %3917 = vsyncpa [#allocation9], 1
    %3918 = vsyncpa [#allocation12], 1
    %3919 = vsyncpa [#allocation15], 1
    %3920 = vsyncpa [#allocation7], 1

</llo_original>
